<compile_context>
chip_gen: v7x
topology: tpu7x:2x2x1
jax: 0.10.0
libtpu: 0.0.40
codegen_flags: <defaults>
</compile_context>

<pallas_src>
import functools

import jax
import jax.numpy as jnp
from jax.experimental import pallas as pl
from jax.experimental.pallas import tpu as pltpu


# ----------------------------------------------------------------------------
# Pallas kernel: full 2-layer LSTM recurrence + fc head.
# Gate order follows PyTorch: [i, f, g, o].
# ----------------------------------------------------------------------------
def _lstm_forecast_kernel(x_ref, h0_ref, c0_ref,
                          wih0_ref, whh0_ref, b0_ref,
                          wih1_ref, whh1_ref, b1_ref,
                          fcw_ref, fcb_ref,
                          s_ref, bfix_ref,
                          out_ref, hN_ref, cN_ref):
    B = h0_ref.shape[1]
    H = h0_ref.shape[-1]
    G = 4 * H
    TB, I = x_ref.shape
    T = TB // B

    # ---- loop-invariant work, hoisted out of the recurrence ------------------
    whh0 = whh0_ref[...]                                   # (H, 4H)
    wih1 = wih1_ref[...]                                   # (H, 4H)
    whh1 = whh1_ref[...]                                   # (H, 4H)
    b1 = jnp.broadcast_to(b1_ref[...], (B, G))             # broadcast once, not per step
    s = jnp.broadcast_to(s_ref[...], (B, G))               # {0.5,0.5,1.0,0.5} per gate block
    bfix = jnp.broadcast_to(bfix_ref[...], (B, G))         # {0.5,0.5,0.0,0.5}

    # Layer-0 input projection for ALL timesteps, hoisted off the per-step
    # chain and kept as an in-register value (T*B x 4H = 8 vregs here).
    # I is tiny, so use VPU broadcast-FMAs instead of a K=2 MXU pass.
    x_all = x_ref[...]                                     # (T*B, I)
    gx = jnp.broadcast_to(b0_ref[...], (TB, G))            # bias folded in
    if I <= 8:
        wih0 = wih0_ref[...]                               # (I, 4H)
        for i in range(I):
            gx = gx + x_all[:, i:i + 1] * wih0[i:i + 1, :]
    else:
        gx = gx + jnp.dot(x_all, wih0_ref[...], preferred_element_type=jnp.float32)

    def gate_act(gates):
        # sigmoid(x) = 0.5*(tanh(x/2) + 1): a SINGLE full-width EUP push for
        # the whole (B, 4H) gate vector; per-lane scale/offset keeps the g
        # gate a plain tanh.  Fixup mul/add land in spare VALU slots.
        t = jnp.tanh(gates * s)
        return t * s + bfix

    def cell_update(act, c):
        i = act[:, 0 * H:1 * H]
        f = act[:, 1 * H:2 * H]
        g = act[:, 2 * H:3 * H]
        o = act[:, 3 * H:4 * H]
        c_new = f * c + i * g
        h_new = o * jnp.tanh(c_new)
        return h_new, c_new

    h0, c0 = h0_ref[0], c0_ref[0]
    h1, c1 = h0_ref[1], c0_ref[1]

    # T is static & small: a fully unrolled trace (equivalent to
    # fori_loop(unroll=True)) lets the scheduler overlap layer-1(t) with
    # layer-0(t+1) and keeps the gx slices static / sublane-tile aligned.
    # TODO(synk): at T >~ 32 switch to lax.fori_loop with partial unroll.
    for t in range(T):
        # Layer-1 recurrent part depends only on LAST step's h1 -> overlaps
        # with layer-0's matmul + activations (off the critical chain).
        rec1 = jnp.dot(h1, whh1, preferred_element_type=jnp.float32) + b1
        # Layer 0: only the recurrent matmul remains on the per-step chain.
        gates0 = (jnp.dot(h0, whh0, preferred_element_type=jnp.float32)
                  + gx[t * B:(t + 1) * B, :])
        h0, c0 = cell_update(gate_act(gates0), c0)
        # TODO(synk): nn.LSTM inter-layer dropout is train-mode only; this
        # forward matches eval/inference semantics (identity).
        gates1 = rec1 + jnp.dot(h0, wih1, preferred_element_type=jnp.float32)
        h1, c1 = cell_update(gate_act(gates1), c1)

    # fc head on the top layer's last hidden state (output lane-padded to 128).
    out_ref[...] = (jnp.dot(h1, fcw_ref[...], preferred_element_type=jnp.float32)
                    + fcb_ref[...])
    hN_ref[0] = h0
    hN_ref[1] = h1
    cN_ref[0] = c0
    cN_ref[1] = c1


# ----------------------------------------------------------------------------
# One-time weight re-layout (cache the result alongside params).
# ----------------------------------------------------------------------------
def prepare_params(params, out_pad=128):
    H = params["w_hh_l0"].shape[1]
    n_out = params["fc_w"].shape[0]
    half = jnp.full((1, H), 0.5, jnp.float32)
    one = jnp.ones((1, H), jnp.float32)
    zero = jnp.zeros((1, H), jnp.float32)
    return {
        "wih0": params["w_ih_l0"].T,                               # (I, 4H)
        "whh0": params["w_hh_l0"].T,                               # (H, 4H)
        "b0":   (params["b_ih_l0"] + params["b_hh_l0"])[None, :],  # (1, 4H)
        "wih1": params["w_ih_l1"].T,                               # (H, 4H)
        "whh1": params["w_hh_l1"].T,                               # (H, 4H)
        "b1":   (params["b_ih_l1"] + params["b_hh_l1"])[None, :],  # (1, 4H)
        # fc head padded to a full 128-lane slab so the final store is unmasked.
        "fcw": jnp.zeros((H, out_pad), jnp.float32).at[:, :n_out].set(params["fc_w"].T),
        "fcb": jnp.zeros((1, out_pad), jnp.float32).at[:, :n_out].set(params["fc_b"]),
        # Per-lane scale/offset for the single-tanh gate activation.
        # Gate order [i, f, g, o]: sigmoid for i/f/o, tanh for g.
        "act_scale": jnp.concatenate([half, half, one, half], axis=1),   # (1, 4H)
        "act_bias":  jnp.concatenate([half, half, zero, half], axis=1),  # (1, 4H)
    }


# ----------------------------------------------------------------------------
# Jitted wrapper: batch-first input like the PyTorch module.
# ----------------------------------------------------------------------------
@functools.partial(jax.jit, static_argnames=("n_out",))
def lstm_forecast_forward(prepped, x, hidden, n_out=3):
    h0, c0 = hidden                        # each (L, B, H)
    B, T, I = x.shape
    L, _, H = h0.shape
    assert L == 2, "kernel is specialized for num_layers=2"

    B_pad = max(8, ((B + 7) // 8) * 8)
    OUT_PAD = prepped["fcw"].shape[1]

    x_tm = jnp.transpose(x, (1, 0, 2))     # (T, B, I) time-major
    if B_pad != B:
        x_tm = jnp.pad(x_tm, ((0, 0), (0, B_pad - B), (0, 0)))
        h0 = jnp.pad(h0, ((0, 0), (0, B_pad - B), (0, 0)))
        c0 = jnp.pad(c0, ((0, 0), (0, B_pad - B), (0, 0)))
    x_flat = x_tm.reshape(T * B_pad, I)

    vmem = pl.BlockSpec(memory_space=pltpu.MemorySpace.VMEM)
    out_shapes = (
        jax.ShapeDtypeStruct((B_pad, OUT_PAD), jnp.float32),
        jax.ShapeDtypeStruct((L, B_pad, H), jnp.float32),
        jax.ShapeDtypeStruct((L, B_pad, H), jnp.float32),
    )
    # NOTE: everything fits VMEM by a wide margin at these shapes on all of
    # v5e/v6e/v7x.  If T/B/H scale up: keep x in HBM (memory_space=pl.ANY),
    # stream the input projection per T-chunk (pltpu.emit_pipeline), set
    # vmem_limit_bytes explicitly (v5e scoped default 16 MiB, v7x physical
    # 64 MiB), and add a parallel batch grid axis for v7x's 2 TensorCores.
    out, hN, cN = pl.pallas_call(
        _lstm_forecast_kernel,
        out_shape=out_shapes,
        in_specs=[vmem] * 13,
        out_specs=(vmem, vmem, vmem),
        compiler_params=pltpu.CompilerParams(
            # Let XLA fuse the x transpose/pad/reshape (and h/c pads) into the
            # pallas_call operands instead of separate tiny HLO ops.
            allow_input_fusion=[True, True, True] + [False] * 10),
    )(x_flat, h0, c0,
      prepped["wih0"], prepped["whh0"], prepped["b0"],
      prepped["wih1"], prepped["whh1"], prepped["b1"],
      prepped["fcw"], prepped["fcb"],
      prepped["act_scale"], prepped["act_bias"])

    return out[:B, :n_out], (hN[:, :B, :], cN[:, :B, :])


# ----------------------------------------------------------------------------
# Deterministic parameter init (PyTorch-style U(-1/sqrt(H), 1/sqrt(H))).
# ----------------------------------------------------------------------------
def init_params(key, input_size, hidden_size):
    H = hidden_size
    bound = 1.0 / float(H) ** 0.5
    keys = jax.random.split(key, 10)

    def u(kk, shape):
        return jax.random.uniform(kk, shape, jnp.float32, -bound, bound)

    return {
        "w_ih_l0": u(keys[0], (4 * H, input_size)),
        "w_hh_l0": u(keys[1], (4 * H, H)),
        "b_ih_l0": u(keys[2], (4 * H,)),
        "b_hh_l0": u(keys[3], (4 * H,)),
        "w_ih_l1": u(keys[4], (4 * H, H)),
        "w_hh_l1": u(keys[5], (4 * H, H)),
        "b_ih_l1": u(keys[6], (4 * H,)),
        "b_hh_l1": u(keys[7], (4 * H,)),
        "fc_w":    u(keys[8], (3, H)),
        "fc_b":    u(keys[9], (3,)),
    }


# ----------------------------------------------------------------------------
# Pure-JAX reference (mirrors torch.nn.LSTM eval-mode semantics) for checking.
# ----------------------------------------------------------------------------
def reference_forward(params, x, hidden):
    h, c = hidden

    def cell(x_t, hh, cc, wih, whh, bih, bhh):
        gates = x_t @ wih.T + bih + hh @ whh.T + bhh
        i, f, g, o = jnp.split(gates, 4, axis=-1)
        i = jax.nn.sigmoid(i)
        f = jax.nn.sigmoid(f)
        g = jnp.tanh(g)
        o = jax.nn.sigmoid(o)
        cc = f * cc + i * g
        hh = o * jnp.tanh(cc)
        return hh, cc

    B, T, I = x.shape
    h0, c0 = h[0], c[0]
    h1, c1 = h[1], c[1]
    for t in range(T):
        x_t = x[:, t, :]
        h0, c0 = cell(x_t, h0, c0, params["w_ih_l0"], params["w_hh_l0"],
                      params["b_ih_l0"], params["b_hh_l0"])
        h1, c1 = cell(h0, h1, c1, params["w_ih_l1"], params["w_hh_l1"],
                      params["b_ih_l1"], params["b_hh_l1"])
    out = h1 @ params["fc_w"].T + params["fc_b"]
    return out, (jnp.stack([h0, h1]), jnp.stack([c0, c1]))


if __name__ == "__main__":
    # Small shapes consistent with the module: (batch, seq, input_size).
    B, T, I, H, L = 4, 8, 2, 32, 2

    key = jax.random.PRNGKey(0)
    pkey, xkey = jax.random.split(key)
    params = init_params(pkey, input_size=I, hidden_size=H)
    prepped = prepare_params(params)       # one-time re-layout, cached with params

    x = jax.random.normal(xkey, (B, T, I), jnp.float32)
    # init_hidden(batch_size): zeros of shape (num_layers, batch, hidden).
    h0 = jnp.zeros((L, B, H), jnp.float32)
    c0 = jnp.zeros((L, B, H), jnp.float32)

    out, (hN, cN) = lstm_forecast_forward(prepped, x, (h0, c0), n_out=3)
    jax.block_until_ready((out, hN, cN))

    ref_out, (ref_h, ref_c) = reference_forward(params, x, (h0, c0))
    assert jnp.allclose(out, ref_out, atol=1e-4, rtol=1e-4), "fc output mismatch"
    assert jnp.allclose(hN, ref_h, atol=1e-4, rtol=1e-4), "hidden state mismatch"
    assert jnp.allclose(cN, ref_c, atol=1e-4, rtol=1e-4), "cell state mismatch"

    print("KERNEL_OK")
</pallas_src>

<mosaic_0001>
module attributes {stable_mosaic.version = 11 : i64} {
  func.func @_lstm_forecast_kernel(%arg0: memref<64x2xf32, #tpu.memory_space<vmem>>, %arg1: memref<2x8x32xf32, #tpu.memory_space<vmem>>, %arg2: memref<2x8x32xf32, #tpu.memory_space<vmem>>, %arg3: memref<2x128xf32, #tpu.memory_space<vmem>>, %arg4: memref<32x128xf32, #tpu.memory_space<vmem>>, %arg5: memref<1x128xf32, #tpu.memory_space<vmem>>, %arg6: memref<32x128xf32, #tpu.memory_space<vmem>>, %arg7: memref<32x128xf32, #tpu.memory_space<vmem>>, %arg8: memref<1x128xf32, #tpu.memory_space<vmem>>, %arg9: memref<32x128xf32, #tpu.memory_space<vmem>>, %arg10: memref<1x128xf32, #tpu.memory_space<vmem>>, %arg11: memref<1x128xf32, #tpu.memory_space<vmem>>, %arg12: memref<1x128xf32, #tpu.memory_space<vmem>>, %arg13: memref<8x128xf32, #tpu.memory_space<vmem>>, %arg14: memref<2x8x32xf32, #tpu.memory_space<vmem>>, %arg15: memref<2x8x32xf32, #tpu.memory_space<vmem>>) attributes {dimension_semantics = [], scalar_prefetch = 0 : i64, scratch_operands = 0 : i64, tpu.core_type = #tpu.core_type<tc>} {
    %c0 = arith.constant 0 : index
    %c0_0 = arith.constant 0 : index
    %0 = vector.load %arg4[%c0, %c0_0] : memref<32x128xf32, #tpu.memory_space<vmem>>, vector<32x128xf32>
    %c0_1 = arith.constant 0 : index
    %c0_2 = arith.constant 0 : index
    %1 = vector.load %arg6[%c0_1, %c0_2] : memref<32x128xf32, #tpu.memory_space<vmem>>, vector<32x128xf32>
    %c0_3 = arith.constant 0 : index
    %c0_4 = arith.constant 0 : index
    %2 = vector.load %arg7[%c0_3, %c0_4] : memref<32x128xf32, #tpu.memory_space<vmem>>, vector<32x128xf32>
    %c0_5 = arith.constant 0 : index
    %c0_6 = arith.constant 0 : index
    %3 = vector.load %arg8[%c0_5, %c0_6] : memref<1x128xf32, #tpu.memory_space<vmem>>, vector<1x128xf32>
    %4 = vector.shape_cast %3 : vector<1x128xf32> to vector<1x128xf32>
    %5 = vector.broadcast %4 : vector<1x128xf32> to vector<8x128xf32>
    %c0_7 = arith.constant 0 : index
    %c0_8 = arith.constant 0 : index
    %6 = vector.load %arg11[%c0_7, %c0_8] : memref<1x128xf32, #tpu.memory_space<vmem>>, vector<1x128xf32>
    %7 = vector.shape_cast %6 : vector<1x128xf32> to vector<1x128xf32>
    %8 = vector.broadcast %7 : vector<1x128xf32> to vector<8x128xf32>
    %c0_9 = arith.constant 0 : index
    %c0_10 = arith.constant 0 : index
    %9 = vector.load %arg12[%c0_9, %c0_10] : memref<1x128xf32, #tpu.memory_space<vmem>>, vector<1x128xf32>
    %10 = vector.shape_cast %9 : vector<1x128xf32> to vector<1x128xf32>
    %11 = vector.broadcast %10 : vector<1x128xf32> to vector<8x128xf32>
    %c0_11 = arith.constant 0 : index
    %c0_12 = arith.constant 0 : index
    %12 = vector.load %arg0[%c0_11, %c0_12] : memref<64x2xf32, #tpu.memory_space<vmem>>, vector<64x2xf32>
    %c0_13 = arith.constant 0 : index
    %c0_14 = arith.constant 0 : index
    %13 = vector.load %arg5[%c0_13, %c0_14] : memref<1x128xf32, #tpu.memory_space<vmem>>, vector<1x128xf32>
    %14 = vector.shape_cast %13 : vector<1x128xf32> to vector<1x128xf32>
    %15 = vector.broadcast %14 : vector<1x128xf32> to vector<64x128xf32>
    %c0_15 = arith.constant 0 : index
    %c0_16 = arith.constant 0 : index
    %16 = vector.load %arg3[%c0_15, %c0_16] : memref<2x128xf32, #tpu.memory_space<vmem>>, vector<2x128xf32>
    %17 = vector.extract_strided_slice %12 {offsets = [0, 0], sizes = [64, 1], strides = [1, 1]} : vector<64x2xf32> to vector<64x1xf32>
    %18 = vector.extract_strided_slice %16 {offsets = [0, 0], sizes = [1, 128], strides = [1, 1]} : vector<2x128xf32> to vector<1x128xf32>
    %19 = vector.broadcast %17 : vector<64x1xf32> to vector<64x128xf32>
    %20 = vector.broadcast %18 : vector<1x128xf32> to vector<64x128xf32>
    %21 = arith.mulf %19, %20 : vector<64x128xf32>
    %22 = arith.addf %15, %21 : vector<64x128xf32>
    %23 = vector.extract_strided_slice %12 {offsets = [0, 1], sizes = [64, 1], strides = [1, 1]} : vector<64x2xf32> to vector<64x1xf32>
    %24 = vector.extract_strided_slice %16 {offsets = [1, 0], sizes = [1, 128], strides = [1, 1]} : vector<2x128xf32> to vector<1x128xf32>
    %25 = vector.broadcast %23 : vector<64x1xf32> to vector<64x128xf32>
    %26 = vector.broadcast %24 : vector<1x128xf32> to vector<64x128xf32>
    %27 = arith.mulf %25, %26 : vector<64x128xf32>
    %28 = arith.addf %22, %27 : vector<64x128xf32>
    %c0_17 = arith.constant 0 : index
    %c0_18 = arith.constant 0 : index
    %c0_19 = arith.constant 0 : index
    %29 = vector.load %arg1[%c0_17, %c0_18, %c0_19] : memref<2x8x32xf32, #tpu.memory_space<vmem>>, vector<1x8x32xf32>
    %30 = vector.shape_cast %29 : vector<1x8x32xf32> to vector<8x32xf32>
    %c0_20 = arith.constant 0 : index
    %c0_21 = arith.constant 0 : index
    %c0_22 = arith.constant 0 : index
    %31 = vector.load %arg2[%c0_20, %c0_21, %c0_22] : memref<2x8x32xf32, #tpu.memory_space<vmem>>, vector<1x8x32xf32>
    %32 = vector.shape_cast %31 : vector<1x8x32xf32> to vector<8x32xf32>
    %c1 = arith.constant 1 : index
    %c0_23 = arith.constant 0 : index
    %c0_24 = arith.constant 0 : index
    %33 = vector.load %arg1[%c1, %c0_23, %c0_24] : memref<2x8x32xf32, #tpu.memory_space<vmem>>, vector<1x8x32xf32>
    %34 = vector.shape_cast %33 : vector<1x8x32xf32> to vector<8x32xf32>
    %c1_25 = arith.constant 1 : index
    %c0_26 = arith.constant 0 : index
    %c0_27 = arith.constant 0 : index
    %35 = vector.load %arg2[%c1_25, %c0_26, %c0_27] : memref<2x8x32xf32, #tpu.memory_space<vmem>>, vector<1x8x32xf32>
    %36 = vector.shape_cast %35 : vector<1x8x32xf32> to vector<8x32xf32>
    %cst = arith.constant dense<0.000000e+00> : vector<8x128xf32>
    %37 = tpu.matmul %34, %2, %cst {dimension_numbers = #tpu.dot_dimension_numbers<[1], [0], [0], [1], [0, 0, 1, 1], [], []>} : vector<8x32xf32>, vector<32x128xf32>, vector<8x128xf32> -> vector<8x128xf32>
    %38 = arith.addf %37, %5 : vector<8x128xf32>
    %cst_28 = arith.constant dense<0.000000e+00> : vector<8x128xf32>
    %39 = tpu.matmul %30, %0, %cst_28 {dimension_numbers = #tpu.dot_dimension_numbers<[1], [0], [0], [1], [0, 0, 1, 1], [], []>} : vector<8x32xf32>, vector<32x128xf32>, vector<8x128xf32> -> vector<8x128xf32>
    %40 = vector.extract_strided_slice %28 {offsets = [0, 0], sizes = [8, 128], strides = [1, 1]} : vector<64x128xf32> to vector<8x128xf32>
    %41 = arith.addf %39, %40 : vector<8x128xf32>
    %42 = arith.mulf %41, %8 : vector<8x128xf32>
    %43 = math.tanh %42 : vector<8x128xf32>
    %44 = arith.mulf %43, %8 : vector<8x128xf32>
    %45 = arith.addf %44, %11 : vector<8x128xf32>
    %46 = vector.extract_strided_slice %45 {offsets = [0, 0], sizes = [8, 32], strides = [1, 1]} : vector<8x128xf32> to vector<8x32xf32>
    %47 = vector.extract_strided_slice %45 {offsets = [0, 32], sizes = [8, 32], strides = [1, 1]} : vector<8x128xf32> to vector<8x32xf32>
    %48 = vector.extract_strided_slice %45 {offsets = [0, 64], sizes = [8, 32], strides = [1, 1]} : vector<8x128xf32> to vector<8x32xf32>
    %49 = vector.extract_strided_slice %45 {offsets = [0, 96], sizes = [8, 32], strides = [1, 1]} : vector<8x128xf32> to vector<8x32xf32>
    %50 = arith.mulf %47, %32 : vector<8x32xf32>
    %51 = arith.mulf %46, %48 : vector<8x32xf32>
    %52 = arith.addf %50, %51 : vector<8x32xf32>
    %53 = math.tanh %52 : vector<8x32xf32>
    %54 = arith.mulf %49, %53 : vector<8x32xf32>
    %cst_29 = arith.constant dense<0.000000e+00> : vector<8x128xf32>
    %55 = tpu.matmul %54, %1, %cst_29 {dimension_numbers = #tpu.dot_dimension_numbers<[1], [0], [0], [1], [0, 0, 1, 1], [], []>} : vector<8x32xf32>, vector<32x128xf32>, vector<8x128xf32> -> vector<8x128xf32>
    %56 = arith.addf %38, %55 : vector<8x128xf32>
    %57 = arith.mulf %56, %8 : vector<8x128xf32>
    %58 = math.tanh %57 : vector<8x128xf32>
    %59 = arith.mulf %58, %8 : vector<8x128xf32>
    %60 = arith.addf %59, %11 : vector<8x128xf32>
    %61 = vector.extract_strided_slice %60 {offsets = [0, 0], sizes = [8, 32], strides = [1, 1]} : vector<8x128xf32> to vector<8x32xf32>
    %62 = vector.extract_strided_slice %60 {offsets = [0, 32], sizes = [8, 32], strides = [1, 1]} : vector<8x128xf32> to vector<8x32xf32>
    %63 = vector.extract_strided_slice %60 {offsets = [0, 64], sizes = [8, 32], strides = [1, 1]} : vector<8x128xf32> to vector<8x32xf32>
    %64 = vector.extract_strided_slice %60 {offsets = [0, 96], sizes = [8, 32], strides = [1, 1]} : vector<8x128xf32> to vector<8x32xf32>
    %65 = arith.mulf %62, %36 : vector<8x32xf32>
    %66 = arith.mulf %61, %63 : vector<8x32xf32>
    %67 = arith.addf %65, %66 : vector<8x32xf32>
    %68 = math.tanh %67 : vector<8x32xf32>
    %69 = arith.mulf %64, %68 : vector<8x32xf32>
    %cst_30 = arith.constant dense<0.000000e+00> : vector<8x128xf32>
    %70 = tpu.matmul %69, %2, %cst_30 {dimension_numbers = #tpu.dot_dimension_numbers<[1], [0], [0], [1], [0, 0, 1, 1], [], []>} : vector<8x32xf32>, vector<32x128xf32>, vector<8x128xf32> -> vector<8x128xf32>
    %71 = arith.addf %70, %5 : vector<8x128xf32>
    %cst_31 = arith.constant dense<0.000000e+00> : vector<8x128xf32>
    %72 = tpu.matmul %54, %0, %cst_31 {dimension_numbers = #tpu.dot_dimension_numbers<[1], [0], [0], [1], [0, 0, 1, 1], [], []>} : vector<8x32xf32>, vector<32x128xf32>, vector<8x128xf32> -> vector<8x128xf32>
    %73 = vector.extract_strided_slice %28 {offsets = [8, 0], sizes = [8, 128], strides = [1, 1]} : vector<64x128xf32> to vector<8x128xf32>
    %74 = arith.addf %72, %73 : vector<8x128xf32>
    %75 = arith.mulf %74, %8 : vector<8x128xf32>
    %76 = math.tanh %75 : vector<8x128xf32>
    %77 = arith.mulf %76, %8 : vector<8x128xf32>
    %78 = arith.addf %77, %11 : vector<8x128xf32>
    %79 = vector.extract_strided_slice %78 {offsets = [0, 0], sizes = [8, 32], strides = [1, 1]} : vector<8x128xf32> to vector<8x32xf32>
    %80 = vector.extract_strided_slice %78 {offsets = [0, 32], sizes = [8, 32], strides = [1, 1]} : vector<8x128xf32> to vector<8x32xf32>
    %81 = vector.extract_strided_slice %78 {offsets = [0, 64], sizes = [8, 32], strides = [1, 1]} : vector<8x128xf32> to vector<8x32xf32>
    %82 = vector.extract_strided_slice %78 {offsets = [0, 96], sizes = [8, 32], strides = [1, 1]} : vector<8x128xf32> to vector<8x32xf32>
    %83 = arith.mulf %80, %52 : vector<8x32xf32>
    %84 = arith.mulf %79, %81 : vector<8x32xf32>
    %85 = arith.addf %83, %84 : vector<8x32xf32>
    %86 = math.tanh %85 : vector<8x32xf32>
    %87 = arith.mulf %82, %86 : vector<8x32xf32>
    %cst_32 = arith.constant dense<0.000000e+00> : vector<8x128xf32>
    %88 = tpu.matmul %87, %1, %cst_32 {dimension_numbers = #tpu.dot_dimension_numbers<[1], [0], [0], [1], [0, 0, 1, 1], [], []>} : vector<8x32xf32>, vector<32x128xf32>, vector<8x128xf32> -> vector<8x128xf32>
    %89 = arith.addf %71, %88 : vector<8x128xf32>
    %90 = arith.mulf %89, %8 : vector<8x128xf32>
    %91 = math.tanh %90 : vector<8x128xf32>
    %92 = arith.mulf %91, %8 : vector<8x128xf32>
    %93 = arith.addf %92, %11 : vector<8x128xf32>
    %94 = vector.extract_strided_slice %93 {offsets = [0, 0], sizes = [8, 32], strides = [1, 1]} : vector<8x128xf32> to vector<8x32xf32>
    %95 = vector.extract_strided_slice %93 {offsets = [0, 32], sizes = [8, 32], strides = [1, 1]} : vector<8x128xf32> to vector<8x32xf32>
    %96 = vector.extract_strided_slice %93 {offsets = [0, 64], sizes = [8, 32], strides = [1, 1]} : vector<8x128xf32> to vector<8x32xf32>
    %97 = vector.extract_strided_slice %93 {offsets = [0, 96], sizes = [8, 32], strides = [1, 1]} : vector<8x128xf32> to vector<8x32xf32>
    %98 = arith.mulf %95, %67 : vector<8x32xf32>
    %99 = arith.mulf %94, %96 : vector<8x32xf32>
    %100 = arith.addf %98, %99 : vector<8x32xf32>
    %101 = math.tanh %100 : vector<8x32xf32>
    %102 = arith.mulf %97, %101 : vector<8x32xf32>
    %cst_33 = arith.constant dense<0.000000e+00> : vector<8x128xf32>
    %103 = tpu.matmul %102, %2, %cst_33 {dimension_numbers = #tpu.dot_dimension_numbers<[1], [0], [0], [1], [0, 0, 1, 1], [], []>} : vector<8x32xf32>, vector<32x128xf32>, vector<8x128xf32> -> vector<8x128xf32>
    %104 = arith.addf %103, %5 : vector<8x128xf32>
    %cst_34 = arith.constant dense<0.000000e+00> : vector<8x128xf32>
    %105 = tpu.matmul %87, %0, %cst_34 {dimension_numbers = #tpu.dot_dimension_numbers<[1], [0], [0], [1], [0, 0, 1, 1], [], []>} : vector<8x32xf32>, vector<32x128xf32>, vector<8x128xf32> -> vector<8x128xf32>
    %106 = vector.extract_strided_slice %28 {offsets = [16, 0], sizes = [8, 128], strides = [1, 1]} : vector<64x128xf32> to vector<8x128xf32>
    %107 = arith.addf %105, %106 : vector<8x128xf32>
    %108 = arith.mulf %107, %8 : vector<8x128xf32>
    %109 = math.tanh %108 : vector<8x128xf32>
    %110 = arith.mulf %109, %8 : vector<8x128xf32>
    %111 = arith.addf %110, %11 : vector<8x128xf32>
    %112 = vector.extract_strided_slice %111 {offsets = [0, 0], sizes = [8, 32], strides = [1, 1]} : vector<8x128xf32> to vector<8x32xf32>
    %113 = vector.extract_strided_slice %111 {offsets = [0, 32], sizes = [8, 32], strides = [1, 1]} : vector<8x128xf32> to vector<8x32xf32>
    %114 = vector.extract_strided_slice %111 {offsets = [0, 64], sizes = [8, 32], strides = [1, 1]} : vector<8x128xf32> to vector<8x32xf32>
    %115 = vector.extract_strided_slice %111 {offsets = [0, 96], sizes = [8, 32], strides = [1, 1]} : vector<8x128xf32> to vector<8x32xf32>
    %116 = arith.mulf %113, %85 : vector<8x32xf32>
    %117 = arith.mulf %112, %114 : vector<8x32xf32>
    %118 = arith.addf %116, %117 : vector<8x32xf32>
    %119 = math.tanh %118 : vector<8x32xf32>
    %120 = arith.mulf %115, %119 : vector<8x32xf32>
    %cst_35 = arith.constant dense<0.000000e+00> : vector<8x128xf32>
    %121 = tpu.matmul %120, %1, %cst_35 {dimension_numbers = #tpu.dot_dimension_numbers<[1], [0], [0], [1], [0, 0, 1, 1], [], []>} : vector<8x32xf32>, vector<32x128xf32>, vector<8x128xf32> -> vector<8x128xf32>
    %122 = arith.addf %104, %121 : vector<8x128xf32>
    %123 = arith.mulf %122, %8 : vector<8x128xf32>
    %124 = math.tanh %123 : vector<8x128xf32>
    %125 = arith.mulf %124, %8 : vector<8x128xf32>
    %126 = arith.addf %125, %11 : vector<8x128xf32>
    %127 = vector.extract_strided_slice %126 {offsets = [0, 0], sizes = [8, 32], strides = [1, 1]} : vector<8x128xf32> to vector<8x32xf32>
    %128 = vector.extract_strided_slice %126 {offsets = [0, 32], sizes = [8, 32], strides = [1, 1]} : vector<8x128xf32> to vector<8x32xf32>
    %129 = vector.extract_strided_slice %126 {offsets = [0, 64], sizes = [8, 32], strides = [1, 1]} : vector<8x128xf32> to vector<8x32xf32>
    %130 = vector.extract_strided_slice %126 {offsets = [0, 96], sizes = [8, 32], strides = [1, 1]} : vector<8x128xf32> to vector<8x32xf32>
    %131 = arith.mulf %128, %100 : vector<8x32xf32>
    %132 = arith.mulf %127, %129 : vector<8x32xf32>
    %133 = arith.addf %131, %132 : vector<8x32xf32>
    %134 = math.tanh %133 : vector<8x32xf32>
    %135 = arith.mulf %130, %134 : vector<8x32xf32>
    %cst_36 = arith.constant dense<0.000000e+00> : vector<8x128xf32>
    %136 = tpu.matmul %135, %2, %cst_36 {dimension_numbers = #tpu.dot_dimension_numbers<[1], [0], [0], [1], [0, 0, 1, 1], [], []>} : vector<8x32xf32>, vector<32x128xf32>, vector<8x128xf32> -> vector<8x128xf32>
    %137 = arith.addf %136, %5 : vector<8x128xf32>
    %cst_37 = arith.constant dense<0.000000e+00> : vector<8x128xf32>
    %138 = tpu.matmul %120, %0, %cst_37 {dimension_numbers = #tpu.dot_dimension_numbers<[1], [0], [0], [1], [0, 0, 1, 1], [], []>} : vector<8x32xf32>, vector<32x128xf32>, vector<8x128xf32> -> vector<8x128xf32>
    %139 = vector.extract_strided_slice %28 {offsets = [24, 0], sizes = [8, 128], strides = [1, 1]} : vector<64x128xf32> to vector<8x128xf32>
    %140 = arith.addf %138, %139 : vector<8x128xf32>
    %141 = arith.mulf %140, %8 : vector<8x128xf32>
    %142 = math.tanh %141 : vector<8x128xf32>
    %143 = arith.mulf %142, %8 : vector<8x128xf32>
    %144 = arith.addf %143, %11 : vector<8x128xf32>
    %145 = vector.extract_strided_slice %144 {offsets = [0, 0], sizes = [8, 32], strides = [1, 1]} : vector<8x128xf32> to vector<8x32xf32>
    %146 = vector.extract_strided_slice %144 {offsets = [0, 32], sizes = [8, 32], strides = [1, 1]} : vector<8x128xf32> to vector<8x32xf32>
    %147 = vector.extract_strided_slice %144 {offsets = [0, 64], sizes = [8, 32], strides = [1, 1]} : vector<8x128xf32> to vector<8x32xf32>
    %148 = vector.extract_strided_slice %144 {offsets = [0, 96], sizes = [8, 32], strides = [1, 1]} : vector<8x128xf32> to vector<8x32xf32>
    %149 = arith.mulf %146, %118 : vector<8x32xf32>
    %150 = arith.mulf %145, %147 : vector<8x32xf32>
    %151 = arith.addf %149, %150 : vector<8x32xf32>
    %152 = math.tanh %151 : vector<8x32xf32>
    %153 = arith.mulf %148, %152 : vector<8x32xf32>
    %cst_38 = arith.constant dense<0.000000e+00> : vector<8x128xf32>
    %154 = tpu.matmul %153, %1, %cst_38 {dimension_numbers = #tpu.dot_dimension_numbers<[1], [0], [0], [1], [0, 0, 1, 1], [], []>} : vector<8x32xf32>, vector<32x128xf32>, vector<8x128xf32> -> vector<8x128xf32>
    %155 = arith.addf %137, %154 : vector<8x128xf32>
    %156 = arith.mulf %155, %8 : vector<8x128xf32>
    %157 = math.tanh %156 : vector<8x128xf32>
    %158 = arith.mulf %157, %8 : vector<8x128xf32>
    %159 = arith.addf %158, %11 : vector<8x128xf32>
    %160 = vector.extract_strided_slice %159 {offsets = [0, 0], sizes = [8, 32], strides = [1, 1]} : vector<8x128xf32> to vector<8x32xf32>
    %161 = vector.extract_strided_slice %159 {offsets = [0, 32], sizes = [8, 32], strides = [1, 1]} : vector<8x128xf32> to vector<8x32xf32>
    %162 = vector.extract_strided_slice %159 {offsets = [0, 64], sizes = [8, 32], strides = [1, 1]} : vector<8x128xf32> to vector<8x32xf32>
    %163 = vector.extract_strided_slice %159 {offsets = [0, 96], sizes = [8, 32], strides = [1, 1]} : vector<8x128xf32> to vector<8x32xf32>
    %164 = arith.mulf %161, %133 : vector<8x32xf32>
    %165 = arith.mulf %160, %162 : vector<8x32xf32>
    %166 = arith.addf %164, %165 : vector<8x32xf32>
    %167 = math.tanh %166 : vector<8x32xf32>
    %168 = arith.mulf %163, %167 : vector<8x32xf32>
    %cst_39 = arith.constant dense<0.000000e+00> : vector<8x128xf32>
    %169 = tpu.matmul %168, %2, %cst_39 {dimension_numbers = #tpu.dot_dimension_numbers<[1], [0], [0], [1], [0, 0, 1, 1], [], []>} : vector<8x32xf32>, vector<32x128xf32>, vector<8x128xf32> -> vector<8x128xf32>
    %170 = arith.addf %169, %5 : vector<8x128xf32>
    %cst_40 = arith.constant dense<0.000000e+00> : vector<8x128xf32>
    %171 = tpu.matmul %153, %0, %cst_40 {dimension_numbers = #tpu.dot_dimension_numbers<[1], [0], [0], [1], [0, 0, 1, 1], [], []>} : vector<8x32xf32>, vector<32x128xf32>, vector<8x128xf32> -> vector<8x128xf32>
    %172 = vector.extract_strided_slice %28 {offsets = [32, 0], sizes = [8, 128], strides = [1, 1]} : vector<64x128xf32> to vector<8x128xf32>
    %173 = arith.addf %171, %172 : vector<8x128xf32>
    %174 = arith.mulf %173, %8 : vector<8x128xf32>
    %175 = math.tanh %174 : vector<8x128xf32>
    %176 = arith.mulf %175, %8 : vector<8x128xf32>
    %177 = arith.addf %176, %11 : vector<8x128xf32>
    %178 = vector.extract_strided_slice %177 {offsets = [0, 0], sizes = [8, 32], strides = [1, 1]} : vector<8x128xf32> to vector<8x32xf32>
    %179 = vector.extract_strided_slice %177 {offsets = [0, 32], sizes = [8, 32], strides = [1, 1]} : vector<8x128xf32> to vector<8x32xf32>
    %180 = vector.extract_strided_slice %177 {offsets = [0, 64], sizes = [8, 32], strides = [1, 1]} : vector<8x128xf32> to vector<8x32xf32>
    %181 = vector.extract_strided_slice %177 {offsets = [0, 96], sizes = [8, 32], strides = [1, 1]} : vector<8x128xf32> to vector<8x32xf32>
    %182 = arith.mulf %179, %151 : vector<8x32xf32>
    %183 = arith.mulf %178, %180 : vector<8x32xf32>
    %184 = arith.addf %182, %183 : vector<8x32xf32>
    %185 = math.tanh %184 : vector<8x32xf32>
    %186 = arith.mulf %181, %185 : vector<8x32xf32>
    %cst_41 = arith.constant dense<0.000000e+00> : vector<8x128xf32>
    %187 = tpu.matmul %186, %1, %cst_41 {dimension_numbers = #tpu.dot_dimension_numbers<[1], [0], [0], [1], [0, 0, 1, 1], [], []>} : vector<8x32xf32>, vector<32x128xf32>, vector<8x128xf32> -> vector<8x128xf32>
    %188 = arith.addf %170, %187 : vector<8x128xf32>
    %189 = arith.mulf %188, %8 : vector<8x128xf32>
    %190 = math.tanh %189 : vector<8x128xf32>
    %191 = arith.mulf %190, %8 : vector<8x128xf32>
    %192 = arith.addf %191, %11 : vector<8x128xf32>
    %193 = vector.extract_strided_slice %192 {offsets = [0, 0], sizes = [8, 32], strides = [1, 1]} : vector<8x128xf32> to vector<8x32xf32>
    %194 = vector.extract_strided_slice %192 {offsets = [0, 32], sizes = [8, 32], strides = [1, 1]} : vector<8x128xf32> to vector<8x32xf32>
    %195 = vector.extract_strided_slice %192 {offsets = [0, 64], sizes = [8, 32], strides = [1, 1]} : vector<8x128xf32> to vector<8x32xf32>
    %196 = vector.extract_strided_slice %192 {offsets = [0, 96], sizes = [8, 32], strides = [1, 1]} : vector<8x128xf32> to vector<8x32xf32>
    %197 = arith.mulf %194, %166 : vector<8x32xf32>
    %198 = arith.mulf %193, %195 : vector<8x32xf32>
    %199 = arith.addf %197, %198 : vector<8x32xf32>
    %200 = math.tanh %199 : vector<8x32xf32>
    %201 = arith.mulf %196, %200 : vector<8x32xf32>
    %cst_42 = arith.constant dense<0.000000e+00> : vector<8x128xf32>
    %202 = tpu.matmul %201, %2, %cst_42 {dimension_numbers = #tpu.dot_dimension_numbers<[1], [0], [0], [1], [0, 0, 1, 1], [], []>} : vector<8x32xf32>, vector<32x128xf32>, vector<8x128xf32> -> vector<8x128xf32>
    %203 = arith.addf %202, %5 : vector<8x128xf32>
    %cst_43 = arith.constant dense<0.000000e+00> : vector<8x128xf32>
    %204 = tpu.matmul %186, %0, %cst_43 {dimension_numbers = #tpu.dot_dimension_numbers<[1], [0], [0], [1], [0, 0, 1, 1], [], []>} : vector<8x32xf32>, vector<32x128xf32>, vector<8x128xf32> -> vector<8x128xf32>
    %205 = vector.extract_strided_slice %28 {offsets = [40, 0], sizes = [8, 128], strides = [1, 1]} : vector<64x128xf32> to vector<8x128xf32>
    %206 = arith.addf %204, %205 : vector<8x128xf32>
    %207 = arith.mulf %206, %8 : vector<8x128xf32>
    %208 = math.tanh %207 : vector<8x128xf32>
    %209 = arith.mulf %208, %8 : vector<8x128xf32>
    %210 = arith.addf %209, %11 : vector<8x128xf32>
    %211 = vector.extract_strided_slice %210 {offsets = [0, 0], sizes = [8, 32], strides = [1, 1]} : vector<8x128xf32> to vector<8x32xf32>
    %212 = vector.extract_strided_slice %210 {offsets = [0, 32], sizes = [8, 32], strides = [1, 1]} : vector<8x128xf32> to vector<8x32xf32>
    %213 = vector.extract_strided_slice %210 {offsets = [0, 64], sizes = [8, 32], strides = [1, 1]} : vector<8x128xf32> to vector<8x32xf32>
    %214 = vector.extract_strided_slice %210 {offsets = [0, 96], sizes = [8, 32], strides = [1, 1]} : vector<8x128xf32> to vector<8x32xf32>
    %215 = arith.mulf %212, %184 : vector<8x32xf32>
    %216 = arith.mulf %211, %213 : vector<8x32xf32>
    %217 = arith.addf %215, %216 : vector<8x32xf32>
    %218 = math.tanh %217 : vector<8x32xf32>
    %219 = arith.mulf %214, %218 : vector<8x32xf32>
    %cst_44 = arith.constant dense<0.000000e+00> : vector<8x128xf32>
    %220 = tpu.matmul %219, %1, %cst_44 {dimension_numbers = #tpu.dot_dimension_numbers<[1], [0], [0], [1], [0, 0, 1, 1], [], []>} : vector<8x32xf32>, vector<32x128xf32>, vector<8x128xf32> -> vector<8x128xf32>
    %221 = arith.addf %203, %220 : vector<8x128xf32>
    %222 = arith.mulf %221, %8 : vector<8x128xf32>
    %223 = math.tanh %222 : vector<8x128xf32>
    %224 = arith.mulf %223, %8 : vector<8x128xf32>
    %225 = arith.addf %224, %11 : vector<8x128xf32>
    %226 = vector.extract_strided_slice %225 {offsets = [0, 0], sizes = [8, 32], strides = [1, 1]} : vector<8x128xf32> to vector<8x32xf32>
    %227 = vector.extract_strided_slice %225 {offsets = [0, 32], sizes = [8, 32], strides = [1, 1]} : vector<8x128xf32> to vector<8x32xf32>
    %228 = vector.extract_strided_slice %225 {offsets = [0, 64], sizes = [8, 32], strides = [1, 1]} : vector<8x128xf32> to vector<8x32xf32>
    %229 = vector.extract_strided_slice %225 {offsets = [0, 96], sizes = [8, 32], strides = [1, 1]} : vector<8x128xf32> to vector<8x32xf32>
    %230 = arith.mulf %227, %199 : vector<8x32xf32>
    %231 = arith.mulf %226, %228 : vector<8x32xf32>
    %232 = arith.addf %230, %231 : vector<8x32xf32>
    %233 = math.tanh %232 : vector<8x32xf32>
    %234 = arith.mulf %229, %233 : vector<8x32xf32>
    %cst_45 = arith.constant dense<0.000000e+00> : vector<8x128xf32>
    %235 = tpu.matmul %234, %2, %cst_45 {dimension_numbers = #tpu.dot_dimension_numbers<[1], [0], [0], [1], [0, 0, 1, 1], [], []>} : vector<8x32xf32>, vector<32x128xf32>, vector<8x128xf32> -> vector<8x128xf32>
    %236 = arith.addf %235, %5 : vector<8x128xf32>
    %cst_46 = arith.constant dense<0.000000e+00> : vector<8x128xf32>
    %237 = tpu.matmul %219, %0, %cst_46 {dimension_numbers = #tpu.dot_dimension_numbers<[1], [0], [0], [1], [0, 0, 1, 1], [], []>} : vector<8x32xf32>, vector<32x128xf32>, vector<8x128xf32> -> vector<8x128xf32>
    %238 = vector.extract_strided_slice %28 {offsets = [48, 0], sizes = [8, 128], strides = [1, 1]} : vector<64x128xf32> to vector<8x128xf32>
    %239 = arith.addf %237, %238 : vector<8x128xf32>
    %240 = arith.mulf %239, %8 : vector<8x128xf32>
    %241 = math.tanh %240 : vector<8x128xf32>
    %242 = arith.mulf %241, %8 : vector<8x128xf32>
    %243 = arith.addf %242, %11 : vector<8x128xf32>
    %244 = vector.extract_strided_slice %243 {offsets = [0, 0], sizes = [8, 32], strides = [1, 1]} : vector<8x128xf32> to vector<8x32xf32>
    %245 = vector.extract_strided_slice %243 {offsets = [0, 32], sizes = [8, 32], strides = [1, 1]} : vector<8x128xf32> to vector<8x32xf32>
    %246 = vector.extract_strided_slice %243 {offsets = [0, 64], sizes = [8, 32], strides = [1, 1]} : vector<8x128xf32> to vector<8x32xf32>
    %247 = vector.extract_strided_slice %243 {offsets = [0, 96], sizes = [8, 32], strides = [1, 1]} : vector<8x128xf32> to vector<8x32xf32>
    %248 = arith.mulf %245, %217 : vector<8x32xf32>
    %249 = arith.mulf %244, %246 : vector<8x32xf32>
    %250 = arith.addf %248, %249 : vector<8x32xf32>
    %251 = math.tanh %250 : vector<8x32xf32>
    %252 = arith.mulf %247, %251 : vector<8x32xf32>
    %cst_47 = arith.constant dense<0.000000e+00> : vector<8x128xf32>
    %253 = tpu.matmul %252, %1, %cst_47 {dimension_numbers = #tpu.dot_dimension_numbers<[1], [0], [0], [1], [0, 0, 1, 1], [], []>} : vector<8x32xf32>, vector<32x128xf32>, vector<8x128xf32> -> vector<8x128xf32>
    %254 = arith.addf %236, %253 : vector<8x128xf32>
    %255 = arith.mulf %254, %8 : vector<8x128xf32>
    %256 = math.tanh %255 : vector<8x128xf32>
    %257 = arith.mulf %256, %8 : vector<8x128xf32>
    %258 = arith.addf %257, %11 : vector<8x128xf32>
    %259 = vector.extract_strided_slice %258 {offsets = [0, 0], sizes = [8, 32], strides = [1, 1]} : vector<8x128xf32> to vector<8x32xf32>
    %260 = vector.extract_strided_slice %258 {offsets = [0, 32], sizes = [8, 32], strides = [1, 1]} : vector<8x128xf32> to vector<8x32xf32>
    %261 = vector.extract_strided_slice %258 {offsets = [0, 64], sizes = [8, 32], strides = [1, 1]} : vector<8x128xf32> to vector<8x32xf32>
    %262 = vector.extract_strided_slice %258 {offsets = [0, 96], sizes = [8, 32], strides = [1, 1]} : vector<8x128xf32> to vector<8x32xf32>
    %263 = arith.mulf %260, %232 : vector<8x32xf32>
    %264 = arith.mulf %259, %261 : vector<8x32xf32>
    %265 = arith.addf %263, %264 : vector<8x32xf32>
    %266 = math.tanh %265 : vector<8x32xf32>
    %267 = arith.mulf %262, %266 : vector<8x32xf32>
    %cst_48 = arith.constant dense<0.000000e+00> : vector<8x128xf32>
    %268 = tpu.matmul %267, %2, %cst_48 {dimension_numbers = #tpu.dot_dimension_numbers<[1], [0], [0], [1], [0, 0, 1, 1], [], []>} : vector<8x32xf32>, vector<32x128xf32>, vector<8x128xf32> -> vector<8x128xf32>
    %269 = arith.addf %268, %5 : vector<8x128xf32>
    %cst_49 = arith.constant dense<0.000000e+00> : vector<8x128xf32>
    %270 = tpu.matmul %252, %0, %cst_49 {dimension_numbers = #tpu.dot_dimension_numbers<[1], [0], [0], [1], [0, 0, 1, 1], [], []>} : vector<8x32xf32>, vector<32x128xf32>, vector<8x128xf32> -> vector<8x128xf32>
    %271 = vector.extract_strided_slice %28 {offsets = [56, 0], sizes = [8, 128], strides = [1, 1]} : vector<64x128xf32> to vector<8x128xf32>
    %272 = arith.addf %270, %271 : vector<8x128xf32>
    %273 = arith.mulf %272, %8 : vector<8x128xf32>
    %274 = math.tanh %273 : vector<8x128xf32>
    %275 = arith.mulf %274, %8 : vector<8x128xf32>
    %276 = arith.addf %275, %11 : vector<8x128xf32>
    %277 = vector.extract_strided_slice %276 {offsets = [0, 0], sizes = [8, 32], strides = [1, 1]} : vector<8x128xf32> to vector<8x32xf32>
    %278 = vector.extract_strided_slice %276 {offsets = [0, 32], sizes = [8, 32], strides = [1, 1]} : vector<8x128xf32> to vector<8x32xf32>
    %279 = vector.extract_strided_slice %276 {offsets = [0, 64], sizes = [8, 32], strides = [1, 1]} : vector<8x128xf32> to vector<8x32xf32>
    %280 = vector.extract_strided_slice %276 {offsets = [0, 96], sizes = [8, 32], strides = [1, 1]} : vector<8x128xf32> to vector<8x32xf32>
    %281 = arith.mulf %278, %250 : vector<8x32xf32>
    %282 = arith.mulf %277, %279 : vector<8x32xf32>
    %283 = arith.addf %281, %282 : vector<8x32xf32>
    %284 = math.tanh %283 : vector<8x32xf32>
    %285 = arith.mulf %280, %284 : vector<8x32xf32>
    %cst_50 = arith.constant dense<0.000000e+00> : vector<8x128xf32>
    %286 = tpu.matmul %285, %1, %cst_50 {dimension_numbers = #tpu.dot_dimension_numbers<[1], [0], [0], [1], [0, 0, 1, 1], [], []>} : vector<8x32xf32>, vector<32x128xf32>, vector<8x128xf32> -> vector<8x128xf32>
    %287 = arith.addf %269, %286 : vector<8x128xf32>
    %288 = arith.mulf %287, %8 : vector<8x128xf32>
    %289 = math.tanh %288 : vector<8x128xf32>
    %290 = arith.mulf %289, %8 : vector<8x128xf32>
    %291 = arith.addf %290, %11 : vector<8x128xf32>
    %292 = vector.extract_strided_slice %291 {offsets = [0, 0], sizes = [8, 32], strides = [1, 1]} : vector<8x128xf32> to vector<8x32xf32>
    %293 = vector.extract_strided_slice %291 {offsets = [0, 32], sizes = [8, 32], strides = [1, 1]} : vector<8x128xf32> to vector<8x32xf32>
    %294 = vector.extract_strided_slice %291 {offsets = [0, 64], sizes = [8, 32], strides = [1, 1]} : vector<8x128xf32> to vector<8x32xf32>
    %295 = vector.extract_strided_slice %291 {offsets = [0, 96], sizes = [8, 32], strides = [1, 1]} : vector<8x128xf32> to vector<8x32xf32>
    %296 = arith.mulf %293, %265 : vector<8x32xf32>
    %297 = arith.mulf %292, %294 : vector<8x32xf32>
    %298 = arith.addf %296, %297 : vector<8x32xf32>
    %299 = math.tanh %298 : vector<8x32xf32>
    %300 = arith.mulf %295, %299 : vector<8x32xf32>
    %c0_51 = arith.constant 0 : index
    %c0_52 = arith.constant 0 : index
    %301 = vector.load %arg9[%c0_51, %c0_52] : memref<32x128xf32, #tpu.memory_space<vmem>>, vector<32x128xf32>
    %cst_53 = arith.constant dense<0.000000e+00> : vector<8x128xf32>
    %302 = tpu.matmul %300, %301, %cst_53 {dimension_numbers = #tpu.dot_dimension_numbers<[1], [0], [0], [1], [0, 0, 1, 1], [], []>} : vector<8x32xf32>, vector<32x128xf32>, vector<8x128xf32> -> vector<8x128xf32>
    %c0_54 = arith.constant 0 : index
    %c0_55 = arith.constant 0 : index
    %303 = vector.load %arg10[%c0_54, %c0_55] : memref<1x128xf32, #tpu.memory_space<vmem>>, vector<1x128xf32>
    %304 = vector.broadcast %303 : vector<1x128xf32> to vector<8x128xf32>
    %305 = arith.addf %302, %304 : vector<8x128xf32>
    %c0_56 = arith.constant 0 : index
    %c0_57 = arith.constant 0 : index
    %306 = vector.load %arg13[%c0_56, %c0_57] : memref<8x128xf32, #tpu.memory_space<vmem>>, vector<8x128xf32>
    tpu.vector_store %arg13[%c0_56, %c0_57], %305 {strides = array<i32>} : memref<8x128xf32, #tpu.memory_space<vmem>>, vector<8x128xf32>,
    %c0_58 = arith.constant 0 : index
    %c0_59 = arith.constant 0 : index
    %c0_60 = arith.constant 0 : index
    %307 = vector.load %arg14[%c0_58, %c0_59, %c0_60] : memref<2x8x32xf32, #tpu.memory_space<vmem>>, vector<1x8x32xf32>
    %308 = vector.shape_cast %307 : vector<1x8x32xf32> to vector<8x32xf32>
    %309 = vector.shape_cast %285 : vector<8x32xf32> to vector<1x8x32xf32>
    tpu.vector_store %arg14[%c0_58, %c0_59, %c0_60], %309 {strides = array<i32>} : memref<2x8x32xf32, #tpu.memory_space<vmem>>, vector<1x8x32xf32>,
    %c1_61 = arith.constant 1 : index
    %c0_62 = arith.constant 0 : index
    %c0_63 = arith.constant 0 : index
    %310 = vector.load %arg14[%c1_61, %c0_62, %c0_63] : memref<2x8x32xf32, #tpu.memory_space<vmem>>, vector<1x8x32xf32>
    %311 = vector.shape_cast %310 : vector<1x8x32xf32> to vector<8x32xf32>
    %312 = vector.shape_cast %300 : vector<8x32xf32> to vector<1x8x32xf32>
    tpu.vector_store %arg14[%c1_61, %c0_62, %c0_63], %312 {strides = array<i32>} : memref<2x8x32xf32, #tpu.memory_space<vmem>>, vector<1x8x32xf32>,
    %c0_64 = arith.constant 0 : index
    %c0_65 = arith.constant 0 : index
    %c0_66 = arith.constant 0 : index
    %313 = vector.load %arg15[%c0_64, %c0_65, %c0_66] : memref<2x8x32xf32, #tpu.memory_space<vmem>>, vector<1x8x32xf32>
    %314 = vector.shape_cast %313 : vector<1x8x32xf32> to vector<8x32xf32>
    %315 = vector.shape_cast %283 : vector<8x32xf32> to vector<1x8x32xf32>
    tpu.vector_store %arg15[%c0_64, %c0_65, %c0_66], %315 {strides = array<i32>} : memref<2x8x32xf32, #tpu.memory_space<vmem>>, vector<1x8x32xf32>,
    %c1_67 = arith.constant 1 : index
    %c0_68 = arith.constant 0 : index
    %c0_69 = arith.constant 0 : index
    %316 = vector.load %arg15[%c1_67, %c0_68, %c0_69] : memref<2x8x32xf32, #tpu.memory_space<vmem>>, vector<1x8x32xf32>
    %317 = vector.shape_cast %316 : vector<1x8x32xf32> to vector<8x32xf32>
    %318 = vector.shape_cast %298 : vector<8x32xf32> to vector<1x8x32xf32>
    tpu.vector_store %arg15[%c1_67, %c0_68, %c0_69], %318 {strides = array<i32>} : memref<2x8x32xf32, #tpu.memory_space<vmem>>, vector<1x8x32xf32>,
    return
  }
}

</mosaic_0001>

<llo_original>
// kernel: lstm_forecast_forward.2
$region0: #{lstm_forecast_forward.2}
  #allocation0 [shape = 'u32[]', space=smem, size = 0x4, offset = 0x4, fixed_abs, tag = 'smem constant byte address 0x4 - core index']
  #allocation1 [shape = 'u32[144,128]{1,0:T(1,128)}', space=vmem, size = 0x12000, scoped, tag = 'internal scratch']
  #allocation2 [shape = 'u32[2048]{0}', space=vmem, size = 0x2000, scoped, tag = 'scoped memory for lstm_forecast_forward.2']
  #allocation3 [shape = 'u32[2048]{0}', space=vmem, size = 0x2000, scoped, tag = 'scoped memory for lstm_forecast_forward.2']
  #allocation4 [shape = 'u32[2048]{0}', space=vmem, size = 0x2000, scoped, tag = 'scoped memory for lstm_forecast_forward.2']
  #allocation5 [shape = 'u32[2048]{0}', space=vmem, size = 0x2000, scoped, tag = 'scoped memory for lstm_forecast_forward.2']
  #allocation6 [shape = 'u32[2048]{0}', space=vmem, size = 0x2000, scoped, tag = 'scoped memory for lstm_forecast_forward.2']
  #allocation7 [shape = 'u32[2048]{0}', space=vmem, size = 0x2000, scoped, tag = 'scoped memory for lstm_forecast_forward.2']
  #allocation8 [shape = 'u32[2048]{0}', space=vmem, size = 0x2000, scoped, tag = 'scoped memory for lstm_forecast_forward.2']
  #allocation9 [shape = 'u32[2048]{0}', space=vmem, size = 0x2000, scoped, tag = 'scoped memory for lstm_forecast_forward.2']
  #allocation10 [shape = 'u32[2048]{0}', space=vmem, size = 0x2000, scoped, tag = 'scoped memory for lstm_forecast_forward.2']
  #allocation11 [shape = 'u32[2048]{0}', space=vmem, size = 0x2000, scoped, tag = 'scoped memory for lstm_forecast_forward.2']
  #allocation12 [shape = 'u32[2048]{0}', space=vmem, size = 0x2000, scoped, tag = 'scoped memory for lstm_forecast_forward.2']
  #allocation13 [shape = 'u32[2048]{0}', space=vmem, size = 0x2000, scoped, tag = 'scoped memory for lstm_forecast_forward.2']
  #allocation14 [shape = 'u32[2048]{0}', space=vmem, size = 0x2000, scoped, tag = 'scoped memory for lstm_forecast_forward.2']
  #allocation15 [shape = 'u32[2048]{0}', space=vmem, size = 0x2000, scoped, tag = 'scoped memory for lstm_forecast_forward.2']
  #allocation16 [shape = 'u32[2048]{0}', space=vmem, size = 0x2000, scoped, tag = 'scoped memory for lstm_forecast_forward.2']
  %s0 = inlined_call_operand.hbm [shape: f32[2,128], index: 0, kind: input, shape index: {}]
  %s1 = inlined_call_operand.vmem [shape: f32[32,128], index: 1, kind: input, shape index: {}]
  %s2 = inlined_call_operand.vmem [shape: f32[1,128], index: 2, kind: input, shape index: {}]
  %s3 = inlined_call_operand.vmem [shape: f32[32,128], index: 3, kind: input, shape index: {}]
  %s4 = inlined_call_operand.hbm [shape: f32[32,128], index: 4, kind: input, shape index: {}]
  %s5 = inlined_call_operand.hbm [shape: f32[1,128], index: 5, kind: input, shape index: {}]
  %s6 = inlined_call_operand.hbm [shape: f32[32,128], index: 6, kind: input, shape index: {}]
  %s7 = inlined_call_operand.hbm [shape: f32[1,128], index: 7, kind: input, shape index: {}]
  %s8 = inlined_call_operand.hbm [shape: f32[1,128], index: 8, kind: input, shape index: {}]
  %s9 = inlined_call_operand.hbm [shape: f32[1,128], index: 9, kind: input, shape index: {}]
  %s10 = inlined_call_operand.vmem [shape: f32[8,4,2], index: 10, kind: input, shape index: {}]
  %s11 = inlined_call_operand.<no memory space> [shape: f32[], index: 11, kind: input, shape index: {}]
  %s12 = inlined_call_operand.vmem [shape: f32[2,4,32], index: 12, kind: input, shape index: {}]
  %s13 = inlined_call_operand.hbm [shape: f32[2,4,32], index: 13, kind: input, shape index: {}]
  %s14 = inlined_call_operand.vmem [shape: f32[8,128], index: 14, kind: output, shape index: {0}]
  %s15 = inlined_call_operand.vmem [shape: f32[2,8,32], index: 15, kind: output, shape index: {1}]
  %s16 = inlined_call_operand.vmem [shape: f32[2,8,32], index: 16, kind: output, shape index: {2}]
  %17 = xla_tuple %s14, %s15, %s16
  %s18 = sld [smem:[#allocation0]]
  $region110: #{lstm_forecast_forward.2} parent=0
    _
  %s20 = ssub.s32 1, %s18
  %s21 = scalar_select 0, %s20, %s18
  %v22 = vstv %s11
  %v23 = vstv %s11
  %v24 = vstv %s11
  $region1: #{lstm_forecast_forward.2} parent=0
    #allocation17 [shape = 'u8[4096]{0}', space=vmem, size = 0x1000, scoped, tag = 'operand span for operand 13']
    #allocation18 [shape = 's32[1]{0}', space=sflag, size = 0x4, scoped, tag = 'scoped memory for lstm_forecast_forward.2']
    #allocation19 [shape = 'u8[1024]{0}', space=vmem, size = 0x400, scoped, tag = 'input window, operand 3, single buffered']
    #allocation20 [shape = 's32[1]{0}', space=sflag, size = 0x4, scoped, tag = 'scoped memory for lstm_forecast_forward.2']
    #allocation21 [shape = 'u8[16384]{0}', space=vmem, size = 0x4000, scoped, tag = 'input window, operand 7, single buffered']
    #allocation22 [shape = 'u8[512]{0}', space=vmem, size = 0x400, scoped, tag = 'input window, operand 8, single buffered']
    #allocation23 [shape = 's32[1]{0}', space=sflag, size = 0x4, scoped, tag = 'scoped memory for lstm_forecast_forward.2']
    #allocation24 [shape = 'u8[16384]{0}', space=vmem, size = 0x4000, scoped, tag = 'input window, operand 9, single buffered']
    #allocation25 [shape = 'u8[512]{0}', space=vmem, size = 0x400, scoped, tag = 'input window, operand 10, single buffered']
    #allocation26 [shape = 's32[1]{0}', space=sflag, size = 0x4, scoped, tag = 'scoped memory for lstm_forecast_forward.2']
    #allocation27 [shape = 'u8[512]{0}', space=vmem, size = 0x400, scoped, tag = 'input window, operand 11, single buffered']
    #allocation28 [shape = 'u8[512]{0}', space=vmem, size = 0x400, scoped, tag = 'input window, operand 12, single buffered']
    #allocation29 [shape = 's32[1]{0}', space=sflag, size = 0x4, scoped, tag = 'scoped memory for lstm_forecast_forward.2']
    #allocation30 [shape = 'u8[32768]{0}', space=vmem, size = 0x8000, dematerialized = true, scoped, tag = 'FusionAdapter Buffer %pad_bitcast_fusion.1 = f32[64,2]{1,0:T(8,128)} fusion(%param_10.3, %param_11.3), kind=kLoop, calls=%fused_computation.clone.clone, metadata={op_name="jit(lstm_forecast_forward)/reshape" stack_frame_id=11}']
    #allocation31 [shape = 'u8[8192]{0}', space=vmem, size = 0x2000, dematerialized = true, scoped, tag = 'FusionAdapter Buffer %fusion.2 = f32[2,8,32]{2,1,0:T(8,128)} fusion(%param_13.2, %param_11.3), kind=kLoop, calls=%fused_computation.3.clone, metadata={op_name="jit(lstm_forecast_forward)/jit(_pad)/pad" stack_frame_id=9}']
    #allocation32 [shape = 'u8[8192]{0}', space=vmem, size = 0x2000, dematerialized = true, scoped, tag = 'FusionAdapter Buffer %fusion.1 = f32[2,8,32]{2,1,0:T(8,128)} fusion(%param_12.3, %param_11.3), kind=kLoop, calls=%fused_computation.2.clone, metadata={op_name="jit(lstm_forecast_forward)/jit(_pad)/pad" stack_frame_id=10}']
    %25 = vsyncpa [#allocation18], 0
    %26 = vsyncpa [#allocation20], 0
    %27 = vsyncpa [#allocation23], 0
    %28 = vsyncpa [#allocation26], 0
    %29 = vsyncpa [#allocation29], 0
    // Predicated region
    $region2: #{lstm_forecast_forward.2} parent=1 // pred_check
      _
    $region3: #{lstm_forecast_forward.2} parent=1 // pred_check_branch
      %31 = sbr.rel (0) target = $region5
    $region4: #{lstm_forecast_forward.2} parent=1 // pred_region
      _
    $region5: #{lstm_forecast_forward.2} parent=1 // pred_fallthru
      _
    // Predicated region
    $region6: #{lstm_forecast_forward.2} parent=1 // pred_check
      _
    $region7: #{lstm_forecast_forward.2} parent=1 // pred_check_branch
      %33 = sbr.rel (0) target = $region9
    $region8: #{lstm_forecast_forward.2} parent=1 // pred_region
      %s35 = ssub.s32 128, 128
      %36 = vsyncadd [#allocation18], %s35
      %s37 = sshll.u32 [#allocation17], 4
      %s38 = int_to_ptr.vmem [resolvable:$true] %s37
      %43 = dma.hbm_to_vmem [thread:$0]  %s13, 128, %s38, [#allocation18], 64, 64, 4
    $region9: #{lstm_forecast_forward.2} parent=1 // pred_fallthru
      _
    // Predicated region
    $region10: #{lstm_forecast_forward.2} parent=1 // pred_check
      _
    $region11: #{lstm_forecast_forward.2} parent=1 // pred_check_branch
      %45 = sbr.rel (0) target = $region13
    $region12: #{lstm_forecast_forward.2} parent=1 // pred_region
      _
    $region13: #{lstm_forecast_forward.2} parent=1 // pred_fallthru
      _
    // Predicated region
    $region14: #{lstm_forecast_forward.2} parent=1 // pred_check
      _
    $region15: #{lstm_forecast_forward.2} parent=1 // pred_check_branch
      %47 = sbr.rel (0) target = $region17
    $region16: #{lstm_forecast_forward.2} parent=1 // pred_region
      %s49 = ssub.s32 32, 32
      %50 = vsyncadd [#allocation20], %s49
      %s52 = sshll.u32 [#allocation19], 4
      %s53 = int_to_ptr.vmem [resolvable:$true] %s52
      %55 = dma.hbm_to_vmem [thread:$0]  %s0, 32, %s53, [#allocation20]
    $region17: #{lstm_forecast_forward.2} parent=1 // pred_fallthru
      _
    // Predicated region
    $region18: #{lstm_forecast_forward.2} parent=1 // pred_check
      _
    $region19: #{lstm_forecast_forward.2} parent=1 // pred_check_branch
      %57 = sbr.rel (0) target = $region21
    $region20: #{lstm_forecast_forward.2} parent=1 // pred_region
      _
    $region21: #{lstm_forecast_forward.2} parent=1 // pred_fallthru
      _
    // Predicated region
    $region22: #{lstm_forecast_forward.2} parent=1 // pred_check
      _
    $region23: #{lstm_forecast_forward.2} parent=1 // pred_check_branch
      %59 = sbr.rel (0) target = $region25
    $region24: #{lstm_forecast_forward.2} parent=1 // pred_region
      _
    $region25: #{lstm_forecast_forward.2} parent=1 // pred_fallthru
      _
    // Predicated region
    $region26: #{lstm_forecast_forward.2} parent=1 // pred_check
      _
    $region27: #{lstm_forecast_forward.2} parent=1 // pred_check_branch
      %61 = sbr.rel (0) target = $region29
    $region28: #{lstm_forecast_forward.2} parent=1 // pred_region
      _
    $region29: #{lstm_forecast_forward.2} parent=1 // pred_fallthru
      _
    // Predicated region
    $region30: #{lstm_forecast_forward.2} parent=1 // pred_check
      _
    $region31: #{lstm_forecast_forward.2} parent=1 // pred_check_branch
      %63 = sbr.rel (0) target = $region33
    $region32: #{lstm_forecast_forward.2} parent=1 // pred_region
      %s65 = ssub.s32 512, 512
      %66 = vsyncadd [#allocation20], %s65
      %s67 = sshll.u32 [#allocation21], 4
      %s68 = int_to_ptr.vmem [resolvable:$true] %s67
      %73 = dma.hbm_to_vmem [thread:$0]  %s4, 512, %s68, [#allocation20], 128, 128, 8
    $region33: #{lstm_forecast_forward.2} parent=1 // pred_fallthru
      _
    // Predicated region
    $region34: #{lstm_forecast_forward.2} parent=1 // pred_check
      _
    $region35: #{lstm_forecast_forward.2} parent=1 // pred_check_branch
      %75 = sbr.rel (0) target = $region37
    $region36: #{lstm_forecast_forward.2} parent=1 // pred_region
      %s77 = ssub.s32 16, 16
      %78 = vsyncadd [#allocation23], %s77
      %s80 = sshll.u32 [#allocation22], 4
      %s81 = int_to_ptr.vmem [resolvable:$true] %s80
      %83 = dma.hbm_to_vmem [thread:$0]  %s5, 16, %s81, [#allocation23]
    $region37: #{lstm_forecast_forward.2} parent=1 // pred_fallthru
      _
    // Predicated region
    $region38: #{lstm_forecast_forward.2} parent=1 // pred_check
      _
    $region39: #{lstm_forecast_forward.2} parent=1 // pred_check_branch
      %85 = sbr.rel (0) target = $region41
    $region40: #{lstm_forecast_forward.2} parent=1 // pred_region
      %s87 = ssub.s32 512, 512
      %88 = vsyncadd [#allocation23], %s87
      %s89 = sshll.u32 [#allocation24], 4
      %s90 = int_to_ptr.vmem [resolvable:$true] %s89
      %95 = dma.hbm_to_vmem [thread:$0]  %s6, 512, %s90, [#allocation23], 128, 128, 8
    $region41: #{lstm_forecast_forward.2} parent=1 // pred_fallthru
      _
    // Predicated region
    $region42: #{lstm_forecast_forward.2} parent=1 // pred_check
      _
    $region43: #{lstm_forecast_forward.2} parent=1 // pred_check_branch
      %97 = sbr.rel (0) target = $region45
    $region44: #{lstm_forecast_forward.2} parent=1 // pred_region
      %s99 = ssub.s32 16, 16
      %100 = vsyncadd [#allocation26], %s99
      %s102 = sshll.u32 [#allocation25], 4
      %s103 = int_to_ptr.vmem [resolvable:$true] %s102
      %105 = dma.hbm_to_vmem [thread:$0]  %s7, 16, %s103, [#allocation26]
    $region45: #{lstm_forecast_forward.2} parent=1 // pred_fallthru
      _
    // Predicated region
    $region46: #{lstm_forecast_forward.2} parent=1 // pred_check
      _
    $region47: #{lstm_forecast_forward.2} parent=1 // pred_check_branch
      %107 = sbr.rel (0) target = $region49
    $region48: #{lstm_forecast_forward.2} parent=1 // pred_region
      %s109 = ssub.s32 16, 16
      %110 = vsyncadd [#allocation26], %s109
      %s112 = sshll.u32 [#allocation27], 4
      %s113 = int_to_ptr.vmem [resolvable:$true] %s112
      %115 = dma.hbm_to_vmem [thread:$0]  %s8, 16, %s113, [#allocation26]
    $region49: #{lstm_forecast_forward.2} parent=1 // pred_fallthru
      _
    // Predicated region
    $region50: #{lstm_forecast_forward.2} parent=1 // pred_check
      _
    $region51: #{lstm_forecast_forward.2} parent=1 // pred_check_branch
      %117 = sbr.rel (0) target = $region53
    $region52: #{lstm_forecast_forward.2} parent=1 // pred_region
      %s119 = ssub.s32 16, 16
      %120 = vsyncadd [#allocation29], %s119
      %s122 = sshll.u32 [#allocation28], 4
      %s123 = int_to_ptr.vmem [resolvable:$true] %s122
      %125 = dma.hbm_to_vmem [thread:$0]  %s9, 16, %s123, [#allocation29]
    $region53: #{lstm_forecast_forward.2} parent=1 // pred_fallthru
      _
    // Predicated region
    $region54: #{lstm_forecast_forward.2} parent=1 // pred_check
      _
    $region55: #{lstm_forecast_forward.2} parent=1 // pred_check_branch
      %127 = sbr.rel (0) target = $region57
    $region56: #{lstm_forecast_forward.2} parent=1 // pred_region
      %128 = dma.done [#allocation18], 128
    $region57: #{lstm_forecast_forward.2} parent=1 // pred_fallthru
      _
    // Predicated region
    $region58: #{lstm_forecast_forward.2} parent=1 // pred_check
      _
    $region59: #{lstm_forecast_forward.2} parent=1 // pred_check_branch
      %130 = sbr.rel (0) target = $region61
    $region60: #{lstm_forecast_forward.2} parent=1 // pred_region
      %131 = dma.done [#allocation20], 32
    $region61: #{lstm_forecast_forward.2} parent=1 // pred_fallthru
      _
    // Predicated region
    $region62: #{lstm_forecast_forward.2} parent=1 // pred_check
      _
    $region63: #{lstm_forecast_forward.2} parent=1 // pred_check_branch
      %133 = sbr.rel (0) target = $region65
    $region64: #{lstm_forecast_forward.2} parent=1 // pred_region
      %134 = dma.done [#allocation20], 512
    $region65: #{lstm_forecast_forward.2} parent=1 // pred_fallthru
      _
    // Predicated region
    $region66: #{lstm_forecast_forward.2} parent=1 // pred_check
      _
    $region67: #{lstm_forecast_forward.2} parent=1 // pred_check_branch
      %136 = sbr.rel (0) target = $region69
    $region68: #{lstm_forecast_forward.2} parent=1 // pred_region
      %137 = dma.done [#allocation23], 16
    $region69: #{lstm_forecast_forward.2} parent=1 // pred_fallthru
      _
    // Predicated region
    $region70: #{lstm_forecast_forward.2} parent=1 // pred_check
      _
    $region71: #{lstm_forecast_forward.2} parent=1 // pred_check_branch
      %139 = sbr.rel (0) target = $region73
    $region72: #{lstm_forecast_forward.2} parent=1 // pred_region
      %140 = dma.done [#allocation23], 512
    $region73: #{lstm_forecast_forward.2} parent=1 // pred_fallthru
      _
    // Predicated region
    $region74: #{lstm_forecast_forward.2} parent=1 // pred_check
      _
    $region75: #{lstm_forecast_forward.2} parent=1 // pred_check_branch
      %142 = sbr.rel (0) target = $region77
    $region76: #{lstm_forecast_forward.2} parent=1 // pred_region
      %143 = dma.done [#allocation26], 16
    $region77: #{lstm_forecast_forward.2} parent=1 // pred_fallthru
      _
    // Predicated region
    $region78: #{lstm_forecast_forward.2} parent=1 // pred_check
      _
    $region79: #{lstm_forecast_forward.2} parent=1 // pred_check_branch
      %145 = sbr.rel (0) target = $region81
    $region80: #{lstm_forecast_forward.2} parent=1 // pred_region
      %146 = dma.done [#allocation26], 16
    $region81: #{lstm_forecast_forward.2} parent=1 // pred_fallthru
      _
    // Predicated region
    $region82: #{lstm_forecast_forward.2} parent=1 // pred_check
      _
    $region83: #{lstm_forecast_forward.2} parent=1 // pred_check_branch
      %148 = sbr.rel (0) target = $region85
    $region84: #{lstm_forecast_forward.2} parent=1 // pred_region
      %149 = dma.done [#allocation29], 16
    $region85: #{lstm_forecast_forward.2} parent=1 // pred_fallthru
      _
    %v150 = vld [vmem:[%s10] sm:$0xf]
    %v151 = vlaneseq
    %v152 = vshrl.u32 %v151, 7
    %vm154 = vcmp.lt.s32.totalorder %v152, 4
    %v155 = vsel %vm154, %v150, %v22
    %v156 = vlaneseq
    %v157 = vand.u32 %v156, 127
    %vm159 = vcmp.lt.s32.totalorder %v157, 2
    %v160 = vsel %vm159, %v155, %v22
    %162 = vst [vmem:[#allocation30] sm:$0xff] %v160
    %s163 = scalar_lea.vmem %s10, 4
    %v164 = vld [vmem:[%s163] sm:$0xf]
    %v165 = vlaneseq
    %v166 = vshrl.u32 %v165, 7
    %vm168 = vcmp.lt.s32.totalorder %v166, 4
    %v169 = vsel %vm168, %v164, %v22
    %v170 = vlaneseq
    %v171 = vand.u32 %v170, 127
    %vm173 = vcmp.lt.s32.totalorder %v171, 2
    %v174 = vsel %vm173, %v169, %v22
    %s175 = scalar_lea.vmem [#allocation30], 8
    %177 = vst [vmem:[%s175] sm:$0xff] %v174
    %s178 = scalar_lea.vmem %s10, 8
    %v179 = vld [vmem:[%s178] sm:$0xf]
    %v180 = vlaneseq
    %v181 = vshrl.u32 %v180, 7
    %vm183 = vcmp.lt.s32.totalorder %v181, 4
    %v184 = vsel %vm183, %v179, %v22
    %v185 = vlaneseq
    %v186 = vand.u32 %v185, 127
    %vm188 = vcmp.lt.s32.totalorder %v186, 2
    %v189 = vsel %vm188, %v184, %v22
    %s190 = scalar_lea.vmem [#allocation30], 16
    %192 = vst [vmem:[%s190] sm:$0xff] %v189
    %s193 = scalar_lea.vmem %s10, 12
    %v194 = vld [vmem:[%s193] sm:$0xf]
    %v195 = vlaneseq
    %v196 = vshrl.u32 %v195, 7
    %vm198 = vcmp.lt.s32.totalorder %v196, 4
    %v199 = vsel %vm198, %v194, %v22
    %v200 = vlaneseq
    %v201 = vand.u32 %v200, 127
    %vm203 = vcmp.lt.s32.totalorder %v201, 2
    %v204 = vsel %vm203, %v199, %v22
    %s205 = scalar_lea.vmem [#allocation30], 24
    %207 = vst [vmem:[%s205] sm:$0xff] %v204
    %s208 = scalar_lea.vmem %s10, 16
    %v209 = vld [vmem:[%s208] sm:$0xf]
    %v210 = vlaneseq
    %v211 = vshrl.u32 %v210, 7
    %vm213 = vcmp.lt.s32.totalorder %v211, 4
    %v214 = vsel %vm213, %v209, %v22
    %v215 = vlaneseq
    %v216 = vand.u32 %v215, 127
    %vm218 = vcmp.lt.s32.totalorder %v216, 2
    %v219 = vsel %vm218, %v214, %v22
    %s220 = scalar_lea.vmem [#allocation30], 32
    %222 = vst [vmem:[%s220] sm:$0xff] %v219
    %s223 = scalar_lea.vmem %s10, 20
    %v224 = vld [vmem:[%s223] sm:$0xf]
    %v225 = vlaneseq
    %v226 = vshrl.u32 %v225, 7
    %vm228 = vcmp.lt.s32.totalorder %v226, 4
    %v229 = vsel %vm228, %v224, %v22
    %v230 = vlaneseq
    %v231 = vand.u32 %v230, 127
    %vm233 = vcmp.lt.s32.totalorder %v231, 2
    %v234 = vsel %vm233, %v229, %v22
    %s235 = scalar_lea.vmem [#allocation30], 40
    %237 = vst [vmem:[%s235] sm:$0xff] %v234
    %s238 = scalar_lea.vmem %s10, 24
    %v239 = vld [vmem:[%s238] sm:$0xf]
    %v240 = vlaneseq
    %v241 = vshrl.u32 %v240, 7
    %vm243 = vcmp.lt.s32.totalorder %v241, 4
    %v244 = vsel %vm243, %v239, %v22
    %v245 = vlaneseq
    %v246 = vand.u32 %v245, 127
    %vm248 = vcmp.lt.s32.totalorder %v246, 2
    %v249 = vsel %vm248, %v244, %v22
    %s250 = scalar_lea.vmem [#allocation30], 48
    %252 = vst [vmem:[%s250] sm:$0xff] %v249
    %s253 = scalar_lea.vmem %s10, 28
    %v254 = vld [vmem:[%s253] sm:$0xf]
    %v255 = vlaneseq
    %v256 = vshrl.u32 %v255, 7
    %vm258 = vcmp.lt.s32.totalorder %v256, 4
    %v259 = vsel %vm258, %v254, %v22
    %v260 = vlaneseq
    %v261 = vand.u32 %v260, 127
    %vm263 = vcmp.lt.s32.totalorder %v261, 2
    %v264 = vsel %vm263, %v259, %v22
    %s265 = scalar_lea.vmem [#allocation30], 56
    %267 = vst [vmem:[%s265] sm:$0xff] %v264
    %v268 = vld [vmem:[#allocation17] sm:$0xf]
    %v269 = vlaneseq
    %v270 = vshrl.u32 %v269, 7
    %vm272 = vcmp.lt.s32.totalorder %v270, 4
    %v273 = vsel %vm272, %v268, %v23
    %v274 = vlaneseq
    %v275 = vand.u32 %v274, 127
    %vm277 = vcmp.lt.s32.totalorder %v275, 32
    %v278 = vsel %vm277, %v273, %v23
    %280 = vst [vmem:[#allocation31] sm:$0xff] %v278
    %s281 = scalar_lea.vmem [#allocation17], 4
    %v282 = vld [vmem:[%s281] sm:$0xf]
    %v283 = vlaneseq
    %v284 = vshrl.u32 %v283, 7
    %vm286 = vcmp.lt.s32.totalorder %v284, 4
    %v287 = vsel %vm286, %v282, %v23
    %v288 = vlaneseq
    %v289 = vand.u32 %v288, 127
    %vm291 = vcmp.lt.s32.totalorder %v289, 32
    %v292 = vsel %vm291, %v287, %v23
    %s293 = scalar_lea.vmem [#allocation31], 8
    %295 = vst [vmem:[%s293] sm:$0xff] %v292
    %v296 = vld [vmem:[%s12] sm:$0xf]
    %v297 = vlaneseq
    %v298 = vshrl.u32 %v297, 7
    %vm300 = vcmp.lt.s32.totalorder %v298, 4
    %v301 = vsel %vm300, %v296, %v24
    %v302 = vlaneseq
    %v303 = vand.u32 %v302, 127
    %vm305 = vcmp.lt.s32.totalorder %v303, 32
    %v306 = vsel %vm305, %v301, %v24
    %308 = vst [vmem:[#allocation32] sm:$0xff] %v306
    %s309 = scalar_lea.vmem %s12, 4
    %v310 = vld [vmem:[%s309] sm:$0xf]
    %v311 = vlaneseq
    %v312 = vshrl.u32 %v311, 7
    %vm314 = vcmp.lt.s32.totalorder %v312, 4
    %v315 = vsel %vm314, %v310, %v24
    %v316 = vlaneseq
    %v317 = vand.u32 %v316, 127
    %vm319 = vcmp.lt.s32.totalorder %v317, 32
    %v320 = vsel %vm319, %v315, %v24
    %s321 = scalar_lea.vmem [#allocation32], 8
    %323 = vst [vmem:[%s321] sm:$0xff] %v320
    %v324 = vld [vmem:[%s1] sm:$0xff]
    %v325 = vld [vmem:[%s1 + $0x8] sm:$0xff]
    %v326 = vld [vmem:[%s1 + $0x10] sm:$0xff]
    %v327 = vld [vmem:[%s1 + $0x18] sm:$0xff]
    %v328 = vld [vmem:[%s3] sm:$0xff]
    %v329 = vld [vmem:[%s3 + $0x8] sm:$0xff]
    %v330 = vld [vmem:[%s3 + $0x10] sm:$0xff]
    %v331 = vld [vmem:[%s3 + $0x18] sm:$0xff]
    %v332 = vld [vmem:[#allocation21] sm:$0xff]
    %v333 = vld [vmem:[#allocation21 + $0x8] sm:$0xff]
    %v334 = vld [vmem:[#allocation21 + $0x10] sm:$0xff]
    %v335 = vld [vmem:[#allocation21 + $0x18] sm:$0xff]
    %v336 = vld [vmem:[#allocation22] sm:$0x1]
    %v338 = vlaneseq
    %v339 = vshrl.u32 %v338, 7
    %v340 = vsub.s32 0, %v339
    %v341 = vrot.slane %v336, %v340
    %v343 = vld [vmem:[#allocation27] sm:$0x1]
    %v345 = vlaneseq
    %v346 = vshrl.u32 %v345, 7
    %v347 = vsub.s32 0, %v346
    %v348 = vrot.slane %v343, %v347
    %v350 = vld [vmem:[#allocation28] sm:$0x1]
    %v352 = vlaneseq
    %v353 = vshrl.u32 %v352, 7
    %v354 = vsub.s32 0, %v353
    %v355 = vrot.slane %v350, %v354
    %v357 = vld [vmem:[#allocation30] sm:$0xff]
    %v358 = vld [vmem:[#allocation30 + $0x8] sm:$0xff]
    %v359 = vld [vmem:[#allocation30 + $0x10] sm:$0xff]
    %v360 = vld [vmem:[#allocation30 + $0x18] sm:$0xff]
    %v361 = vld [vmem:[#allocation30 + $0x20] sm:$0xff]
    %v362 = vld [vmem:[#allocation30 + $0x28] sm:$0xff]
    %v363 = vld [vmem:[#allocation30 + $0x30] sm:$0xff]
    %v364 = vld [vmem:[#allocation30 + $0x38] sm:$0xff]
    %v365 = vld [vmem:[%s2] sm:$0x1]
    %v367 = vlaneseq
    %v368 = vshrl.u32 %v367, 7
    %v369 = vsub.s32 0, %v368
    %v370 = vrot.slane %v365, %v369
    %v372 = vld [vmem:[#allocation19] sm:$0x3]
    %374 = vset.pattern.permute.xlu0 0
    %375 = vperm.xlu0 %374, %v357
    %v376 = vpop.permute.xlu0 %375
    %379 = vset.pattern.permute.xlu0 0
    %380 = vperm.xlu0 %379, %v358
    %v381 = vpop.permute.xlu0 %380
    %384 = vset.pattern.permute.xlu0 0
    %385 = vperm.xlu0 %384, %v359
    %v386 = vpop.permute.xlu0 %385
    %389 = vset.pattern.permute.xlu0 0
    %390 = vperm.xlu0 %389, %v360
    %v391 = vpop.permute.xlu0 %390
    %394 = vset.pattern.permute.xlu0 0
    %395 = vperm.xlu0 %394, %v361
    %v396 = vpop.permute.xlu0 %395
    %399 = vset.pattern.permute.xlu0 0
    %400 = vperm.xlu0 %399, %v362
    %v401 = vpop.permute.xlu0 %400
    %404 = vset.pattern.permute.xlu0 0
    %405 = vperm.xlu0 %404, %v363
    %v406 = vpop.permute.xlu0 %405
    %409 = vset.pattern.permute.xlu0 0
    %410 = vperm.xlu0 %409, %v364
    %v411 = vpop.permute.xlu0 %410
    %v413 = vlaneseq
    %v414 = vshrl.u32 %v413, 7
    %v415 = vsub.s32 0, %v414
    %v416 = vrot.slane %v372, %v415
    %v417 = vmul.f32 %v376, %v416
    %v418 = vmul.f32 %v381, %v416
    %v419 = vmul.f32 %v386, %v416
    %v420 = vmul.f32 %v391, %v416
    %v421 = vmul.f32 %v396, %v416
    %v422 = vmul.f32 %v401, %v416
    %v423 = vmul.f32 %v406, %v416
    %v424 = vmul.f32 %v411, %v416
    %v425 = vadd.f32 %v370, %v417
    %v426 = vadd.f32 %v370, %v418
    %v427 = vadd.f32 %v370, %v419
    %v428 = vadd.f32 %v370, %v420
    %v429 = vadd.f32 %v370, %v421
    %v430 = vadd.f32 %v370, %v422
    %v431 = vadd.f32 %v370, %v423
    %v432 = vadd.f32 %v370, %v424
    %433 = vset.pattern.permute.xlu0 1
    %434 = vperm.xlu0 %433, %v357
    %v435 = vpop.permute.xlu0 %434
    %437 = vset.pattern.permute.xlu0 1
    %438 = vperm.xlu0 %437, %v358
    %v439 = vpop.permute.xlu0 %438
    %441 = vset.pattern.permute.xlu0 1
    %442 = vperm.xlu0 %441, %v359
    %v443 = vpop.permute.xlu0 %442
    %445 = vset.pattern.permute.xlu0 1
    %446 = vperm.xlu0 %445, %v360
    %v447 = vpop.permute.xlu0 %446
    %449 = vset.pattern.permute.xlu0 1
    %450 = vperm.xlu0 %449, %v361
    %v451 = vpop.permute.xlu0 %450
    %453 = vset.pattern.permute.xlu0 1
    %454 = vperm.xlu0 %453, %v362
    %v455 = vpop.permute.xlu0 %454
    %457 = vset.pattern.permute.xlu0 1
    %458 = vperm.xlu0 %457, %v363
    %v459 = vpop.permute.xlu0 %458
    %461 = vset.pattern.permute.xlu0 1
    %462 = vperm.xlu0 %461, %v364
    %v463 = vpop.permute.xlu0 %462
    %v465 = vlaneseq
    %v466 = vshrl.u32 %v465, 7
    %v467 = vsub.s32 1, %v466
    %v468 = vrot.slane %v372, %v467
    %v469 = vmul.f32 %v435, %v468
    %v470 = vmul.f32 %v439, %v468
    %v471 = vmul.f32 %v443, %v468
    %v472 = vmul.f32 %v447, %v468
    %v473 = vmul.f32 %v451, %v468
    %v474 = vmul.f32 %v455, %v468
    %v475 = vmul.f32 %v459, %v468
    %v476 = vmul.f32 %v463, %v468
    %v477 = vadd.f32 %v425, %v469
    %v478 = vadd.f32 %v426, %v470
    %v479 = vadd.f32 %v427, %v471
    %v480 = vadd.f32 %v428, %v472
    %v481 = vadd.f32 %v429, %v473
    %v482 = vadd.f32 %v430, %v474
    %v483 = vadd.f32 %v431, %v475
    %v484 = vadd.f32 %v432, %v476
    %v485 = vld [vmem:[#allocation31] sm:$0xff]
    %v486 = vld [vmem:[#allocation32] sm:$0xff]
    %s487 = scalar_lea.vmem [#allocation31], 8
    %v488 = vld [vmem:[%s487] sm:$0xff]
    %s489 = scalar_lea.vmem [#allocation32], 8
    %v490 = vld [vmem:[%s489] sm:$0xff]
    %vm491 = vcmask 261120
    %v493 = vsel %vm491, %v488, 0
    %495 = vmatprep.subr.mxu0 0.0
    %496 = vmatpush1.msra.mxu0 %v332
    %497 = vmatprep.subr.mxu0 0.0
    %498 = vmatpush1.msra.mxu0 %v333
    %499 = vmatprep.subr.mxu0 0.0
    %500 = vmatpush1.msra.mxu0 %v334
    %501 = vmatprep.subr.mxu0 0.0
    %502 = vmatpush1.msra.mxu0 %v335
    %503 = vmatprep.subr.mxu0 0.0
    %504 = vmatpush1.msra.mxu0 0.0
    %505 = vmatprep.subr.mxu0 0.0
    %506 = vmatpush1.msra.mxu0 0.0
    %507 = vmatprep.subr.mxu0 0.0
    %508 = vmatpush1.msra.mxu0 0.0
    %509 = vmatprep.subr.mxu0 0.0
    %510 = vmatpush1.msra.mxu0 0.0
    %511 = vmatprep.subr.mxu0 0.0
    %512 = vmatpush1.msra.mxu0 0.0
    %513 = vmatprep.subr.mxu0 0.0
    %514 = vmatpush1.msra.mxu0 0.0
    %515 = vmatprep.subr.mxu0 0.0
    %516 = vmatpush1.msra.mxu0 0.0
    %517 = vmatprep.subr.mxu0 0.0
    %518 = vmatpush1.msra.mxu0 0.0
    %519 = vmatprep.subr.mxu0 0.0
    %520 = vmatpush1.msra.mxu0 0.0
    %521 = vmatprep.subr.mxu0 0.0
    %522 = vmatpush1.msra.mxu0 0.0
    %523 = vmatprep.subr.mxu0 0.0
    %524 = vmatpush1.msra.mxu0 0.0
    %525 = vmatprep.subr.mxu0 0.0
    %526 = vmatpush1.msra.mxu0 0.0
    %527 = vmatprep.subr.mxu0 0.0
    %528 = vmatpush1.msra.mxu0 0.0
    %529 = vmatprep.subr.mxu0 0.0
    %530 = vmatpush1.msra.mxu0 0.0
    %531 = vmatprep.subr.mxu0 0.0
    %532 = vmatpush1.msra.mxu0 0.0
    %533 = vmatprep.subr.mxu0 0.0
    %534 = vmatpush1.msra.mxu0 0.0
    %535 = vmatprep.subr.mxu0 0.0
    %536 = vmatpush1.msra.mxu0 0.0
    %537 = vmatprep.subr.mxu0 0.0
    %538 = vmatpush1.msra.mxu0 0.0
    %539 = vmatprep.subr.mxu0 0.0
    %540 = vmatpush1.msra.mxu0 0.0
    %541 = vmatprep.subr.mxu0 0.0
    %542 = vmatpush1.msra.mxu0 0.0
    %543 = vmatprep.subr.mxu0 0.0
    %544 = vmatpush1.msra.mxu0 0.0
    %545 = vmatprep.subr.mxu0 0.0
    %546 = vmatpush1.msra.mxu0 0.0
    %547 = vmatprep.subr.mxu0 0.0
    %548 = vmatpush1.msra.mxu0 0.0
    %549 = vmatprep.subr.mxu0 0.0
    %550 = vmatpush1.msra.mxu0 0.0
    %551 = vmatprep.subr.mxu0 0.0
    %552 = vmatpush1.msra.mxu0 0.0
    %553 = vmatprep.subr.mxu0 0.0
    %554 = vmatpush1.msra.mxu0 0.0
    %555 = vmatprep.subr.mxu0 0.0
    %556 = vmatpush1.msra.mxu0 0.0
    %557 = vmatprep.subr.mxu0 0.0
    %558 = vmatpush1.msra.mxu0 0.0
    %559 = vmatprep.mubr.f32.mxu0 0.0
    %560 = vmatmul.mubr.f32.gmra.mrb[0].mxu0 %v493
    %v561 = vpop.f32.mrb[0].mxu0
    %v562 = vadd.f32 %v341, %v561
    %v563 = vpop.f32.mrb[0].mxu0
    %564 = vdwg.mxu0
    %v566 = vsel %vm491, %v485, 0
    %568 = vmatprep.subr.mxu0 0.0
    %569 = vmatpush1.msra.mxu0 %v324
    %570 = vmatprep.subr.mxu0 0.0
    %571 = vmatpush1.msra.mxu0 %v325
    %572 = vmatprep.subr.mxu0 0.0
    %573 = vmatpush1.msra.mxu0 %v326
    %574 = vmatprep.subr.mxu0 0.0
    %575 = vmatpush1.msra.mxu0 %v327
    %576 = vmatprep.subr.mxu0 0.0
    %577 = vmatpush1.msra.mxu0 0.0
    %578 = vmatprep.subr.mxu0 0.0
    %579 = vmatpush1.msra.mxu0 0.0
    %580 = vmatprep.subr.mxu0 0.0
    %581 = vmatpush1.msra.mxu0 0.0
    %582 = vmatprep.subr.mxu0 0.0
    %583 = vmatpush1.msra.mxu0 0.0
    %584 = vmatprep.subr.mxu0 0.0
    %585 = vmatpush1.msra.mxu0 0.0
    %586 = vmatprep.subr.mxu0 0.0
    %587 = vmatpush1.msra.mxu0 0.0
    %588 = vmatprep.subr.mxu0 0.0
    %589 = vmatpush1.msra.mxu0 0.0
    %590 = vmatprep.subr.mxu0 0.0
    %591 = vmatpush1.msra.mxu0 0.0
    %592 = vmatprep.subr.mxu0 0.0
    %593 = vmatpush1.msra.mxu0 0.0
    %594 = vmatprep.subr.mxu0 0.0
    %595 = vmatpush1.msra.mxu0 0.0
    %596 = vmatprep.subr.mxu0 0.0
    %597 = vmatpush1.msra.mxu0 0.0
    %598 = vmatprep.subr.mxu0 0.0
    %599 = vmatpush1.msra.mxu0 0.0
    %600 = vmatprep.subr.mxu0 0.0
    %601 = vmatpush1.msra.mxu0 0.0
    %602 = vmatprep.subr.mxu0 0.0
    %603 = vmatpush1.msra.mxu0 0.0
    %604 = vmatprep.subr.mxu0 0.0
    %605 = vmatpush1.msra.mxu0 0.0
    %606 = vmatprep.subr.mxu0 0.0
    %607 = vmatpush1.msra.mxu0 0.0
    %608 = vmatprep.subr.mxu0 0.0
    %609 = vmatpush1.msra.mxu0 0.0
    %610 = vmatprep.subr.mxu0 0.0
    %611 = vmatpush1.msra.mxu0 0.0
    %612 = vmatprep.subr.mxu0 0.0
    %613 = vmatpush1.msra.mxu0 0.0
    %614 = vmatprep.subr.mxu0 0.0
    %615 = vmatpush1.msra.mxu0 0.0
    %616 = vmatprep.subr.mxu0 0.0
    %617 = vmatpush1.msra.mxu0 0.0
    %618 = vmatprep.subr.mxu0 0.0
    %619 = vmatpush1.msra.mxu0 0.0
    %620 = vmatprep.subr.mxu0 0.0
    %621 = vmatpush1.msra.mxu0 0.0
    %622 = vmatprep.subr.mxu0 0.0
    %623 = vmatpush1.msra.mxu0 0.0
    %624 = vmatprep.subr.mxu0 0.0
    %625 = vmatpush1.msra.mxu0 0.0
    %626 = vmatprep.subr.mxu0 0.0
    %627 = vmatpush1.msra.mxu0 0.0
    %628 = vmatprep.subr.mxu0 0.0
    %629 = vmatpush1.msra.mxu0 0.0
    %630 = vmatprep.subr.mxu0 0.0
    %631 = vmatpush1.msra.mxu0 0.0
    %632 = vmatprep.mubr.f32.mxu0 0.0
    %633 = vmatmul.mubr.f32.gmra.mrb[0].mxu0 %v566
    %v634 = vpop.f32.mrb[0].mxu0
    %v635 = vadd.f32 %v477, %v634
    %v636 = vpop.f32.mrb[0].mxu0
    %637 = vdwg.mxu0
    %v638 = vmul.f32 %v635, %v348
    %v639 = vtanh.pop %v638
    %v640 = vmul.f32 %v639, %v348
    %v641 = vadd.f32 %v640, %v355
    %643 = vrot.lane.b32.xlu0 %v486, 32
    %v644 = vpop.permute.xlu0 %643
    %v646 = vmul.f32 %v641, %v644
    %648 = vrot.lane.b32.xlu0 %v641, 64
    %v649 = vpop.permute.xlu0 %648
    %v651 = vmul.f32 %v641, %v649
    %653 = vrot.lane.b32.xlu0 %v651, 32
    %v654 = vpop.permute.xlu0 %653
    %v656 = vadd.f32 %v646, %v654
    %v657 = vtanh.pop %v656
    %659 = vrot.lane.b32.xlu0 %v657, 64
    %v660 = vpop.permute.xlu0 %659
    %v662 = vmul.f32 %v641, %v660
    %664 = vrot.lane.b32.xlu0 %v662, 32
    %v665 = vpop.permute.xlu0 %664
    %v666 = vsel %vm491, %v665, 0
    %668 = vmatprep.subr.mxu0 0.0
    %669 = vmatpush1.msra.mxu0 %v328
    %670 = vmatprep.subr.mxu0 0.0
    %671 = vmatpush1.msra.mxu0 %v329
    %672 = vmatprep.subr.mxu0 0.0
    %673 = vmatpush1.msra.mxu0 %v330
    %674 = vmatprep.subr.mxu0 0.0
    %675 = vmatpush1.msra.mxu0 %v331
    %676 = vmatprep.subr.mxu0 0.0
    %677 = vmatpush1.msra.mxu0 0.0
    %678 = vmatprep.subr.mxu0 0.0
    %679 = vmatpush1.msra.mxu0 0.0
    %680 = vmatprep.subr.mxu0 0.0
    %681 = vmatpush1.msra.mxu0 0.0
    %682 = vmatprep.subr.mxu0 0.0
    %683 = vmatpush1.msra.mxu0 0.0
    %684 = vmatprep.subr.mxu0 0.0
    %685 = vmatpush1.msra.mxu0 0.0
    %686 = vmatprep.subr.mxu0 0.0
    %687 = vmatpush1.msra.mxu0 0.0
    %688 = vmatprep.subr.mxu0 0.0
    %689 = vmatpush1.msra.mxu0 0.0
    %690 = vmatprep.subr.mxu0 0.0
    %691 = vmatpush1.msra.mxu0 0.0
    %692 = vmatprep.subr.mxu0 0.0
    %693 = vmatpush1.msra.mxu0 0.0
    %694 = vmatprep.subr.mxu0 0.0
    %695 = vmatpush1.msra.mxu0 0.0
    %696 = vmatprep.subr.mxu0 0.0
    %697 = vmatpush1.msra.mxu0 0.0
    %698 = vmatprep.subr.mxu0 0.0
    %699 = vmatpush1.msra.mxu0 0.0
    %700 = vmatprep.subr.mxu0 0.0
    %701 = vmatpush1.msra.mxu0 0.0
    %702 = vmatprep.subr.mxu0 0.0
    %703 = vmatpush1.msra.mxu0 0.0
    %704 = vmatprep.subr.mxu0 0.0
    %705 = vmatpush1.msra.mxu0 0.0
    %706 = vmatprep.subr.mxu0 0.0
    %707 = vmatpush1.msra.mxu0 0.0
    %708 = vmatprep.subr.mxu0 0.0
    %709 = vmatpush1.msra.mxu0 0.0
    %710 = vmatprep.subr.mxu0 0.0
    %711 = vmatpush1.msra.mxu0 0.0
    %712 = vmatprep.subr.mxu0 0.0
    %713 = vmatpush1.msra.mxu0 0.0
    %714 = vmatprep.subr.mxu0 0.0
    %715 = vmatpush1.msra.mxu0 0.0
    %716 = vmatprep.subr.mxu0 0.0
    %717 = vmatpush1.msra.mxu0 0.0
    %718 = vmatprep.subr.mxu0 0.0
    %719 = vmatpush1.msra.mxu0 0.0
    %720 = vmatprep.subr.mxu0 0.0
    %721 = vmatpush1.msra.mxu0 0.0
    %722 = vmatprep.subr.mxu0 0.0
    %723 = vmatpush1.msra.mxu0 0.0
    %724 = vmatprep.subr.mxu0 0.0
    %725 = vmatpush1.msra.mxu0 0.0
    %726 = vmatprep.subr.mxu0 0.0
    %727 = vmatpush1.msra.mxu0 0.0
    %728 = vmatprep.subr.mxu0 0.0
    %729 = vmatpush1.msra.mxu0 0.0
    %730 = vmatprep.subr.mxu0 0.0
    %731 = vmatpush1.msra.mxu0 0.0
    %732 = vmatprep.mubr.f32.mxu0 0.0
    %733 = vmatmul.mubr.f32.gmra.mrb[0].mxu0 %v666
    %v734 = vpop.f32.mrb[0].mxu0
    %v735 = vadd.f32 0.0, %v734
    %v736 = vpop.f32.mrb[0].mxu0
    %737 = vdwg.mxu0
    %v738 = vadd.f32 %v562, %v735
    %v739 = vmul.f32 %v738, %v348
    %v740 = vtanh.pop %v739
    %v741 = vmul.f32 %v740, %v348
    %v742 = vadd.f32 %v741, %v355
    %744 = vrot.lane.b32.xlu0 %v490, 32
    %v745 = vpop.permute.xlu0 %744
    %v747 = vmul.f32 %v742, %v745
    %749 = vrot.lane.b32.xlu0 %v742, 64
    %v750 = vpop.permute.xlu0 %749
    %v752 = vmul.f32 %v742, %v750
    %754 = vrot.lane.b32.xlu0 %v752, 32
    %v755 = vpop.permute.xlu0 %754
    %v757 = vadd.f32 %v747, %v755
    %v758 = vtanh.pop %v757
    %760 = vrot.lane.b32.xlu0 %v758, 64
    %v761 = vpop.permute.xlu0 %760
    %v763 = vmul.f32 %v742, %v761
    %765 = vrot.lane.b32.xlu0 %v763, 32
    %v766 = vpop.permute.xlu0 %765
    %v767 = vsel %vm491, %v766, 0
    %769 = vmatprep.subr.mxu0 0.0
    %770 = vmatpush1.msra.mxu0 %v332
    %771 = vmatprep.subr.mxu0 0.0
    %772 = vmatpush1.msra.mxu0 %v333
    %773 = vmatprep.subr.mxu0 0.0
    %774 = vmatpush1.msra.mxu0 %v334
    %775 = vmatprep.subr.mxu0 0.0
    %776 = vmatpush1.msra.mxu0 %v335
    %777 = vmatprep.subr.mxu0 0.0
    %778 = vmatpush1.msra.mxu0 0.0
    %779 = vmatprep.subr.mxu0 0.0
    %780 = vmatpush1.msra.mxu0 0.0
    %781 = vmatprep.subr.mxu0 0.0
    %782 = vmatpush1.msra.mxu0 0.0
    %783 = vmatprep.subr.mxu0 0.0
    %784 = vmatpush1.msra.mxu0 0.0
    %785 = vmatprep.subr.mxu0 0.0
    %786 = vmatpush1.msra.mxu0 0.0
    %787 = vmatprep.subr.mxu0 0.0
    %788 = vmatpush1.msra.mxu0 0.0
    %789 = vmatprep.subr.mxu0 0.0
    %790 = vmatpush1.msra.mxu0 0.0
    %791 = vmatprep.subr.mxu0 0.0
    %792 = vmatpush1.msra.mxu0 0.0
    %793 = vmatprep.subr.mxu0 0.0
    %794 = vmatpush1.msra.mxu0 0.0
    %795 = vmatprep.subr.mxu0 0.0
    %796 = vmatpush1.msra.mxu0 0.0
    %797 = vmatprep.subr.mxu0 0.0
    %798 = vmatpush1.msra.mxu0 0.0
    %799 = vmatprep.subr.mxu0 0.0
    %800 = vmatpush1.msra.mxu0 0.0
    %801 = vmatprep.subr.mxu0 0.0
    %802 = vmatpush1.msra.mxu0 0.0
    %803 = vmatprep.subr.mxu0 0.0
    %804 = vmatpush1.msra.mxu0 0.0
    %805 = vmatprep.subr.mxu0 0.0
    %806 = vmatpush1.msra.mxu0 0.0
    %807 = vmatprep.subr.mxu0 0.0
    %808 = vmatpush1.msra.mxu0 0.0
    %809 = vmatprep.subr.mxu0 0.0
    %810 = vmatpush1.msra.mxu0 0.0
    %811 = vmatprep.subr.mxu0 0.0
    %812 = vmatpush1.msra.mxu0 0.0
    %813 = vmatprep.subr.mxu0 0.0
    %814 = vmatpush1.msra.mxu0 0.0
    %815 = vmatprep.subr.mxu0 0.0
    %816 = vmatpush1.msra.mxu0 0.0
    %817 = vmatprep.subr.mxu0 0.0
    %818 = vmatpush1.msra.mxu0 0.0
    %819 = vmatprep.subr.mxu0 0.0
    %820 = vmatpush1.msra.mxu0 0.0
    %821 = vmatprep.subr.mxu0 0.0
    %822 = vmatpush1.msra.mxu0 0.0
    %823 = vmatprep.subr.mxu0 0.0
    %824 = vmatpush1.msra.mxu0 0.0
    %825 = vmatprep.subr.mxu0 0.0
    %826 = vmatpush1.msra.mxu0 0.0
    %827 = vmatprep.subr.mxu0 0.0
    %828 = vmatpush1.msra.mxu0 0.0
    %829 = vmatprep.subr.mxu0 0.0
    %830 = vmatpush1.msra.mxu0 0.0
    %831 = vmatprep.subr.mxu0 0.0
    %832 = vmatpush1.msra.mxu0 0.0
    %833 = vmatprep.mubr.f32.mxu0 0.0
    %834 = vmatmul.mubr.f32.gmra.mrb[0].mxu0 %v767
    %v835 = vpop.f32.mrb[0].mxu0
    %v836 = vadd.f32 %v341, %v835
    %v837 = vpop.f32.mrb[0].mxu0
    %838 = vdwg.mxu0
    %839 = vmatprep.subr.mxu0 0.0
    %840 = vmatpush1.msra.mxu0 %v324
    %841 = vmatprep.subr.mxu0 0.0
    %842 = vmatpush1.msra.mxu0 %v325
    %843 = vmatprep.subr.mxu0 0.0
    %844 = vmatpush1.msra.mxu0 %v326
    %845 = vmatprep.subr.mxu0 0.0
    %846 = vmatpush1.msra.mxu0 %v327
    %847 = vmatprep.subr.mxu0 0.0
    %848 = vmatpush1.msra.mxu0 0.0
    %849 = vmatprep.subr.mxu0 0.0
    %850 = vmatpush1.msra.mxu0 0.0
    %851 = vmatprep.subr.mxu0 0.0
    %852 = vmatpush1.msra.mxu0 0.0
    %853 = vmatprep.subr.mxu0 0.0
    %854 = vmatpush1.msra.mxu0 0.0
    %855 = vmatprep.subr.mxu0 0.0
    %856 = vmatpush1.msra.mxu0 0.0
    %857 = vmatprep.subr.mxu0 0.0
    %858 = vmatpush1.msra.mxu0 0.0
    %859 = vmatprep.subr.mxu0 0.0
    %860 = vmatpush1.msra.mxu0 0.0
    %861 = vmatprep.subr.mxu0 0.0
    %862 = vmatpush1.msra.mxu0 0.0
    %863 = vmatprep.subr.mxu0 0.0
    %864 = vmatpush1.msra.mxu0 0.0
    %865 = vmatprep.subr.mxu0 0.0
    %866 = vmatpush1.msra.mxu0 0.0
    %867 = vmatprep.subr.mxu0 0.0
    %868 = vmatpush1.msra.mxu0 0.0
    %869 = vmatprep.subr.mxu0 0.0
    %870 = vmatpush1.msra.mxu0 0.0
    %871 = vmatprep.subr.mxu0 0.0
    %872 = vmatpush1.msra.mxu0 0.0
    %873 = vmatprep.subr.mxu0 0.0
    %874 = vmatpush1.msra.mxu0 0.0
    %875 = vmatprep.subr.mxu0 0.0
    %876 = vmatpush1.msra.mxu0 0.0
    %877 = vmatprep.subr.mxu0 0.0
    %878 = vmatpush1.msra.mxu0 0.0
    %879 = vmatprep.subr.mxu0 0.0
    %880 = vmatpush1.msra.mxu0 0.0
    %881 = vmatprep.subr.mxu0 0.0
    %882 = vmatpush1.msra.mxu0 0.0
    %883 = vmatprep.subr.mxu0 0.0
    %884 = vmatpush1.msra.mxu0 0.0
    %885 = vmatprep.subr.mxu0 0.0
    %886 = vmatpush1.msra.mxu0 0.0
    %887 = vmatprep.subr.mxu0 0.0
    %888 = vmatpush1.msra.mxu0 0.0
    %889 = vmatprep.subr.mxu0 0.0
    %890 = vmatpush1.msra.mxu0 0.0
    %891 = vmatprep.subr.mxu0 0.0
    %892 = vmatpush1.msra.mxu0 0.0
    %893 = vmatprep.subr.mxu0 0.0
    %894 = vmatpush1.msra.mxu0 0.0
    %895 = vmatprep.subr.mxu0 0.0
    %896 = vmatpush1.msra.mxu0 0.0
    %897 = vmatprep.subr.mxu0 0.0
    %898 = vmatpush1.msra.mxu0 0.0
    %899 = vmatprep.subr.mxu0 0.0
    %900 = vmatpush1.msra.mxu0 0.0
    %901 = vmatprep.subr.mxu0 0.0
    %902 = vmatpush1.msra.mxu0 0.0
    %903 = vmatprep.mubr.f32.mxu0 0.0
    %904 = vmatmul.mubr.f32.gmra.mrb[0].mxu0 %v666
    %v905 = vpop.f32.mrb[0].mxu0
    %v906 = vadd.f32 %v478, %v905
    %v907 = vpop.f32.mrb[0].mxu0
    %908 = vdwg.mxu0
    %v909 = vmul.f32 %v906, %v348
    %v910 = vtanh.pop %v909
    %v911 = vmul.f32 %v910, %v348
    %v912 = vadd.f32 %v911, %v355
    %v913 = vmul.f32 %v912, %v656
    %915 = vrot.lane.b32.xlu0 %v912, 64
    %v916 = vpop.permute.xlu0 %915
    %v918 = vmul.f32 %v912, %v916
    %920 = vrot.lane.b32.xlu0 %v918, 32
    %v921 = vpop.permute.xlu0 %920
    %v923 = vadd.f32 %v913, %v921
    %v924 = vtanh.pop %v923
    %926 = vrot.lane.b32.xlu0 %v924, 64
    %v927 = vpop.permute.xlu0 %926
    %v929 = vmul.f32 %v912, %v927
    %931 = vrot.lane.b32.xlu0 %v929, 32
    %v932 = vpop.permute.xlu0 %931
    %v933 = vsel %vm491, %v932, 0
    %935 = vmatprep.subr.mxu0 0.0
    %936 = vmatpush1.msra.mxu0 %v328
    %937 = vmatprep.subr.mxu0 0.0
    %938 = vmatpush1.msra.mxu0 %v329
    %939 = vmatprep.subr.mxu0 0.0
    %940 = vmatpush1.msra.mxu0 %v330
    %941 = vmatprep.subr.mxu0 0.0
    %942 = vmatpush1.msra.mxu0 %v331
    %943 = vmatprep.subr.mxu0 0.0
    %944 = vmatpush1.msra.mxu0 0.0
    %945 = vmatprep.subr.mxu0 0.0
    %946 = vmatpush1.msra.mxu0 0.0
    %947 = vmatprep.subr.mxu0 0.0
    %948 = vmatpush1.msra.mxu0 0.0
    %949 = vmatprep.subr.mxu0 0.0
    %950 = vmatpush1.msra.mxu0 0.0
    %951 = vmatprep.subr.mxu0 0.0
    %952 = vmatpush1.msra.mxu0 0.0
    %953 = vmatprep.subr.mxu0 0.0
    %954 = vmatpush1.msra.mxu0 0.0
    %955 = vmatprep.subr.mxu0 0.0
    %956 = vmatpush1.msra.mxu0 0.0
    %957 = vmatprep.subr.mxu0 0.0
    %958 = vmatpush1.msra.mxu0 0.0
    %959 = vmatprep.subr.mxu0 0.0
    %960 = vmatpush1.msra.mxu0 0.0
    %961 = vmatprep.subr.mxu0 0.0
    %962 = vmatpush1.msra.mxu0 0.0
    %963 = vmatprep.subr.mxu0 0.0
    %964 = vmatpush1.msra.mxu0 0.0
    %965 = vmatprep.subr.mxu0 0.0
    %966 = vmatpush1.msra.mxu0 0.0
    %967 = vmatprep.subr.mxu0 0.0
    %968 = vmatpush1.msra.mxu0 0.0
    %969 = vmatprep.subr.mxu0 0.0
    %970 = vmatpush1.msra.mxu0 0.0
    %971 = vmatprep.subr.mxu0 0.0
    %972 = vmatpush1.msra.mxu0 0.0
    %973 = vmatprep.subr.mxu0 0.0
    %974 = vmatpush1.msra.mxu0 0.0
    %975 = vmatprep.subr.mxu0 0.0
    %976 = vmatpush1.msra.mxu0 0.0
    %977 = vmatprep.subr.mxu0 0.0
    %978 = vmatpush1.msra.mxu0 0.0
    %979 = vmatprep.subr.mxu0 0.0
    %980 = vmatpush1.msra.mxu0 0.0
    %981 = vmatprep.subr.mxu0 0.0
    %982 = vmatpush1.msra.mxu0 0.0
    %983 = vmatprep.subr.mxu0 0.0
    %984 = vmatpush1.msra.mxu0 0.0
    %985 = vmatprep.subr.mxu0 0.0
    %986 = vmatpush1.msra.mxu0 0.0
    %987 = vmatprep.subr.mxu0 0.0
    %988 = vmatpush1.msra.mxu0 0.0
    %989 = vmatprep.subr.mxu0 0.0
    %990 = vmatpush1.msra.mxu0 0.0
    %991 = vmatprep.subr.mxu0 0.0
    %992 = vmatpush1.msra.mxu0 0.0
    %993 = vmatprep.subr.mxu0 0.0
    %994 = vmatpush1.msra.mxu0 0.0
    %995 = vmatprep.subr.mxu0 0.0
    %996 = vmatpush1.msra.mxu0 0.0
    %997 = vmatprep.subr.mxu0 0.0
    %998 = vmatpush1.msra.mxu0 0.0
    %999 = vmatprep.mubr.f32.mxu0 0.0
    %1000 = vmatmul.mubr.f32.gmra.mrb[0].mxu0 %v933
    %v1001 = vpop.f32.mrb[0].mxu0
    %v1002 = vadd.f32 0.0, %v1001
    %v1003 = vpop.f32.mrb[0].mxu0
    %1004 = vdwg.mxu0
    %v1005 = vadd.f32 %v836, %v1002
    %v1006 = vmul.f32 %v1005, %v348
    %v1007 = vtanh.pop %v1006
    %v1008 = vmul.f32 %v1007, %v348
    %v1009 = vadd.f32 %v1008, %v355
    %v1010 = vmul.f32 %v1009, %v757
    %1012 = vrot.lane.b32.xlu0 %v1009, 64
    %v1013 = vpop.permute.xlu0 %1012
    %v1015 = vmul.f32 %v1009, %v1013
    %1017 = vrot.lane.b32.xlu0 %v1015, 32
    %v1018 = vpop.permute.xlu0 %1017
    %v1020 = vadd.f32 %v1010, %v1018
    %v1021 = vtanh.pop %v1020
    %1023 = vrot.lane.b32.xlu0 %v1021, 64
    %v1024 = vpop.permute.xlu0 %1023
    %v1026 = vmul.f32 %v1009, %v1024
    %1028 = vrot.lane.b32.xlu0 %v1026, 32
    %v1029 = vpop.permute.xlu0 %1028
    %v1030 = vsel %vm491, %v1029, 0
    %1032 = vmatprep.subr.mxu0 0.0
    %1033 = vmatpush1.msra.mxu0 %v332
    %1034 = vmatprep.subr.mxu0 0.0
    %1035 = vmatpush1.msra.mxu0 %v333
    %1036 = vmatprep.subr.mxu0 0.0
    %1037 = vmatpush1.msra.mxu0 %v334
    %1038 = vmatprep.subr.mxu0 0.0
    %1039 = vmatpush1.msra.mxu0 %v335
    %1040 = vmatprep.subr.mxu0 0.0
    %1041 = vmatpush1.msra.mxu0 0.0
    %1042 = vmatprep.subr.mxu0 0.0
    %1043 = vmatpush1.msra.mxu0 0.0
    %1044 = vmatprep.subr.mxu0 0.0
    %1045 = vmatpush1.msra.mxu0 0.0
    %1046 = vmatprep.subr.mxu0 0.0
    %1047 = vmatpush1.msra.mxu0 0.0
    %1048 = vmatprep.subr.mxu0 0.0
    %1049 = vmatpush1.msra.mxu0 0.0
    %1050 = vmatprep.subr.mxu0 0.0
    %1051 = vmatpush1.msra.mxu0 0.0
    %1052 = vmatprep.subr.mxu0 0.0
    %1053 = vmatpush1.msra.mxu0 0.0
    %1054 = vmatprep.subr.mxu0 0.0
    %1055 = vmatpush1.msra.mxu0 0.0
    %1056 = vmatprep.subr.mxu0 0.0
    %1057 = vmatpush1.msra.mxu0 0.0
    %1058 = vmatprep.subr.mxu0 0.0
    %1059 = vmatpush1.msra.mxu0 0.0
    %1060 = vmatprep.subr.mxu0 0.0
    %1061 = vmatpush1.msra.mxu0 0.0
    %1062 = vmatprep.subr.mxu0 0.0
    %1063 = vmatpush1.msra.mxu0 0.0
    %1064 = vmatprep.subr.mxu0 0.0
    %1065 = vmatpush1.msra.mxu0 0.0
    %1066 = vmatprep.subr.mxu0 0.0
    %1067 = vmatpush1.msra.mxu0 0.0
    %1068 = vmatprep.subr.mxu0 0.0
    %1069 = vmatpush1.msra.mxu0 0.0
    %1070 = vmatprep.subr.mxu0 0.0
    %1071 = vmatpush1.msra.mxu0 0.0
    %1072 = vmatprep.subr.mxu0 0.0
    %1073 = vmatpush1.msra.mxu0 0.0
    %1074 = vmatprep.subr.mxu0 0.0
    %1075 = vmatpush1.msra.mxu0 0.0
    %1076 = vmatprep.subr.mxu0 0.0
    %1077 = vmatpush1.msra.mxu0 0.0
    %1078 = vmatprep.subr.mxu0 0.0
    %1079 = vmatpush1.msra.mxu0 0.0
    %1080 = vmatprep.subr.mxu0 0.0
    %1081 = vmatpush1.msra.mxu0 0.0
    %1082 = vmatprep.subr.mxu0 0.0
    %1083 = vmatpush1.msra.mxu0 0.0
    %1084 = vmatprep.subr.mxu0 0.0
    %1085 = vmatpush1.msra.mxu0 0.0
    %1086 = vmatprep.subr.mxu0 0.0
    %1087 = vmatpush1.msra.mxu0 0.0
    %1088 = vmatprep.subr.mxu0 0.0
    %1089 = vmatpush1.msra.mxu0 0.0
    %1090 = vmatprep.subr.mxu0 0.0
    %1091 = vmatpush1.msra.mxu0 0.0
    %1092 = vmatprep.subr.mxu0 0.0
    %1093 = vmatpush1.msra.mxu0 0.0
    %1094 = vmatprep.subr.mxu0 0.0
    %1095 = vmatpush1.msra.mxu0 0.0
    %1096 = vmatprep.mubr.f32.mxu0 0.0
    %1097 = vmatmul.mubr.f32.gmra.mrb[0].mxu0 %v1030
    %v1098 = vpop.f32.mrb[0].mxu0
    %v1099 = vadd.f32 %v341, %v1098
    %v1100 = vpop.f32.mrb[0].mxu0
    %1101 = vdwg.mxu0
    %1102 = vmatprep.subr.mxu0 0.0
    %1103 = vmatpush1.msra.mxu0 %v324
    %1104 = vmatprep.subr.mxu0 0.0
    %1105 = vmatpush1.msra.mxu0 %v325
    %1106 = vmatprep.subr.mxu0 0.0
    %1107 = vmatpush1.msra.mxu0 %v326
    %1108 = vmatprep.subr.mxu0 0.0
    %1109 = vmatpush1.msra.mxu0 %v327
    %1110 = vmatprep.subr.mxu0 0.0
    %1111 = vmatpush1.msra.mxu0 0.0
    %1112 = vmatprep.subr.mxu0 0.0
    %1113 = vmatpush1.msra.mxu0 0.0
    %1114 = vmatprep.subr.mxu0 0.0
    %1115 = vmatpush1.msra.mxu0 0.0
    %1116 = vmatprep.subr.mxu0 0.0
    %1117 = vmatpush1.msra.mxu0 0.0
    %1118 = vmatprep.subr.mxu0 0.0
    %1119 = vmatpush1.msra.mxu0 0.0
    %1120 = vmatprep.subr.mxu0 0.0
    %1121 = vmatpush1.msra.mxu0 0.0
    %1122 = vmatprep.subr.mxu0 0.0
    %1123 = vmatpush1.msra.mxu0 0.0
    %1124 = vmatprep.subr.mxu0 0.0
    %1125 = vmatpush1.msra.mxu0 0.0
    %1126 = vmatprep.subr.mxu0 0.0
    %1127 = vmatpush1.msra.mxu0 0.0
    %1128 = vmatprep.subr.mxu0 0.0
    %1129 = vmatpush1.msra.mxu0 0.0
    %1130 = vmatprep.subr.mxu0 0.0
    %1131 = vmatpush1.msra.mxu0 0.0
    %1132 = vmatprep.subr.mxu0 0.0
    %1133 = vmatpush1.msra.mxu0 0.0
    %1134 = vmatprep.subr.mxu0 0.0
    %1135 = vmatpush1.msra.mxu0 0.0
    %1136 = vmatprep.subr.mxu0 0.0
    %1137 = vmatpush1.msra.mxu0 0.0
    %1138 = vmatprep.subr.mxu0 0.0
    %1139 = vmatpush1.msra.mxu0 0.0
    %1140 = vmatprep.subr.mxu0 0.0
    %1141 = vmatpush1.msra.mxu0 0.0
    %1142 = vmatprep.subr.mxu0 0.0
    %1143 = vmatpush1.msra.mxu0 0.0
    %1144 = vmatprep.subr.mxu0 0.0
    %1145 = vmatpush1.msra.mxu0 0.0
    %1146 = vmatprep.subr.mxu0 0.0
    %1147 = vmatpush1.msra.mxu0 0.0
    %1148 = vmatprep.subr.mxu0 0.0
    %1149 = vmatpush1.msra.mxu0 0.0
    %1150 = vmatprep.subr.mxu0 0.0
    %1151 = vmatpush1.msra.mxu0 0.0
    %1152 = vmatprep.subr.mxu0 0.0
    %1153 = vmatpush1.msra.mxu0 0.0
    %1154 = vmatprep.subr.mxu0 0.0
    %1155 = vmatpush1.msra.mxu0 0.0
    %1156 = vmatprep.subr.mxu0 0.0
    %1157 = vmatpush1.msra.mxu0 0.0
    %1158 = vmatprep.subr.mxu0 0.0
    %1159 = vmatpush1.msra.mxu0 0.0
    %1160 = vmatprep.subr.mxu0 0.0
    %1161 = vmatpush1.msra.mxu0 0.0
    %1162 = vmatprep.subr.mxu0 0.0
    %1163 = vmatpush1.msra.mxu0 0.0
    %1164 = vmatprep.subr.mxu0 0.0
    %1165 = vmatpush1.msra.mxu0 0.0
    %1166 = vmatprep.mubr.f32.mxu0 0.0
    %1167 = vmatmul.mubr.f32.gmra.mrb[0].mxu0 %v933
    %v1168 = vpop.f32.mrb[0].mxu0
    %v1169 = vadd.f32 %v479, %v1168
    %v1170 = vpop.f32.mrb[0].mxu0
    %1171 = vdwg.mxu0
    %v1172 = vmul.f32 %v1169, %v348
    %v1173 = vtanh.pop %v1172
    %v1174 = vmul.f32 %v1173, %v348
    %v1175 = vadd.f32 %v1174, %v355
    %v1176 = vmul.f32 %v1175, %v923
    %1178 = vrot.lane.b32.xlu0 %v1175, 64
    %v1179 = vpop.permute.xlu0 %1178
    %v1181 = vmul.f32 %v1175, %v1179
    %1183 = vrot.lane.b32.xlu0 %v1181, 32
    %v1184 = vpop.permute.xlu0 %1183
    %v1186 = vadd.f32 %v1176, %v1184
    %v1187 = vtanh.pop %v1186
    %1189 = vrot.lane.b32.xlu0 %v1187, 64
    %v1190 = vpop.permute.xlu0 %1189
    %v1192 = vmul.f32 %v1175, %v1190
    %1194 = vrot.lane.b32.xlu0 %v1192, 32
    %v1195 = vpop.permute.xlu0 %1194
    %v1196 = vsel %vm491, %v1195, 0
    %1198 = vmatprep.subr.mxu0 0.0
    %1199 = vmatpush1.msra.mxu0 %v328
    %1200 = vmatprep.subr.mxu0 0.0
    %1201 = vmatpush1.msra.mxu0 %v329
    %1202 = vmatprep.subr.mxu0 0.0
    %1203 = vmatpush1.msra.mxu0 %v330
    %1204 = vmatprep.subr.mxu0 0.0
    %1205 = vmatpush1.msra.mxu0 %v331
    %1206 = vmatprep.subr.mxu0 0.0
    %1207 = vmatpush1.msra.mxu0 0.0
    %1208 = vmatprep.subr.mxu0 0.0
    %1209 = vmatpush1.msra.mxu0 0.0
    %1210 = vmatprep.subr.mxu0 0.0
    %1211 = vmatpush1.msra.mxu0 0.0
    %1212 = vmatprep.subr.mxu0 0.0
    %1213 = vmatpush1.msra.mxu0 0.0
    %1214 = vmatprep.subr.mxu0 0.0
    %1215 = vmatpush1.msra.mxu0 0.0
    %1216 = vmatprep.subr.mxu0 0.0
    %1217 = vmatpush1.msra.mxu0 0.0
    %1218 = vmatprep.subr.mxu0 0.0
    %1219 = vmatpush1.msra.mxu0 0.0
    %1220 = vmatprep.subr.mxu0 0.0
    %1221 = vmatpush1.msra.mxu0 0.0
    %1222 = vmatprep.subr.mxu0 0.0
    %1223 = vmatpush1.msra.mxu0 0.0
    %1224 = vmatprep.subr.mxu0 0.0
    %1225 = vmatpush1.msra.mxu0 0.0
    %1226 = vmatprep.subr.mxu0 0.0
    %1227 = vmatpush1.msra.mxu0 0.0
    %1228 = vmatprep.subr.mxu0 0.0
    %1229 = vmatpush1.msra.mxu0 0.0
    %1230 = vmatprep.subr.mxu0 0.0
    %1231 = vmatpush1.msra.mxu0 0.0
    %1232 = vmatprep.subr.mxu0 0.0
    %1233 = vmatpush1.msra.mxu0 0.0
    %1234 = vmatprep.subr.mxu0 0.0
    %1235 = vmatpush1.msra.mxu0 0.0
    %1236 = vmatprep.subr.mxu0 0.0
    %1237 = vmatpush1.msra.mxu0 0.0
    %1238 = vmatprep.subr.mxu0 0.0
    %1239 = vmatpush1.msra.mxu0 0.0
    %1240 = vmatprep.subr.mxu0 0.0
    %1241 = vmatpush1.msra.mxu0 0.0
    %1242 = vmatprep.subr.mxu0 0.0
    %1243 = vmatpush1.msra.mxu0 0.0
    %1244 = vmatprep.subr.mxu0 0.0
    %1245 = vmatpush1.msra.mxu0 0.0
    %1246 = vmatprep.subr.mxu0 0.0
    %1247 = vmatpush1.msra.mxu0 0.0
    %1248 = vmatprep.subr.mxu0 0.0
    %1249 = vmatpush1.msra.mxu0 0.0
    %1250 = vmatprep.subr.mxu0 0.0
    %1251 = vmatpush1.msra.mxu0 0.0
    %1252 = vmatprep.subr.mxu0 0.0
    %1253 = vmatpush1.msra.mxu0 0.0
    %1254 = vmatprep.subr.mxu0 0.0
    %1255 = vmatpush1.msra.mxu0 0.0
    %1256 = vmatprep.subr.mxu0 0.0
    %1257 = vmatpush1.msra.mxu0 0.0
    %1258 = vmatprep.subr.mxu0 0.0
    %1259 = vmatpush1.msra.mxu0 0.0
    %1260 = vmatprep.subr.mxu0 0.0
    %1261 = vmatpush1.msra.mxu0 0.0
    %1262 = vmatprep.mubr.f32.mxu0 0.0
    %1263 = vmatmul.mubr.f32.gmra.mrb[0].mxu0 %v1196
    %v1264 = vpop.f32.mrb[0].mxu0
    %v1265 = vadd.f32 0.0, %v1264
    %v1266 = vpop.f32.mrb[0].mxu0
    %1267 = vdwg.mxu0
    %v1268 = vadd.f32 %v1099, %v1265
    %v1269 = vmul.f32 %v1268, %v348
    %v1270 = vtanh.pop %v1269
    %v1271 = vmul.f32 %v1270, %v348
    %v1272 = vadd.f32 %v1271, %v355
    %v1273 = vmul.f32 %v1272, %v1020
    %1275 = vrot.lane.b32.xlu0 %v1272, 64
    %v1276 = vpop.permute.xlu0 %1275
    %v1278 = vmul.f32 %v1272, %v1276
    %1280 = vrot.lane.b32.xlu0 %v1278, 32
    %v1281 = vpop.permute.xlu0 %1280
    %v1283 = vadd.f32 %v1273, %v1281
    %v1284 = vtanh.pop %v1283
    %1286 = vrot.lane.b32.xlu0 %v1284, 64
    %v1287 = vpop.permute.xlu0 %1286
    %v1289 = vmul.f32 %v1272, %v1287
    %1291 = vrot.lane.b32.xlu0 %v1289, 32
    %v1292 = vpop.permute.xlu0 %1291
    %v1293 = vsel %vm491, %v1292, 0
    %1295 = vmatprep.subr.mxu0 0.0
    %1296 = vmatpush1.msra.mxu0 %v332
    %1297 = vmatprep.subr.mxu0 0.0
    %1298 = vmatpush1.msra.mxu0 %v333
    %1299 = vmatprep.subr.mxu0 0.0
    %1300 = vmatpush1.msra.mxu0 %v334
    %1301 = vmatprep.subr.mxu0 0.0
    %1302 = vmatpush1.msra.mxu0 %v335
    %1303 = vmatprep.subr.mxu0 0.0
    %1304 = vmatpush1.msra.mxu0 0.0
    %1305 = vmatprep.subr.mxu0 0.0
    %1306 = vmatpush1.msra.mxu0 0.0
    %1307 = vmatprep.subr.mxu0 0.0
    %1308 = vmatpush1.msra.mxu0 0.0
    %1309 = vmatprep.subr.mxu0 0.0
    %1310 = vmatpush1.msra.mxu0 0.0
    %1311 = vmatprep.subr.mxu0 0.0
    %1312 = vmatpush1.msra.mxu0 0.0
    %1313 = vmatprep.subr.mxu0 0.0
    %1314 = vmatpush1.msra.mxu0 0.0
    %1315 = vmatprep.subr.mxu0 0.0
    %1316 = vmatpush1.msra.mxu0 0.0
    %1317 = vmatprep.subr.mxu0 0.0
    %1318 = vmatpush1.msra.mxu0 0.0
    %1319 = vmatprep.subr.mxu0 0.0
    %1320 = vmatpush1.msra.mxu0 0.0
    %1321 = vmatprep.subr.mxu0 0.0
    %1322 = vmatpush1.msra.mxu0 0.0
    %1323 = vmatprep.subr.mxu0 0.0
    %1324 = vmatpush1.msra.mxu0 0.0
    %1325 = vmatprep.subr.mxu0 0.0
    %1326 = vmatpush1.msra.mxu0 0.0
    %1327 = vmatprep.subr.mxu0 0.0
    %1328 = vmatpush1.msra.mxu0 0.0
    %1329 = vmatprep.subr.mxu0 0.0
    %1330 = vmatpush1.msra.mxu0 0.0
    %1331 = vmatprep.subr.mxu0 0.0
    %1332 = vmatpush1.msra.mxu0 0.0
    %1333 = vmatprep.subr.mxu0 0.0
    %1334 = vmatpush1.msra.mxu0 0.0
    %1335 = vmatprep.subr.mxu0 0.0
    %1336 = vmatpush1.msra.mxu0 0.0
    %1337 = vmatprep.subr.mxu0 0.0
    %1338 = vmatpush1.msra.mxu0 0.0
    %1339 = vmatprep.subr.mxu0 0.0
    %1340 = vmatpush1.msra.mxu0 0.0
    %1341 = vmatprep.subr.mxu0 0.0
    %1342 = vmatpush1.msra.mxu0 0.0
    %1343 = vmatprep.subr.mxu0 0.0
    %1344 = vmatpush1.msra.mxu0 0.0
    %1345 = vmatprep.subr.mxu0 0.0
    %1346 = vmatpush1.msra.mxu0 0.0
    %1347 = vmatprep.subr.mxu0 0.0
    %1348 = vmatpush1.msra.mxu0 0.0
    %1349 = vmatprep.subr.mxu0 0.0
    %1350 = vmatpush1.msra.mxu0 0.0
    %1351 = vmatprep.subr.mxu0 0.0
    %1352 = vmatpush1.msra.mxu0 0.0
    %1353 = vmatprep.subr.mxu0 0.0
    %1354 = vmatpush1.msra.mxu0 0.0
    %1355 = vmatprep.subr.mxu0 0.0
    %1356 = vmatpush1.msra.mxu0 0.0
    %1357 = vmatprep.subr.mxu0 0.0
    %1358 = vmatpush1.msra.mxu0 0.0
    %1359 = vmatprep.mubr.f32.mxu0 0.0
    %1360 = vmatmul.mubr.f32.gmra.mrb[0].mxu0 %v1293
    %v1361 = vpop.f32.mrb[0].mxu0
    %v1362 = vadd.f32 %v341, %v1361
    %v1363 = vpop.f32.mrb[0].mxu0
    %1364 = vdwg.mxu0
    %1365 = vmatprep.subr.mxu0 0.0
    %1366 = vmatpush1.msra.mxu0 %v324
    %1367 = vmatprep.subr.mxu0 0.0
    %1368 = vmatpush1.msra.mxu0 %v325
    %1369 = vmatprep.subr.mxu0 0.0
    %1370 = vmatpush1.msra.mxu0 %v326
    %1371 = vmatprep.subr.mxu0 0.0
    %1372 = vmatpush1.msra.mxu0 %v327
    %1373 = vmatprep.subr.mxu0 0.0
    %1374 = vmatpush1.msra.mxu0 0.0
    %1375 = vmatprep.subr.mxu0 0.0
    %1376 = vmatpush1.msra.mxu0 0.0
    %1377 = vmatprep.subr.mxu0 0.0
    %1378 = vmatpush1.msra.mxu0 0.0
    %1379 = vmatprep.subr.mxu0 0.0
    %1380 = vmatpush1.msra.mxu0 0.0
    %1381 = vmatprep.subr.mxu0 0.0
    %1382 = vmatpush1.msra.mxu0 0.0
    %1383 = vmatprep.subr.mxu0 0.0
    %1384 = vmatpush1.msra.mxu0 0.0
    %1385 = vmatprep.subr.mxu0 0.0
    %1386 = vmatpush1.msra.mxu0 0.0
    %1387 = vmatprep.subr.mxu0 0.0
    %1388 = vmatpush1.msra.mxu0 0.0
    %1389 = vmatprep.subr.mxu0 0.0
    %1390 = vmatpush1.msra.mxu0 0.0
    %1391 = vmatprep.subr.mxu0 0.0
    %1392 = vmatpush1.msra.mxu0 0.0
    %1393 = vmatprep.subr.mxu0 0.0
    %1394 = vmatpush1.msra.mxu0 0.0
    %1395 = vmatprep.subr.mxu0 0.0
    %1396 = vmatpush1.msra.mxu0 0.0
    %1397 = vmatprep.subr.mxu0 0.0
    %1398 = vmatpush1.msra.mxu0 0.0
    %1399 = vmatprep.subr.mxu0 0.0
    %1400 = vmatpush1.msra.mxu0 0.0
    %1401 = vmatprep.subr.mxu0 0.0
    %1402 = vmatpush1.msra.mxu0 0.0
    %1403 = vmatprep.subr.mxu0 0.0
    %1404 = vmatpush1.msra.mxu0 0.0
    %1405 = vmatprep.subr.mxu0 0.0
    %1406 = vmatpush1.msra.mxu0 0.0
    %1407 = vmatprep.subr.mxu0 0.0
    %1408 = vmatpush1.msra.mxu0 0.0
    %1409 = vmatprep.subr.mxu0 0.0
    %1410 = vmatpush1.msra.mxu0 0.0
    %1411 = vmatprep.subr.mxu0 0.0
    %1412 = vmatpush1.msra.mxu0 0.0
    %1413 = vmatprep.subr.mxu0 0.0
    %1414 = vmatpush1.msra.mxu0 0.0
    %1415 = vmatprep.subr.mxu0 0.0
    %1416 = vmatpush1.msra.mxu0 0.0
    %1417 = vmatprep.subr.mxu0 0.0
    %1418 = vmatpush1.msra.mxu0 0.0
    %1419 = vmatprep.subr.mxu0 0.0
    %1420 = vmatpush1.msra.mxu0 0.0
    %1421 = vmatprep.subr.mxu0 0.0
    %1422 = vmatpush1.msra.mxu0 0.0
    %1423 = vmatprep.subr.mxu0 0.0
    %1424 = vmatpush1.msra.mxu0 0.0
    %1425 = vmatprep.subr.mxu0 0.0
    %1426 = vmatpush1.msra.mxu0 0.0
    %1427 = vmatprep.subr.mxu0 0.0
    %1428 = vmatpush1.msra.mxu0 0.0
    %1429 = vmatprep.mubr.f32.mxu0 0.0
    %1430 = vmatmul.mubr.f32.gmra.mrb[0].mxu0 %v1196
    %v1431 = vpop.f32.mrb[0].mxu0
    %v1432 = vadd.f32 %v480, %v1431
    %v1433 = vpop.f32.mrb[0].mxu0
    %1434 = vdwg.mxu0
    %v1435 = vmul.f32 %v1432, %v348
    %v1436 = vtanh.pop %v1435
    %v1437 = vmul.f32 %v1436, %v348
    %v1438 = vadd.f32 %v1437, %v355
    %v1439 = vmul.f32 %v1438, %v1186
    %1441 = vrot.lane.b32.xlu0 %v1438, 64
    %v1442 = vpop.permute.xlu0 %1441
    %v1444 = vmul.f32 %v1438, %v1442
    %1446 = vrot.lane.b32.xlu0 %v1444, 32
    %v1447 = vpop.permute.xlu0 %1446
    %v1449 = vadd.f32 %v1439, %v1447
    %v1450 = vtanh.pop %v1449
    %1452 = vrot.lane.b32.xlu0 %v1450, 64
    %v1453 = vpop.permute.xlu0 %1452
    %v1455 = vmul.f32 %v1438, %v1453
    %1457 = vrot.lane.b32.xlu0 %v1455, 32
    %v1458 = vpop.permute.xlu0 %1457
    %v1459 = vsel %vm491, %v1458, 0
    %1461 = vmatprep.subr.mxu0 0.0
    %1462 = vmatpush1.msra.mxu0 %v328
    %1463 = vmatprep.subr.mxu0 0.0
    %1464 = vmatpush1.msra.mxu0 %v329
    %1465 = vmatprep.subr.mxu0 0.0
    %1466 = vmatpush1.msra.mxu0 %v330
    %1467 = vmatprep.subr.mxu0 0.0
    %1468 = vmatpush1.msra.mxu0 %v331
    %1469 = vmatprep.subr.mxu0 0.0
    %1470 = vmatpush1.msra.mxu0 0.0
    %1471 = vmatprep.subr.mxu0 0.0
    %1472 = vmatpush1.msra.mxu0 0.0
    %1473 = vmatprep.subr.mxu0 0.0
    %1474 = vmatpush1.msra.mxu0 0.0
    %1475 = vmatprep.subr.mxu0 0.0
    %1476 = vmatpush1.msra.mxu0 0.0
    %1477 = vmatprep.subr.mxu0 0.0
    %1478 = vmatpush1.msra.mxu0 0.0
    %1479 = vmatprep.subr.mxu0 0.0
    %1480 = vmatpush1.msra.mxu0 0.0
    %1481 = vmatprep.subr.mxu0 0.0
    %1482 = vmatpush1.msra.mxu0 0.0
    %1483 = vmatprep.subr.mxu0 0.0
    %1484 = vmatpush1.msra.mxu0 0.0
    %1485 = vmatprep.subr.mxu0 0.0
    %1486 = vmatpush1.msra.mxu0 0.0
    %1487 = vmatprep.subr.mxu0 0.0
    %1488 = vmatpush1.msra.mxu0 0.0
    %1489 = vmatprep.subr.mxu0 0.0
    %1490 = vmatpush1.msra.mxu0 0.0
    %1491 = vmatprep.subr.mxu0 0.0
    %1492 = vmatpush1.msra.mxu0 0.0
    %1493 = vmatprep.subr.mxu0 0.0
    %1494 = vmatpush1.msra.mxu0 0.0
    %1495 = vmatprep.subr.mxu0 0.0
    %1496 = vmatpush1.msra.mxu0 0.0
    %1497 = vmatprep.subr.mxu0 0.0
    %1498 = vmatpush1.msra.mxu0 0.0
    %1499 = vmatprep.subr.mxu0 0.0
    %1500 = vmatpush1.msra.mxu0 0.0
    %1501 = vmatprep.subr.mxu0 0.0
    %1502 = vmatpush1.msra.mxu0 0.0
    %1503 = vmatprep.subr.mxu0 0.0
    %1504 = vmatpush1.msra.mxu0 0.0
    %1505 = vmatprep.subr.mxu0 0.0
    %1506 = vmatpush1.msra.mxu0 0.0
    %1507 = vmatprep.subr.mxu0 0.0
    %1508 = vmatpush1.msra.mxu0 0.0
    %1509 = vmatprep.subr.mxu0 0.0
    %1510 = vmatpush1.msra.mxu0 0.0
    %1511 = vmatprep.subr.mxu0 0.0
    %1512 = vmatpush1.msra.mxu0 0.0
    %1513 = vmatprep.subr.mxu0 0.0
    %1514 = vmatpush1.msra.mxu0 0.0
    %1515 = vmatprep.subr.mxu0 0.0
    %1516 = vmatpush1.msra.mxu0 0.0
    %1517 = vmatprep.subr.mxu0 0.0
    %1518 = vmatpush1.msra.mxu0 0.0
    %1519 = vmatprep.subr.mxu0 0.0
    %1520 = vmatpush1.msra.mxu0 0.0
    %1521 = vmatprep.subr.mxu0 0.0
    %1522 = vmatpush1.msra.mxu0 0.0
    %1523 = vmatprep.subr.mxu0 0.0
    %1524 = vmatpush1.msra.mxu0 0.0
    %1525 = vmatprep.mubr.f32.mxu0 0.0
    %1526 = vmatmul.mubr.f32.gmra.mrb[0].mxu0 %v1459
    %v1527 = vpop.f32.mrb[0].mxu0
    %v1528 = vadd.f32 0.0, %v1527
    %v1529 = vpop.f32.mrb[0].mxu0
    %1530 = vdwg.mxu0
    %v1531 = vadd.f32 %v1362, %v1528
    %v1532 = vmul.f32 %v1531, %v348
    %v1533 = vtanh.pop %v1532
    %v1534 = vmul.f32 %v1533, %v348
    %v1535 = vadd.f32 %v1534, %v355
    %v1536 = vmul.f32 %v1535, %v1283
    %1538 = vrot.lane.b32.xlu0 %v1535, 64
    %v1539 = vpop.permute.xlu0 %1538
    %v1541 = vmul.f32 %v1535, %v1539
    %1543 = vrot.lane.b32.xlu0 %v1541, 32
    %v1544 = vpop.permute.xlu0 %1543
    %v1546 = vadd.f32 %v1536, %v1544
    %v1547 = vtanh.pop %v1546
    %1549 = vrot.lane.b32.xlu0 %v1547, 64
    %v1550 = vpop.permute.xlu0 %1549
    %v1552 = vmul.f32 %v1535, %v1550
    %1554 = vrot.lane.b32.xlu0 %v1552, 32
    %v1555 = vpop.permute.xlu0 %1554
    %v1556 = vsel %vm491, %v1555, 0
    %1558 = vmatprep.subr.mxu0 0.0
    %1559 = vmatpush1.msra.mxu0 %v332
    %1560 = vmatprep.subr.mxu0 0.0
    %1561 = vmatpush1.msra.mxu0 %v333
    %1562 = vmatprep.subr.mxu0 0.0
    %1563 = vmatpush1.msra.mxu0 %v334
    %1564 = vmatprep.subr.mxu0 0.0
    %1565 = vmatpush1.msra.mxu0 %v335
    %1566 = vmatprep.subr.mxu0 0.0
    %1567 = vmatpush1.msra.mxu0 0.0
    %1568 = vmatprep.subr.mxu0 0.0
    %1569 = vmatpush1.msra.mxu0 0.0
    %1570 = vmatprep.subr.mxu0 0.0
    %1571 = vmatpush1.msra.mxu0 0.0
    %1572 = vmatprep.subr.mxu0 0.0
    %1573 = vmatpush1.msra.mxu0 0.0
    %1574 = vmatprep.subr.mxu0 0.0
    %1575 = vmatpush1.msra.mxu0 0.0
    %1576 = vmatprep.subr.mxu0 0.0
    %1577 = vmatpush1.msra.mxu0 0.0
    %1578 = vmatprep.subr.mxu0 0.0
    %1579 = vmatpush1.msra.mxu0 0.0
    %1580 = vmatprep.subr.mxu0 0.0
    %1581 = vmatpush1.msra.mxu0 0.0
    %1582 = vmatprep.subr.mxu0 0.0
    %1583 = vmatpush1.msra.mxu0 0.0
    %1584 = vmatprep.subr.mxu0 0.0
    %1585 = vmatpush1.msra.mxu0 0.0
    %1586 = vmatprep.subr.mxu0 0.0
    %1587 = vmatpush1.msra.mxu0 0.0
    %1588 = vmatprep.subr.mxu0 0.0
    %1589 = vmatpush1.msra.mxu0 0.0
    %1590 = vmatprep.subr.mxu0 0.0
    %1591 = vmatpush1.msra.mxu0 0.0
    %1592 = vmatprep.subr.mxu0 0.0
    %1593 = vmatpush1.msra.mxu0 0.0
    %1594 = vmatprep.subr.mxu0 0.0
    %1595 = vmatpush1.msra.mxu0 0.0
    %1596 = vmatprep.subr.mxu0 0.0
    %1597 = vmatpush1.msra.mxu0 0.0
    %1598 = vmatprep.subr.mxu0 0.0
    %1599 = vmatpush1.msra.mxu0 0.0
    %1600 = vmatprep.subr.mxu0 0.0
    %1601 = vmatpush1.msra.mxu0 0.0
    %1602 = vmatprep.subr.mxu0 0.0
    %1603 = vmatpush1.msra.mxu0 0.0
    %1604 = vmatprep.subr.mxu0 0.0
    %1605 = vmatpush1.msra.mxu0 0.0
    %1606 = vmatprep.subr.mxu0 0.0
    %1607 = vmatpush1.msra.mxu0 0.0
    %1608 = vmatprep.subr.mxu0 0.0
    %1609 = vmatpush1.msra.mxu0 0.0
    %1610 = vmatprep.subr.mxu0 0.0
    %1611 = vmatpush1.msra.mxu0 0.0
    %1612 = vmatprep.subr.mxu0 0.0
    %1613 = vmatpush1.msra.mxu0 0.0
    %1614 = vmatprep.subr.mxu0 0.0
    %1615 = vmatpush1.msra.mxu0 0.0
    %1616 = vmatprep.subr.mxu0 0.0
    %1617 = vmatpush1.msra.mxu0 0.0
    %1618 = vmatprep.subr.mxu0 0.0
    %1619 = vmatpush1.msra.mxu0 0.0
    %1620 = vmatprep.subr.mxu0 0.0
    %1621 = vmatpush1.msra.mxu0 0.0
    %1622 = vmatprep.mubr.f32.mxu0 0.0
    %1623 = vmatmul.mubr.f32.gmra.mrb[0].mxu0 %v1556
    %v1624 = vpop.f32.mrb[0].mxu0
    %v1625 = vadd.f32 %v341, %v1624
    %v1626 = vpop.f32.mrb[0].mxu0
    %1627 = vdwg.mxu0
    %1628 = vmatprep.subr.mxu0 0.0
    %1629 = vmatpush1.msra.mxu0 %v324
    %1630 = vmatprep.subr.mxu0 0.0
    %1631 = vmatpush1.msra.mxu0 %v325
    %1632 = vmatprep.subr.mxu0 0.0
    %1633 = vmatpush1.msra.mxu0 %v326
    %1634 = vmatprep.subr.mxu0 0.0
    %1635 = vmatpush1.msra.mxu0 %v327
    %1636 = vmatprep.subr.mxu0 0.0
    %1637 = vmatpush1.msra.mxu0 0.0
    %1638 = vmatprep.subr.mxu0 0.0
    %1639 = vmatpush1.msra.mxu0 0.0
    %1640 = vmatprep.subr.mxu0 0.0
    %1641 = vmatpush1.msra.mxu0 0.0
    %1642 = vmatprep.subr.mxu0 0.0
    %1643 = vmatpush1.msra.mxu0 0.0
    %1644 = vmatprep.subr.mxu0 0.0
    %1645 = vmatpush1.msra.mxu0 0.0
    %1646 = vmatprep.subr.mxu0 0.0
    %1647 = vmatpush1.msra.mxu0 0.0
    %1648 = vmatprep.subr.mxu0 0.0
    %1649 = vmatpush1.msra.mxu0 0.0
    %1650 = vmatprep.subr.mxu0 0.0
    %1651 = vmatpush1.msra.mxu0 0.0
    %1652 = vmatprep.subr.mxu0 0.0
    %1653 = vmatpush1.msra.mxu0 0.0
    %1654 = vmatprep.subr.mxu0 0.0
    %1655 = vmatpush1.msra.mxu0 0.0
    %1656 = vmatprep.subr.mxu0 0.0
    %1657 = vmatpush1.msra.mxu0 0.0
    %1658 = vmatprep.subr.mxu0 0.0
    %1659 = vmatpush1.msra.mxu0 0.0
    %1660 = vmatprep.subr.mxu0 0.0
    %1661 = vmatpush1.msra.mxu0 0.0
    %1662 = vmatprep.subr.mxu0 0.0
    %1663 = vmatpush1.msra.mxu0 0.0
    %1664 = vmatprep.subr.mxu0 0.0
    %1665 = vmatpush1.msra.mxu0 0.0
    %1666 = vmatprep.subr.mxu0 0.0
    %1667 = vmatpush1.msra.mxu0 0.0
    %1668 = vmatprep.subr.mxu0 0.0
    %1669 = vmatpush1.msra.mxu0 0.0
    %1670 = vmatprep.subr.mxu0 0.0
    %1671 = vmatpush1.msra.mxu0 0.0
    %1672 = vmatprep.subr.mxu0 0.0
    %1673 = vmatpush1.msra.mxu0 0.0
    %1674 = vmatprep.subr.mxu0 0.0
    %1675 = vmatpush1.msra.mxu0 0.0
    %1676 = vmatprep.subr.mxu0 0.0
    %1677 = vmatpush1.msra.mxu0 0.0
    %1678 = vmatprep.subr.mxu0 0.0
    %1679 = vmatpush1.msra.mxu0 0.0
    %1680 = vmatprep.subr.mxu0 0.0
    %1681 = vmatpush1.msra.mxu0 0.0
    %1682 = vmatprep.subr.mxu0 0.0
    %1683 = vmatpush1.msra.mxu0 0.0
    %1684 = vmatprep.subr.mxu0 0.0
    %1685 = vmatpush1.msra.mxu0 0.0
    %1686 = vmatprep.subr.mxu0 0.0
    %1687 = vmatpush1.msra.mxu0 0.0
    %1688 = vmatprep.subr.mxu0 0.0
    %1689 = vmatpush1.msra.mxu0 0.0
    %1690 = vmatprep.subr.mxu0 0.0
    %1691 = vmatpush1.msra.mxu0 0.0
    %1692 = vmatprep.mubr.f32.mxu0 0.0
    %1693 = vmatmul.mubr.f32.gmra.mrb[0].mxu0 %v1459
    %v1694 = vpop.f32.mrb[0].mxu0
    %v1695 = vadd.f32 %v481, %v1694
    %v1696 = vpop.f32.mrb[0].mxu0
    %1697 = vdwg.mxu0
    %v1698 = vmul.f32 %v1695, %v348
    %v1699 = vtanh.pop %v1698
    %v1700 = vmul.f32 %v1699, %v348
    %v1701 = vadd.f32 %v1700, %v355
    %v1702 = vmul.f32 %v1701, %v1449
    %1704 = vrot.lane.b32.xlu0 %v1701, 64
    %v1705 = vpop.permute.xlu0 %1704
    %v1707 = vmul.f32 %v1701, %v1705
    %1709 = vrot.lane.b32.xlu0 %v1707, 32
    %v1710 = vpop.permute.xlu0 %1709
    %v1712 = vadd.f32 %v1702, %v1710
    %v1713 = vtanh.pop %v1712
    %1715 = vrot.lane.b32.xlu0 %v1713, 64
    %v1716 = vpop.permute.xlu0 %1715
    %v1718 = vmul.f32 %v1701, %v1716
    %1720 = vrot.lane.b32.xlu0 %v1718, 32
    %v1721 = vpop.permute.xlu0 %1720
    %v1722 = vsel %vm491, %v1721, 0
    %1724 = vmatprep.subr.mxu0 0.0
    %1725 = vmatpush1.msra.mxu0 %v328
    %1726 = vmatprep.subr.mxu0 0.0
    %1727 = vmatpush1.msra.mxu0 %v329
    %1728 = vmatprep.subr.mxu0 0.0
    %1729 = vmatpush1.msra.mxu0 %v330
    %1730 = vmatprep.subr.mxu0 0.0
    %1731 = vmatpush1.msra.mxu0 %v331
    %1732 = vmatprep.subr.mxu0 0.0
    %1733 = vmatpush1.msra.mxu0 0.0
    %1734 = vmatprep.subr.mxu0 0.0
    %1735 = vmatpush1.msra.mxu0 0.0
    %1736 = vmatprep.subr.mxu0 0.0
    %1737 = vmatpush1.msra.mxu0 0.0
    %1738 = vmatprep.subr.mxu0 0.0
    %1739 = vmatpush1.msra.mxu0 0.0
    %1740 = vmatprep.subr.mxu0 0.0
    %1741 = vmatpush1.msra.mxu0 0.0
    %1742 = vmatprep.subr.mxu0 0.0
    %1743 = vmatpush1.msra.mxu0 0.0
    %1744 = vmatprep.subr.mxu0 0.0
    %1745 = vmatpush1.msra.mxu0 0.0
    %1746 = vmatprep.subr.mxu0 0.0
    %1747 = vmatpush1.msra.mxu0 0.0
    %1748 = vmatprep.subr.mxu0 0.0
    %1749 = vmatpush1.msra.mxu0 0.0
    %1750 = vmatprep.subr.mxu0 0.0
    %1751 = vmatpush1.msra.mxu0 0.0
    %1752 = vmatprep.subr.mxu0 0.0
    %1753 = vmatpush1.msra.mxu0 0.0
    %1754 = vmatprep.subr.mxu0 0.0
    %1755 = vmatpush1.msra.mxu0 0.0
    %1756 = vmatprep.subr.mxu0 0.0
    %1757 = vmatpush1.msra.mxu0 0.0
    %1758 = vmatprep.subr.mxu0 0.0
    %1759 = vmatpush1.msra.mxu0 0.0
    %1760 = vmatprep.subr.mxu0 0.0
    %1761 = vmatpush1.msra.mxu0 0.0
    %1762 = vmatprep.subr.mxu0 0.0
    %1763 = vmatpush1.msra.mxu0 0.0
    %1764 = vmatprep.subr.mxu0 0.0
    %1765 = vmatpush1.msra.mxu0 0.0
    %1766 = vmatprep.subr.mxu0 0.0
    %1767 = vmatpush1.msra.mxu0 0.0
    %1768 = vmatprep.subr.mxu0 0.0
    %1769 = vmatpush1.msra.mxu0 0.0
    %1770 = vmatprep.subr.mxu0 0.0
    %1771 = vmatpush1.msra.mxu0 0.0
    %1772 = vmatprep.subr.mxu0 0.0
    %1773 = vmatpush1.msra.mxu0 0.0
    %1774 = vmatprep.subr.mxu0 0.0
    %1775 = vmatpush1.msra.mxu0 0.0
    %1776 = vmatprep.subr.mxu0 0.0
    %1777 = vmatpush1.msra.mxu0 0.0
    %1778 = vmatprep.subr.mxu0 0.0
    %1779 = vmatpush1.msra.mxu0 0.0
    %1780 = vmatprep.subr.mxu0 0.0
    %1781 = vmatpush1.msra.mxu0 0.0
    %1782 = vmatprep.subr.mxu0 0.0
    %1783 = vmatpush1.msra.mxu0 0.0
    %1784 = vmatprep.subr.mxu0 0.0
    %1785 = vmatpush1.msra.mxu0 0.0
    %1786 = vmatprep.subr.mxu0 0.0
    %1787 = vmatpush1.msra.mxu0 0.0
    %1788 = vmatprep.mubr.f32.mxu0 0.0
    %1789 = vmatmul.mubr.f32.gmra.mrb[0].mxu0 %v1722
    %v1790 = vpop.f32.mrb[0].mxu0
    %v1791 = vadd.f32 0.0, %v1790
    %v1792 = vpop.f32.mrb[0].mxu0
    %1793 = vdwg.mxu0
    %v1794 = vadd.f32 %v1625, %v1791
    %v1795 = vmul.f32 %v1794, %v348
    %v1796 = vtanh.pop %v1795
    %v1797 = vmul.f32 %v1796, %v348
    %v1798 = vadd.f32 %v1797, %v355
    %v1799 = vmul.f32 %v1798, %v1546
    %1801 = vrot.lane.b32.xlu0 %v1798, 64
    %v1802 = vpop.permute.xlu0 %1801
    %v1804 = vmul.f32 %v1798, %v1802
    %1806 = vrot.lane.b32.xlu0 %v1804, 32
    %v1807 = vpop.permute.xlu0 %1806
    %v1809 = vadd.f32 %v1799, %v1807
    %v1810 = vtanh.pop %v1809
    %1812 = vrot.lane.b32.xlu0 %v1810, 64
    %v1813 = vpop.permute.xlu0 %1812
    %v1815 = vmul.f32 %v1798, %v1813
    %1817 = vrot.lane.b32.xlu0 %v1815, 32
    %v1818 = vpop.permute.xlu0 %1817
    %v1819 = vsel %vm491, %v1818, 0
    %1821 = vmatprep.subr.mxu0 0.0
    %1822 = vmatpush1.msra.mxu0 %v332
    %1823 = vmatprep.subr.mxu0 0.0
    %1824 = vmatpush1.msra.mxu0 %v333
    %1825 = vmatprep.subr.mxu0 0.0
    %1826 = vmatpush1.msra.mxu0 %v334
    %1827 = vmatprep.subr.mxu0 0.0
    %1828 = vmatpush1.msra.mxu0 %v335
    %1829 = vmatprep.subr.mxu0 0.0
    %1830 = vmatpush1.msra.mxu0 0.0
    %1831 = vmatprep.subr.mxu0 0.0
    %1832 = vmatpush1.msra.mxu0 0.0
    %1833 = vmatprep.subr.mxu0 0.0
    %1834 = vmatpush1.msra.mxu0 0.0
    %1835 = vmatprep.subr.mxu0 0.0
    %1836 = vmatpush1.msra.mxu0 0.0
    %1837 = vmatprep.subr.mxu0 0.0
    %1838 = vmatpush1.msra.mxu0 0.0
    %1839 = vmatprep.subr.mxu0 0.0
    %1840 = vmatpush1.msra.mxu0 0.0
    %1841 = vmatprep.subr.mxu0 0.0
    %1842 = vmatpush1.msra.mxu0 0.0
    %1843 = vmatprep.subr.mxu0 0.0
    %1844 = vmatpush1.msra.mxu0 0.0
    %1845 = vmatprep.subr.mxu0 0.0
    %1846 = vmatpush1.msra.mxu0 0.0
    %1847 = vmatprep.subr.mxu0 0.0
    %1848 = vmatpush1.msra.mxu0 0.0
    %1849 = vmatprep.subr.mxu0 0.0
    %1850 = vmatpush1.msra.mxu0 0.0
    %1851 = vmatprep.subr.mxu0 0.0
    %1852 = vmatpush1.msra.mxu0 0.0
    %1853 = vmatprep.subr.mxu0 0.0
    %1854 = vmatpush1.msra.mxu0 0.0
    %1855 = vmatprep.subr.mxu0 0.0
    %1856 = vmatpush1.msra.mxu0 0.0
    %1857 = vmatprep.subr.mxu0 0.0
    %1858 = vmatpush1.msra.mxu0 0.0
    %1859 = vmatprep.subr.mxu0 0.0
    %1860 = vmatpush1.msra.mxu0 0.0
    %1861 = vmatprep.subr.mxu0 0.0
    %1862 = vmatpush1.msra.mxu0 0.0
    %1863 = vmatprep.subr.mxu0 0.0
    %1864 = vmatpush1.msra.mxu0 0.0
    %1865 = vmatprep.subr.mxu0 0.0
    %1866 = vmatpush1.msra.mxu0 0.0
    %1867 = vmatprep.subr.mxu0 0.0
    %1868 = vmatpush1.msra.mxu0 0.0
    %1869 = vmatprep.subr.mxu0 0.0
    %1870 = vmatpush1.msra.mxu0 0.0
    %1871 = vmatprep.subr.mxu0 0.0
    %1872 = vmatpush1.msra.mxu0 0.0
    %1873 = vmatprep.subr.mxu0 0.0
    %1874 = vmatpush1.msra.mxu0 0.0
    %1875 = vmatprep.subr.mxu0 0.0
    %1876 = vmatpush1.msra.mxu0 0.0
    %1877 = vmatprep.subr.mxu0 0.0
    %1878 = vmatpush1.msra.mxu0 0.0
    %1879 = vmatprep.subr.mxu0 0.0
    %1880 = vmatpush1.msra.mxu0 0.0
    %1881 = vmatprep.subr.mxu0 0.0
    %1882 = vmatpush1.msra.mxu0 0.0
    %1883 = vmatprep.subr.mxu0 0.0
    %1884 = vmatpush1.msra.mxu0 0.0
    %1885 = vmatprep.mubr.f32.mxu0 0.0
    %1886 = vmatmul.mubr.f32.gmra.mrb[0].mxu0 %v1819
    %v1887 = vpop.f32.mrb[0].mxu0
    %v1888 = vadd.f32 %v341, %v1887
    %v1889 = vpop.f32.mrb[0].mxu0
    %1890 = vdwg.mxu0
    %1891 = vmatprep.subr.mxu0 0.0
    %1892 = vmatpush1.msra.mxu0 %v324
    %1893 = vmatprep.subr.mxu0 0.0
    %1894 = vmatpush1.msra.mxu0 %v325
    %1895 = vmatprep.subr.mxu0 0.0
    %1896 = vmatpush1.msra.mxu0 %v326
    %1897 = vmatprep.subr.mxu0 0.0
    %1898 = vmatpush1.msra.mxu0 %v327
    %1899 = vmatprep.subr.mxu0 0.0
    %1900 = vmatpush1.msra.mxu0 0.0
    %1901 = vmatprep.subr.mxu0 0.0
    %1902 = vmatpush1.msra.mxu0 0.0
    %1903 = vmatprep.subr.mxu0 0.0
    %1904 = vmatpush1.msra.mxu0 0.0
    %1905 = vmatprep.subr.mxu0 0.0
    %1906 = vmatpush1.msra.mxu0 0.0
    %1907 = vmatprep.subr.mxu0 0.0
    %1908 = vmatpush1.msra.mxu0 0.0
    %1909 = vmatprep.subr.mxu0 0.0
    %1910 = vmatpush1.msra.mxu0 0.0
    %1911 = vmatprep.subr.mxu0 0.0
    %1912 = vmatpush1.msra.mxu0 0.0
    %1913 = vmatprep.subr.mxu0 0.0
    %1914 = vmatpush1.msra.mxu0 0.0
    %1915 = vmatprep.subr.mxu0 0.0
    %1916 = vmatpush1.msra.mxu0 0.0
    %1917 = vmatprep.subr.mxu0 0.0
    %1918 = vmatpush1.msra.mxu0 0.0
    %1919 = vmatprep.subr.mxu0 0.0
    %1920 = vmatpush1.msra.mxu0 0.0
    %1921 = vmatprep.subr.mxu0 0.0
    %1922 = vmatpush1.msra.mxu0 0.0
    %1923 = vmatprep.subr.mxu0 0.0
    %1924 = vmatpush1.msra.mxu0 0.0
    %1925 = vmatprep.subr.mxu0 0.0
    %1926 = vmatpush1.msra.mxu0 0.0
    %1927 = vmatprep.subr.mxu0 0.0
    %1928 = vmatpush1.msra.mxu0 0.0
    %1929 = vmatprep.subr.mxu0 0.0
    %1930 = vmatpush1.msra.mxu0 0.0
    %1931 = vmatprep.subr.mxu0 0.0
    %1932 = vmatpush1.msra.mxu0 0.0
    %1933 = vmatprep.subr.mxu0 0.0
    %1934 = vmatpush1.msra.mxu0 0.0
    %1935 = vmatprep.subr.mxu0 0.0
    %1936 = vmatpush1.msra.mxu0 0.0
    %1937 = vmatprep.subr.mxu0 0.0
    %1938 = vmatpush1.msra.mxu0 0.0
    %1939 = vmatprep.subr.mxu0 0.0
    %1940 = vmatpush1.msra.mxu0 0.0
    %1941 = vmatprep.subr.mxu0 0.0
    %1942 = vmatpush1.msra.mxu0 0.0
    %1943 = vmatprep.subr.mxu0 0.0
    %1944 = vmatpush1.msra.mxu0 0.0
    %1945 = vmatprep.subr.mxu0 0.0
    %1946 = vmatpush1.msra.mxu0 0.0
    %1947 = vmatprep.subr.mxu0 0.0
    %1948 = vmatpush1.msra.mxu0 0.0
    %1949 = vmatprep.subr.mxu0 0.0
    %1950 = vmatpush1.msra.mxu0 0.0
    %1951 = vmatprep.subr.mxu0 0.0
    %1952 = vmatpush1.msra.mxu0 0.0
    %1953 = vmatprep.subr.mxu0 0.0
    %1954 = vmatpush1.msra.mxu0 0.0
    %1955 = vmatprep.mubr.f32.mxu0 0.0
    %1956 = vmatmul.mubr.f32.gmra.mrb[0].mxu0 %v1722
    %v1957 = vpop.f32.mrb[0].mxu0
    %v1958 = vadd.f32 %v482, %v1957
    %v1959 = vpop.f32.mrb[0].mxu0
    %1960 = vdwg.mxu0
    %v1961 = vmul.f32 %v1958, %v348
    %v1962 = vtanh.pop %v1961
    %v1963 = vmul.f32 %v1962, %v348
    %v1964 = vadd.f32 %v1963, %v355
    %v1965 = vmul.f32 %v1964, %v1712
    %1967 = vrot.lane.b32.xlu0 %v1964, 64
    %v1968 = vpop.permute.xlu0 %1967
    %v1970 = vmul.f32 %v1964, %v1968
    %1972 = vrot.lane.b32.xlu0 %v1970, 32
    %v1973 = vpop.permute.xlu0 %1972
    %v1975 = vadd.f32 %v1965, %v1973
    %v1976 = vtanh.pop %v1975
    %1978 = vrot.lane.b32.xlu0 %v1976, 64
    %v1979 = vpop.permute.xlu0 %1978
    %v1981 = vmul.f32 %v1964, %v1979
    %1983 = vrot.lane.b32.xlu0 %v1981, 32
    %v1984 = vpop.permute.xlu0 %1983
    %v1985 = vsel %vm491, %v1984, 0
    %1987 = vmatprep.subr.mxu0 0.0
    %1988 = vmatpush1.msra.mxu0 %v328
    %1989 = vmatprep.subr.mxu0 0.0
    %1990 = vmatpush1.msra.mxu0 %v329
    %1991 = vmatprep.subr.mxu0 0.0
    %1992 = vmatpush1.msra.mxu0 %v330
    %1993 = vmatprep.subr.mxu0 0.0
    %1994 = vmatpush1.msra.mxu0 %v331
    %1995 = vmatprep.subr.mxu0 0.0
    %1996 = vmatpush1.msra.mxu0 0.0
    %1997 = vmatprep.subr.mxu0 0.0
    %1998 = vmatpush1.msra.mxu0 0.0
    %1999 = vmatprep.subr.mxu0 0.0
    %2000 = vmatpush1.msra.mxu0 0.0
    %2001 = vmatprep.subr.mxu0 0.0
    %2002 = vmatpush1.msra.mxu0 0.0
    %2003 = vmatprep.subr.mxu0 0.0
    %2004 = vmatpush1.msra.mxu0 0.0
    %2005 = vmatprep.subr.mxu0 0.0
    %2006 = vmatpush1.msra.mxu0 0.0
    %2007 = vmatprep.subr.mxu0 0.0
    %2008 = vmatpush1.msra.mxu0 0.0
    %2009 = vmatprep.subr.mxu0 0.0
    %2010 = vmatpush1.msra.mxu0 0.0
    %2011 = vmatprep.subr.mxu0 0.0
    %2012 = vmatpush1.msra.mxu0 0.0
    %2013 = vmatprep.subr.mxu0 0.0
    %2014 = vmatpush1.msra.mxu0 0.0
    %2015 = vmatprep.subr.mxu0 0.0
    %2016 = vmatpush1.msra.mxu0 0.0
    %2017 = vmatprep.subr.mxu0 0.0
    %2018 = vmatpush1.msra.mxu0 0.0
    %2019 = vmatprep.subr.mxu0 0.0
    %2020 = vmatpush1.msra.mxu0 0.0
    %2021 = vmatprep.subr.mxu0 0.0
    %2022 = vmatpush1.msra.mxu0 0.0
    %2023 = vmatprep.subr.mxu0 0.0
    %2024 = vmatpush1.msra.mxu0 0.0
    %2025 = vmatprep.subr.mxu0 0.0
    %2026 = vmatpush1.msra.mxu0 0.0
    %2027 = vmatprep.subr.mxu0 0.0
    %2028 = vmatpush1.msra.mxu0 0.0
    %2029 = vmatprep.subr.mxu0 0.0
    %2030 = vmatpush1.msra.mxu0 0.0
    %2031 = vmatprep.subr.mxu0 0.0
    %2032 = vmatpush1.msra.mxu0 0.0
    %2033 = vmatprep.subr.mxu0 0.0
    %2034 = vmatpush1.msra.mxu0 0.0
    %2035 = vmatprep.subr.mxu0 0.0
    %2036 = vmatpush1.msra.mxu0 0.0
    %2037 = vmatprep.subr.mxu0 0.0
    %2038 = vmatpush1.msra.mxu0 0.0
    %2039 = vmatprep.subr.mxu0 0.0
    %2040 = vmatpush1.msra.mxu0 0.0
    %2041 = vmatprep.subr.mxu0 0.0
    %2042 = vmatpush1.msra.mxu0 0.0
    %2043 = vmatprep.subr.mxu0 0.0
    %2044 = vmatpush1.msra.mxu0 0.0
    %2045 = vmatprep.subr.mxu0 0.0
    %2046 = vmatpush1.msra.mxu0 0.0
    %2047 = vmatprep.subr.mxu0 0.0
    %2048 = vmatpush1.msra.mxu0 0.0
    %2049 = vmatprep.subr.mxu0 0.0
    %2050 = vmatpush1.msra.mxu0 0.0
    %2051 = vmatprep.mubr.f32.mxu0 0.0
    %2052 = vmatmul.mubr.f32.gmra.mrb[0].mxu0 %v1985
    %v2053 = vpop.f32.mrb[0].mxu0
    %v2054 = vadd.f32 0.0, %v2053
    %v2055 = vpop.f32.mrb[0].mxu0
    %2056 = vdwg.mxu0
    %v2057 = vadd.f32 %v1888, %v2054
    %v2058 = vmul.f32 %v2057, %v348
    %v2059 = vtanh.pop %v2058
    %v2060 = vmul.f32 %v2059, %v348
    %v2061 = vadd.f32 %v2060, %v355
    %v2062 = vmul.f32 %v2061, %v1809
    %2064 = vrot.lane.b32.xlu0 %v2061, 64
    %v2065 = vpop.permute.xlu0 %2064
    %v2067 = vmul.f32 %v2061, %v2065
    %2069 = vrot.lane.b32.xlu0 %v2067, 32
    %v2070 = vpop.permute.xlu0 %2069
    %v2072 = vadd.f32 %v2062, %v2070
    %v2073 = vtanh.pop %v2072
    %2075 = vrot.lane.b32.xlu0 %v2073, 64
    %v2076 = vpop.permute.xlu0 %2075
    %v2078 = vmul.f32 %v2061, %v2076
    %2080 = vrot.lane.b32.xlu0 %v2078, 32
    %v2081 = vpop.permute.xlu0 %2080
    %v2082 = vsel %vm491, %v2081, 0
    %2084 = vmatprep.subr.mxu0 0.0
    %2085 = vmatpush1.msra.mxu0 %v332
    %2086 = vmatprep.subr.mxu0 0.0
    %2087 = vmatpush1.msra.mxu0 %v333
    %2088 = vmatprep.subr.mxu0 0.0
    %2089 = vmatpush1.msra.mxu0 %v334
    %2090 = vmatprep.subr.mxu0 0.0
    %2091 = vmatpush1.msra.mxu0 %v335
    %2092 = vmatprep.subr.mxu0 0.0
    %2093 = vmatpush1.msra.mxu0 0.0
    %2094 = vmatprep.subr.mxu0 0.0
    %2095 = vmatpush1.msra.mxu0 0.0
    %2096 = vmatprep.subr.mxu0 0.0
    %2097 = vmatpush1.msra.mxu0 0.0
    %2098 = vmatprep.subr.mxu0 0.0
    %2099 = vmatpush1.msra.mxu0 0.0
    %2100 = vmatprep.subr.mxu0 0.0
    %2101 = vmatpush1.msra.mxu0 0.0
    %2102 = vmatprep.subr.mxu0 0.0
    %2103 = vmatpush1.msra.mxu0 0.0
    %2104 = vmatprep.subr.mxu0 0.0
    %2105 = vmatpush1.msra.mxu0 0.0
    %2106 = vmatprep.subr.mxu0 0.0
    %2107 = vmatpush1.msra.mxu0 0.0
    %2108 = vmatprep.subr.mxu0 0.0
    %2109 = vmatpush1.msra.mxu0 0.0
    %2110 = vmatprep.subr.mxu0 0.0
    %2111 = vmatpush1.msra.mxu0 0.0
    %2112 = vmatprep.subr.mxu0 0.0
    %2113 = vmatpush1.msra.mxu0 0.0
    %2114 = vmatprep.subr.mxu0 0.0
    %2115 = vmatpush1.msra.mxu0 0.0
    %2116 = vmatprep.subr.mxu0 0.0
    %2117 = vmatpush1.msra.mxu0 0.0
    %2118 = vmatprep.subr.mxu0 0.0
    %2119 = vmatpush1.msra.mxu0 0.0
    %2120 = vmatprep.subr.mxu0 0.0
    %2121 = vmatpush1.msra.mxu0 0.0
    %2122 = vmatprep.subr.mxu0 0.0
    %2123 = vmatpush1.msra.mxu0 0.0
    %2124 = vmatprep.subr.mxu0 0.0
    %2125 = vmatpush1.msra.mxu0 0.0
    %2126 = vmatprep.subr.mxu0 0.0
    %2127 = vmatpush1.msra.mxu0 0.0
    %2128 = vmatprep.subr.mxu0 0.0
    %2129 = vmatpush1.msra.mxu0 0.0
    %2130 = vmatprep.subr.mxu0 0.0
    %2131 = vmatpush1.msra.mxu0 0.0
    %2132 = vmatprep.subr.mxu0 0.0
    %2133 = vmatpush1.msra.mxu0 0.0
    %2134 = vmatprep.subr.mxu0 0.0
    %2135 = vmatpush1.msra.mxu0 0.0
    %2136 = vmatprep.subr.mxu0 0.0
    %2137 = vmatpush1.msra.mxu0 0.0
    %2138 = vmatprep.subr.mxu0 0.0
    %2139 = vmatpush1.msra.mxu0 0.0
    %2140 = vmatprep.subr.mxu0 0.0
    %2141 = vmatpush1.msra.mxu0 0.0
    %2142 = vmatprep.subr.mxu0 0.0
    %2143 = vmatpush1.msra.mxu0 0.0
    %2144 = vmatprep.subr.mxu0 0.0
    %2145 = vmatpush1.msra.mxu0 0.0
    %2146 = vmatprep.subr.mxu0 0.0
    %2147 = vmatpush1.msra.mxu0 0.0
    %2148 = vmatprep.mubr.f32.mxu0 0.0
    %2149 = vmatmul.mubr.f32.gmra.mrb[0].mxu0 %v2082
    %v2150 = vpop.f32.mrb[0].mxu0
    %v2151 = vadd.f32 %v341, %v2150
    %v2152 = vpop.f32.mrb[0].mxu0
    %2153 = vdwg.mxu0
    %2154 = vmatprep.subr.mxu0 0.0
    %2155 = vmatpush1.msra.mxu0 %v324
    %2156 = vmatprep.subr.mxu0 0.0
    %2157 = vmatpush1.msra.mxu0 %v325
    %2158 = vmatprep.subr.mxu0 0.0
    %2159 = vmatpush1.msra.mxu0 %v326
    %2160 = vmatprep.subr.mxu0 0.0
    %2161 = vmatpush1.msra.mxu0 %v327
    %2162 = vmatprep.subr.mxu0 0.0
    %2163 = vmatpush1.msra.mxu0 0.0
    %2164 = vmatprep.subr.mxu0 0.0
    %2165 = vmatpush1.msra.mxu0 0.0
    %2166 = vmatprep.subr.mxu0 0.0
    %2167 = vmatpush1.msra.mxu0 0.0
    %2168 = vmatprep.subr.mxu0 0.0
    %2169 = vmatpush1.msra.mxu0 0.0
    %2170 = vmatprep.subr.mxu0 0.0
    %2171 = vmatpush1.msra.mxu0 0.0
    %2172 = vmatprep.subr.mxu0 0.0
    %2173 = vmatpush1.msra.mxu0 0.0
    %2174 = vmatprep.subr.mxu0 0.0
    %2175 = vmatpush1.msra.mxu0 0.0
    %2176 = vmatprep.subr.mxu0 0.0
    %2177 = vmatpush1.msra.mxu0 0.0
    %2178 = vmatprep.subr.mxu0 0.0
    %2179 = vmatpush1.msra.mxu0 0.0
    %2180 = vmatprep.subr.mxu0 0.0
    %2181 = vmatpush1.msra.mxu0 0.0
    %2182 = vmatprep.subr.mxu0 0.0
    %2183 = vmatpush1.msra.mxu0 0.0
    %2184 = vmatprep.subr.mxu0 0.0
    %2185 = vmatpush1.msra.mxu0 0.0
    %2186 = vmatprep.subr.mxu0 0.0
    %2187 = vmatpush1.msra.mxu0 0.0
    %2188 = vmatprep.subr.mxu0 0.0
    %2189 = vmatpush1.msra.mxu0 0.0
    %2190 = vmatprep.subr.mxu0 0.0
    %2191 = vmatpush1.msra.mxu0 0.0
    %2192 = vmatprep.subr.mxu0 0.0
    %2193 = vmatpush1.msra.mxu0 0.0
    %2194 = vmatprep.subr.mxu0 0.0
    %2195 = vmatpush1.msra.mxu0 0.0
    %2196 = vmatprep.subr.mxu0 0.0
    %2197 = vmatpush1.msra.mxu0 0.0
    %2198 = vmatprep.subr.mxu0 0.0
    %2199 = vmatpush1.msra.mxu0 0.0
    %2200 = vmatprep.subr.mxu0 0.0
    %2201 = vmatpush1.msra.mxu0 0.0
    %2202 = vmatprep.subr.mxu0 0.0
    %2203 = vmatpush1.msra.mxu0 0.0
    %2204 = vmatprep.subr.mxu0 0.0
    %2205 = vmatpush1.msra.mxu0 0.0
    %2206 = vmatprep.subr.mxu0 0.0
    %2207 = vmatpush1.msra.mxu0 0.0
    %2208 = vmatprep.subr.mxu0 0.0
    %2209 = vmatpush1.msra.mxu0 0.0
    %2210 = vmatprep.subr.mxu0 0.0
    %2211 = vmatpush1.msra.mxu0 0.0
    %2212 = vmatprep.subr.mxu0 0.0
    %2213 = vmatpush1.msra.mxu0 0.0
    %2214 = vmatprep.subr.mxu0 0.0
    %2215 = vmatpush1.msra.mxu0 0.0
    %2216 = vmatprep.subr.mxu0 0.0
    %2217 = vmatpush1.msra.mxu0 0.0
    %2218 = vmatprep.mubr.f32.mxu0 0.0
    %2219 = vmatmul.mubr.f32.gmra.mrb[0].mxu0 %v1985
    %v2220 = vpop.f32.mrb[0].mxu0
    %v2221 = vadd.f32 %v483, %v2220
    %v2222 = vpop.f32.mrb[0].mxu0
    %2223 = vdwg.mxu0
    %v2224 = vmul.f32 %v2221, %v348
    %v2225 = vtanh.pop %v2224
    %v2226 = vmul.f32 %v2225, %v348
    %v2227 = vadd.f32 %v2226, %v355
    %v2228 = vmul.f32 %v2227, %v1975
    %2230 = vrot.lane.b32.xlu0 %v2227, 64
    %v2231 = vpop.permute.xlu0 %2230
    %v2233 = vmul.f32 %v2227, %v2231
    %2235 = vrot.lane.b32.xlu0 %v2233, 32
    %v2236 = vpop.permute.xlu0 %2235
    %v2238 = vadd.f32 %v2228, %v2236
    %v2239 = vtanh.pop %v2238
    %2241 = vrot.lane.b32.xlu0 %v2239, 64
    %v2242 = vpop.permute.xlu0 %2241
    %v2244 = vmul.f32 %v2227, %v2242
    %2246 = vrot.lane.b32.xlu0 %v2244, 32
    %v2247 = vpop.permute.xlu0 %2246
    %v2248 = vsel %vm491, %v2247, 0
    %2250 = vmatprep.subr.mxu0 0.0
    %2251 = vmatpush1.msra.mxu0 %v328
    %2252 = vmatprep.subr.mxu0 0.0
    %2253 = vmatpush1.msra.mxu0 %v329
    %2254 = vmatprep.subr.mxu0 0.0
    %2255 = vmatpush1.msra.mxu0 %v330
    %2256 = vmatprep.subr.mxu0 0.0
    %2257 = vmatpush1.msra.mxu0 %v331
    %2258 = vmatprep.subr.mxu0 0.0
    %2259 = vmatpush1.msra.mxu0 0.0
    %2260 = vmatprep.subr.mxu0 0.0
    %2261 = vmatpush1.msra.mxu0 0.0
    %2262 = vmatprep.subr.mxu0 0.0
    %2263 = vmatpush1.msra.mxu0 0.0
    %2264 = vmatprep.subr.mxu0 0.0
    %2265 = vmatpush1.msra.mxu0 0.0
    %2266 = vmatprep.subr.mxu0 0.0
    %2267 = vmatpush1.msra.mxu0 0.0
    %2268 = vmatprep.subr.mxu0 0.0
    %2269 = vmatpush1.msra.mxu0 0.0
    %2270 = vmatprep.subr.mxu0 0.0
    %2271 = vmatpush1.msra.mxu0 0.0
    %2272 = vmatprep.subr.mxu0 0.0
    %2273 = vmatpush1.msra.mxu0 0.0
    %2274 = vmatprep.subr.mxu0 0.0
    %2275 = vmatpush1.msra.mxu0 0.0
    %2276 = vmatprep.subr.mxu0 0.0
    %2277 = vmatpush1.msra.mxu0 0.0
    %2278 = vmatprep.subr.mxu0 0.0
    %2279 = vmatpush1.msra.mxu0 0.0
    %2280 = vmatprep.subr.mxu0 0.0
    %2281 = vmatpush1.msra.mxu0 0.0
    %2282 = vmatprep.subr.mxu0 0.0
    %2283 = vmatpush1.msra.mxu0 0.0
    %2284 = vmatprep.subr.mxu0 0.0
    %2285 = vmatpush1.msra.mxu0 0.0
    %2286 = vmatprep.subr.mxu0 0.0
    %2287 = vmatpush1.msra.mxu0 0.0
    %2288 = vmatprep.subr.mxu0 0.0
    %2289 = vmatpush1.msra.mxu0 0.0
    %2290 = vmatprep.subr.mxu0 0.0
    %2291 = vmatpush1.msra.mxu0 0.0
    %2292 = vmatprep.subr.mxu0 0.0
    %2293 = vmatpush1.msra.mxu0 0.0
    %2294 = vmatprep.subr.mxu0 0.0
    %2295 = vmatpush1.msra.mxu0 0.0
    %2296 = vmatprep.subr.mxu0 0.0
    %2297 = vmatpush1.msra.mxu0 0.0
    %2298 = vmatprep.subr.mxu0 0.0
    %2299 = vmatpush1.msra.mxu0 0.0
    %2300 = vmatprep.subr.mxu0 0.0
    %2301 = vmatpush1.msra.mxu0 0.0
    %2302 = vmatprep.subr.mxu0 0.0
    %2303 = vmatpush1.msra.mxu0 0.0
    %2304 = vmatprep.subr.mxu0 0.0
    %2305 = vmatpush1.msra.mxu0 0.0
    %2306 = vmatprep.subr.mxu0 0.0
    %2307 = vmatpush1.msra.mxu0 0.0
    %2308 = vmatprep.subr.mxu0 0.0
    %2309 = vmatpush1.msra.mxu0 0.0
    %2310 = vmatprep.subr.mxu0 0.0
    %2311 = vmatpush1.msra.mxu0 0.0
    %2312 = vmatprep.subr.mxu0 0.0
    %2313 = vmatpush1.msra.mxu0 0.0
    %2314 = vmatprep.mubr.f32.mxu0 0.0
    %2315 = vmatmul.mubr.f32.gmra.mrb[0].mxu0 %v2248
    %v2316 = vpop.f32.mrb[0].mxu0
    %v2317 = vadd.f32 0.0, %v2316
    %v2318 = vpop.f32.mrb[0].mxu0
    %2319 = vdwg.mxu0
    %v2320 = vadd.f32 %v2151, %v2317
    %v2321 = vmul.f32 %v2320, %v348
    %v2322 = vtanh.pop %v2321
    %v2323 = vmul.f32 %v2322, %v348
    %v2324 = vadd.f32 %v2323, %v355
    %v2325 = vmul.f32 %v2324, %v2072
    %2327 = vrot.lane.b32.xlu0 %v2324, 64
    %v2328 = vpop.permute.xlu0 %2327
    %v2330 = vmul.f32 %v2324, %v2328
    %2332 = vrot.lane.b32.xlu0 %v2330, 32
    %v2333 = vpop.permute.xlu0 %2332
    %v2335 = vadd.f32 %v2325, %v2333
    %v2336 = vtanh.pop %v2335
    %2338 = vrot.lane.b32.xlu0 %v2336, 64
    %v2339 = vpop.permute.xlu0 %2338
    %v2341 = vmul.f32 %v2324, %v2339
    %2343 = vrot.lane.b32.xlu0 %v2341, 32
    %v2344 = vpop.permute.xlu0 %2343
    %v2345 = vsel %vm491, %v2344, 0
    %2347 = vmatprep.subr.mxu0 0.0
    %2348 = vmatpush1.msra.mxu0 %v332
    %2349 = vmatprep.subr.mxu0 0.0
    %2350 = vmatpush1.msra.mxu0 %v333
    %2351 = vmatprep.subr.mxu0 0.0
    %2352 = vmatpush1.msra.mxu0 %v334
    %2353 = vmatprep.subr.mxu0 0.0
    %2354 = vmatpush1.msra.mxu0 %v335
    %2355 = vmatprep.subr.mxu0 0.0
    %2356 = vmatpush1.msra.mxu0 0.0
    %2357 = vmatprep.subr.mxu0 0.0
    %2358 = vmatpush1.msra.mxu0 0.0
    %2359 = vmatprep.subr.mxu0 0.0
    %2360 = vmatpush1.msra.mxu0 0.0
    %2361 = vmatprep.subr.mxu0 0.0
    %2362 = vmatpush1.msra.mxu0 0.0
    %2363 = vmatprep.subr.mxu0 0.0
    %2364 = vmatpush1.msra.mxu0 0.0
    %2365 = vmatprep.subr.mxu0 0.0
    %2366 = vmatpush1.msra.mxu0 0.0
    %2367 = vmatprep.subr.mxu0 0.0
    %2368 = vmatpush1.msra.mxu0 0.0
    %2369 = vmatprep.subr.mxu0 0.0
    %2370 = vmatpush1.msra.mxu0 0.0
    %2371 = vmatprep.subr.mxu0 0.0
    %2372 = vmatpush1.msra.mxu0 0.0
    %2373 = vmatprep.subr.mxu0 0.0
    %2374 = vmatpush1.msra.mxu0 0.0
    %2375 = vmatprep.subr.mxu0 0.0
    %2376 = vmatpush1.msra.mxu0 0.0
    %2377 = vmatprep.subr.mxu0 0.0
    %2378 = vmatpush1.msra.mxu0 0.0
    %2379 = vmatprep.subr.mxu0 0.0
    %2380 = vmatpush1.msra.mxu0 0.0
    %2381 = vmatprep.subr.mxu0 0.0
    %2382 = vmatpush1.msra.mxu0 0.0
    %2383 = vmatprep.subr.mxu0 0.0
    %2384 = vmatpush1.msra.mxu0 0.0
    %2385 = vmatprep.subr.mxu0 0.0
    %2386 = vmatpush1.msra.mxu0 0.0
    %2387 = vmatprep.subr.mxu0 0.0
    %2388 = vmatpush1.msra.mxu0 0.0
    %2389 = vmatprep.subr.mxu0 0.0
    %2390 = vmatpush1.msra.mxu0 0.0
    %2391 = vmatprep.subr.mxu0 0.0
    %2392 = vmatpush1.msra.mxu0 0.0
    %2393 = vmatprep.subr.mxu0 0.0
    %2394 = vmatpush1.msra.mxu0 0.0
    %2395 = vmatprep.subr.mxu0 0.0
    %2396 = vmatpush1.msra.mxu0 0.0
    %2397 = vmatprep.subr.mxu0 0.0
    %2398 = vmatpush1.msra.mxu0 0.0
    %2399 = vmatprep.subr.mxu0 0.0
    %2400 = vmatpush1.msra.mxu0 0.0
    %2401 = vmatprep.subr.mxu0 0.0
    %2402 = vmatpush1.msra.mxu0 0.0
    %2403 = vmatprep.subr.mxu0 0.0
    %2404 = vmatpush1.msra.mxu0 0.0
    %2405 = vmatprep.subr.mxu0 0.0
    %2406 = vmatpush1.msra.mxu0 0.0
    %2407 = vmatprep.subr.mxu0 0.0
    %2408 = vmatpush1.msra.mxu0 0.0
    %2409 = vmatprep.subr.mxu0 0.0
    %2410 = vmatpush1.msra.mxu0 0.0
    %2411 = vmatprep.mubr.f32.mxu0 0.0
    %2412 = vmatmul.mubr.f32.gmra.mrb[0].mxu0 %v2345
    %v2413 = vpop.f32.mrb[0].mxu0
    %v2414 = vadd.f32 %v341, %v2413
    %v2415 = vpop.f32.mrb[0].mxu0
    %2416 = vdwg.mxu0
    %2417 = vmatprep.subr.mxu0 0.0
    %2418 = vmatpush1.msra.mxu0 %v324
    %2419 = vmatprep.subr.mxu0 0.0
    %2420 = vmatpush1.msra.mxu0 %v325
    %2421 = vmatprep.subr.mxu0 0.0
    %2422 = vmatpush1.msra.mxu0 %v326
    %2423 = vmatprep.subr.mxu0 0.0
    %2424 = vmatpush1.msra.mxu0 %v327
    %2425 = vmatprep.subr.mxu0 0.0
    %2426 = vmatpush1.msra.mxu0 0.0
    %2427 = vmatprep.subr.mxu0 0.0
    %2428 = vmatpush1.msra.mxu0 0.0
    %2429 = vmatprep.subr.mxu0 0.0
    %2430 = vmatpush1.msra.mxu0 0.0
    %2431 = vmatprep.subr.mxu0 0.0
    %2432 = vmatpush1.msra.mxu0 0.0
    %2433 = vmatprep.subr.mxu0 0.0
    %2434 = vmatpush1.msra.mxu0 0.0
    %2435 = vmatprep.subr.mxu0 0.0
    %2436 = vmatpush1.msra.mxu0 0.0
    %2437 = vmatprep.subr.mxu0 0.0
    %2438 = vmatpush1.msra.mxu0 0.0
    %2439 = vmatprep.subr.mxu0 0.0
    %2440 = vmatpush1.msra.mxu0 0.0
    %2441 = vmatprep.subr.mxu0 0.0
    %2442 = vmatpush1.msra.mxu0 0.0
    %2443 = vmatprep.subr.mxu0 0.0
    %2444 = vmatpush1.msra.mxu0 0.0
    %2445 = vmatprep.subr.mxu0 0.0
    %2446 = vmatpush1.msra.mxu0 0.0
    %2447 = vmatprep.subr.mxu0 0.0
    %2448 = vmatpush1.msra.mxu0 0.0
    %2449 = vmatprep.subr.mxu0 0.0
    %2450 = vmatpush1.msra.mxu0 0.0
    %2451 = vmatprep.subr.mxu0 0.0
    %2452 = vmatpush1.msra.mxu0 0.0
    %2453 = vmatprep.subr.mxu0 0.0
    %2454 = vmatpush1.msra.mxu0 0.0
    %2455 = vmatprep.subr.mxu0 0.0
    %2456 = vmatpush1.msra.mxu0 0.0
    %2457 = vmatprep.subr.mxu0 0.0
    %2458 = vmatpush1.msra.mxu0 0.0
    %2459 = vmatprep.subr.mxu0 0.0
    %2460 = vmatpush1.msra.mxu0 0.0
    %2461 = vmatprep.subr.mxu0 0.0
    %2462 = vmatpush1.msra.mxu0 0.0
    %2463 = vmatprep.subr.mxu0 0.0
    %2464 = vmatpush1.msra.mxu0 0.0
    %2465 = vmatprep.subr.mxu0 0.0
    %2466 = vmatpush1.msra.mxu0 0.0
    %2467 = vmatprep.subr.mxu0 0.0
    %2468 = vmatpush1.msra.mxu0 0.0
    %2469 = vmatprep.subr.mxu0 0.0
    %2470 = vmatpush1.msra.mxu0 0.0
    %2471 = vmatprep.subr.mxu0 0.0
    %2472 = vmatpush1.msra.mxu0 0.0
    %2473 = vmatprep.subr.mxu0 0.0
    %2474 = vmatpush1.msra.mxu0 0.0
    %2475 = vmatprep.subr.mxu0 0.0
    %2476 = vmatpush1.msra.mxu0 0.0
    %2477 = vmatprep.subr.mxu0 0.0
    %2478 = vmatpush1.msra.mxu0 0.0
    %2479 = vmatprep.subr.mxu0 0.0
    %2480 = vmatpush1.msra.mxu0 0.0
    %2481 = vmatprep.mubr.f32.mxu0 0.0
    %2482 = vmatmul.mubr.f32.gmra.mrb[0].mxu0 %v2248
    %v2483 = vpop.f32.mrb[0].mxu0
    %v2484 = vadd.f32 %v484, %v2483
    %v2485 = vpop.f32.mrb[0].mxu0
    %2486 = vdwg.mxu0
    %v2487 = vmul.f32 %v2484, %v348
    %v2488 = vtanh.pop %v2487
    %v2489 = vmul.f32 %v2488, %v348
    %v2490 = vadd.f32 %v2489, %v355
    %v2491 = vmul.f32 %v2490, %v2238
    %2493 = vrot.lane.b32.xlu0 %v2490, 64
    %v2494 = vpop.permute.xlu0 %2493
    %v2496 = vmul.f32 %v2490, %v2494
    %2498 = vrot.lane.b32.xlu0 %v2496, 32
    %v2499 = vpop.permute.xlu0 %2498
    %v2501 = vadd.f32 %v2491, %v2499
    %v2502 = vtanh.pop %v2501
    %2504 = vrot.lane.b32.xlu0 %v2502, 64
    %v2505 = vpop.permute.xlu0 %2504
    %v2507 = vmul.f32 %v2490, %v2505
    %2509 = vrot.lane.b32.xlu0 %v2507, 32
    %v2510 = vpop.permute.xlu0 %2509
    %v2511 = vsel %vm491, %v2510, 0
    %2513 = vmatprep.subr.mxu0 0.0
    %2514 = vmatpush1.msra.mxu0 %v328
    %2515 = vmatprep.subr.mxu0 0.0
    %2516 = vmatpush1.msra.mxu0 %v329
    %2517 = vmatprep.subr.mxu0 0.0
    %2518 = vmatpush1.msra.mxu0 %v330
    %2519 = vmatprep.subr.mxu0 0.0
    %2520 = vmatpush1.msra.mxu0 %v331
    %2521 = vmatprep.subr.mxu0 0.0
    %2522 = vmatpush1.msra.mxu0 0.0
    %2523 = vmatprep.subr.mxu0 0.0
    %2524 = vmatpush1.msra.mxu0 0.0
    %2525 = vmatprep.subr.mxu0 0.0
    %2526 = vmatpush1.msra.mxu0 0.0
    %2527 = vmatprep.subr.mxu0 0.0
    %2528 = vmatpush1.msra.mxu0 0.0
    %2529 = vmatprep.subr.mxu0 0.0
    %2530 = vmatpush1.msra.mxu0 0.0
    %2531 = vmatprep.subr.mxu0 0.0
    %2532 = vmatpush1.msra.mxu0 0.0
    %2533 = vmatprep.subr.mxu0 0.0
    %2534 = vmatpush1.msra.mxu0 0.0
    %2535 = vmatprep.subr.mxu0 0.0
    %2536 = vmatpush1.msra.mxu0 0.0
    %2537 = vmatprep.subr.mxu0 0.0
    %2538 = vmatpush1.msra.mxu0 0.0
    %2539 = vmatprep.subr.mxu0 0.0
    %2540 = vmatpush1.msra.mxu0 0.0
    %2541 = vmatprep.subr.mxu0 0.0
    %2542 = vmatpush1.msra.mxu0 0.0
    %2543 = vmatprep.subr.mxu0 0.0
    %2544 = vmatpush1.msra.mxu0 0.0
    %2545 = vmatprep.subr.mxu0 0.0
    %2546 = vmatpush1.msra.mxu0 0.0
    %2547 = vmatprep.subr.mxu0 0.0
    %2548 = vmatpush1.msra.mxu0 0.0
    %2549 = vmatprep.subr.mxu0 0.0
    %2550 = vmatpush1.msra.mxu0 0.0
    %2551 = vmatprep.subr.mxu0 0.0
    %2552 = vmatpush1.msra.mxu0 0.0
    %2553 = vmatprep.subr.mxu0 0.0
    %2554 = vmatpush1.msra.mxu0 0.0
    %2555 = vmatprep.subr.mxu0 0.0
    %2556 = vmatpush1.msra.mxu0 0.0
    %2557 = vmatprep.subr.mxu0 0.0
    %2558 = vmatpush1.msra.mxu0 0.0
    %2559 = vmatprep.subr.mxu0 0.0
    %2560 = vmatpush1.msra.mxu0 0.0
    %2561 = vmatprep.subr.mxu0 0.0
    %2562 = vmatpush1.msra.mxu0 0.0
    %2563 = vmatprep.subr.mxu0 0.0
    %2564 = vmatpush1.msra.mxu0 0.0
    %2565 = vmatprep.subr.mxu0 0.0
    %2566 = vmatpush1.msra.mxu0 0.0
    %2567 = vmatprep.subr.mxu0 0.0
    %2568 = vmatpush1.msra.mxu0 0.0
    %2569 = vmatprep.subr.mxu0 0.0
    %2570 = vmatpush1.msra.mxu0 0.0
    %2571 = vmatprep.subr.mxu0 0.0
    %2572 = vmatpush1.msra.mxu0 0.0
    %2573 = vmatprep.subr.mxu0 0.0
    %2574 = vmatpush1.msra.mxu0 0.0
    %2575 = vmatprep.subr.mxu0 0.0
    %2576 = vmatpush1.msra.mxu0 0.0
    %2577 = vmatprep.mubr.f32.mxu0 0.0
    %2578 = vmatmul.mubr.f32.gmra.mrb[0].mxu0 %v2511
    %v2579 = vpop.f32.mrb[0].mxu0
    %v2580 = vadd.f32 0.0, %v2579
    %v2581 = vpop.f32.mrb[0].mxu0
    %2582 = vdwg.mxu0
    %v2583 = vadd.f32 %v2414, %v2580
    %v2584 = vmul.f32 %v2583, %v348
    %v2585 = vtanh.pop %v2584
    %v2586 = vmul.f32 %v2585, %v348
    %v2587 = vadd.f32 %v2586, %v355
    %v2588 = vmul.f32 %v2587, %v2335
    %2590 = vrot.lane.b32.xlu0 %v2587, 64
    %v2591 = vpop.permute.xlu0 %2590
    %v2593 = vmul.f32 %v2587, %v2591
    %2595 = vrot.lane.b32.xlu0 %v2593, 32
    %v2596 = vpop.permute.xlu0 %2595
    %v2598 = vadd.f32 %v2588, %v2596
    %v2599 = vtanh.pop %v2598
    %2601 = vrot.lane.b32.xlu0 %v2599, 64
    %v2602 = vpop.permute.xlu0 %2601
    %v2604 = vmul.f32 %v2587, %v2602
    %v2605 = vld [vmem:[#allocation24] sm:$0xff]
    %v2606 = vld [vmem:[#allocation24 + $0x8] sm:$0xff]
    %v2607 = vld [vmem:[#allocation24 + $0x10] sm:$0xff]
    %v2608 = vld [vmem:[#allocation24 + $0x18] sm:$0xff]
    %v2609 = vld [vmem:[#allocation25] sm:$0x1]
    %v2611 = vlaneseq
    %v2612 = vshrl.u32 %v2611, 7
    %v2613 = vsub.s32 0, %v2612
    %v2614 = vrot.slane %v2609, %v2613
    %2617 = vrot.lane.b32.xlu0 %v2604, 32
    %v2618 = vpop.permute.xlu0 %2617
    %v2619 = vsel %vm491, %v2618, 0
    %2621 = vmatprep.subr.mxu0 0.0
    %2622 = vmatpush1.msra.mxu0 %v2605
    %2623 = vmatprep.subr.mxu0 0.0
    %2624 = vmatpush1.msra.mxu0 %v2606
    %2625 = vmatprep.subr.mxu0 0.0
    %2626 = vmatpush1.msra.mxu0 %v2607
    %2627 = vmatprep.subr.mxu0 0.0
    %2628 = vmatpush1.msra.mxu0 %v2608
    %2629 = vmatprep.subr.mxu0 0.0
    %2630 = vmatpush1.msra.mxu0 0.0
    %2631 = vmatprep.subr.mxu0 0.0
    %2632 = vmatpush1.msra.mxu0 0.0
    %2633 = vmatprep.subr.mxu0 0.0
    %2634 = vmatpush1.msra.mxu0 0.0
    %2635 = vmatprep.subr.mxu0 0.0
    %2636 = vmatpush1.msra.mxu0 0.0
    %2637 = vmatprep.subr.mxu0 0.0
    %2638 = vmatpush1.msra.mxu0 0.0
    %2639 = vmatprep.subr.mxu0 0.0
    %2640 = vmatpush1.msra.mxu0 0.0
    %2641 = vmatprep.subr.mxu0 0.0
    %2642 = vmatpush1.msra.mxu0 0.0
    %2643 = vmatprep.subr.mxu0 0.0
    %2644 = vmatpush1.msra.mxu0 0.0
    %2645 = vmatprep.subr.mxu0 0.0
    %2646 = vmatpush1.msra.mxu0 0.0
    %2647 = vmatprep.subr.mxu0 0.0
    %2648 = vmatpush1.msra.mxu0 0.0
    %2649 = vmatprep.subr.mxu0 0.0
    %2650 = vmatpush1.msra.mxu0 0.0
    %2651 = vmatprep.subr.mxu0 0.0
    %2652 = vmatpush1.msra.mxu0 0.0
    %2653 = vmatprep.subr.mxu0 0.0
    %2654 = vmatpush1.msra.mxu0 0.0
    %2655 = vmatprep.subr.mxu0 0.0
    %2656 = vmatpush1.msra.mxu0 0.0
    %2657 = vmatprep.subr.mxu0 0.0
    %2658 = vmatpush1.msra.mxu0 0.0
    %2659 = vmatprep.subr.mxu0 0.0
    %2660 = vmatpush1.msra.mxu0 0.0
    %2661 = vmatprep.subr.mxu0 0.0
    %2662 = vmatpush1.msra.mxu0 0.0
    %2663 = vmatprep.subr.mxu0 0.0
    %2664 = vmatpush1.msra.mxu0 0.0
    %2665 = vmatprep.subr.mxu0 0.0
    %2666 = vmatpush1.msra.mxu0 0.0
    %2667 = vmatprep.subr.mxu0 0.0
    %2668 = vmatpush1.msra.mxu0 0.0
    %2669 = vmatprep.subr.mxu0 0.0
    %2670 = vmatpush1.msra.mxu0 0.0
    %2671 = vmatprep.subr.mxu0 0.0
    %2672 = vmatpush1.msra.mxu0 0.0
    %2673 = vmatprep.subr.mxu0 0.0
    %2674 = vmatpush1.msra.mxu0 0.0
    %2675 = vmatprep.subr.mxu0 0.0
    %2676 = vmatpush1.msra.mxu0 0.0
    %2677 = vmatprep.subr.mxu0 0.0
    %2678 = vmatpush1.msra.mxu0 0.0
    %2679 = vmatprep.subr.mxu0 0.0
    %2680 = vmatpush1.msra.mxu0 0.0
    %2681 = vmatprep.subr.mxu0 0.0
    %2682 = vmatpush1.msra.mxu0 0.0
    %2683 = vmatprep.subr.mxu0 0.0
    %2684 = vmatpush1.msra.mxu0 0.0
    %2685 = vmatprep.mubr.f32.mxu0 0.0
    %2686 = vmatmul.mubr.f32.gmra.mrb[0].mxu0 %v2619
    %v2687 = vpop.f32.mrb[0].mxu0
    %v2688 = vadd.f32 %v2614, %v2687
    %v2689 = vpop.f32.mrb[0].mxu0
    %2690 = vdwg.mxu0
    %2691 = vst [vmem:[%s14] sm:$0xff] %v2688
    %2693 = vst.msk [vmem:[%s15] sm:$0xff] %vm491, %v2510
    %s2695 = scalar_lea.vmem %s15, 8
    %2696 = vst.msk [vmem:[%s2695] sm:$0xff] %vm491, %v2618
    %2698 = vrot.lane.b32.xlu0 %v2501, 96
    %v2699 = vpop.permute.xlu0 %2698
    %2701 = vst.msk [vmem:[%s16] sm:$0xff] %vm491, %v2699
    %2703 = vrot.lane.b32.xlu0 %v2598, 96
    %v2704 = vpop.permute.xlu0 %2703
    %s2706 = scalar_lea.vmem %s16, 8
    %2707 = vst.msk [vmem:[%s2706] sm:$0xff] %vm491, %v2704
    // Predicated region
    $region86: #{lstm_forecast_forward.2} parent=1 // pred_check
      _
    $region87: #{lstm_forecast_forward.2} parent=1 // pred_check_branch
      %2709 = sbr.rel (0) target = $region89
    $region88: #{lstm_forecast_forward.2} parent=1 // pred_region
      _
    $region89: #{lstm_forecast_forward.2} parent=1 // pred_fallthru
      _
    // Predicated region
    $region90: #{lstm_forecast_forward.2} parent=1 // pred_check
      _
    $region91: #{lstm_forecast_forward.2} parent=1 // pred_check_branch
      %2711 = sbr.rel (0) target = $region93
    $region92: #{lstm_forecast_forward.2} parent=1 // pred_region
      _
    $region93: #{lstm_forecast_forward.2} parent=1 // pred_fallthru
      _
    // Predicated region
    $region94: #{lstm_forecast_forward.2} parent=1 // pred_check
      _
    $region95: #{lstm_forecast_forward.2} parent=1 // pred_check_branch
      %2713 = sbr.rel (0) target = $region97
    $region96: #{lstm_forecast_forward.2} parent=1 // pred_region
      _
    $region97: #{lstm_forecast_forward.2} parent=1 // pred_fallthru
      _
    // Predicated region
    $region98: #{lstm_forecast_forward.2} parent=1 // pred_check
      _
    $region99: #{lstm_forecast_forward.2} parent=1 // pred_check_branch
      %2715 = sbr.rel (0) target = $region101
    $region100: #{lstm_forecast_forward.2} parent=1 // pred_region
      _
    $region101: #{lstm_forecast_forward.2} parent=1 // pred_fallthru
      _
    // Predicated region
    $region102: #{lstm_forecast_forward.2} parent=1 // pred_check
      _
    $region103: #{lstm_forecast_forward.2} parent=1 // pred_check_branch
      %2717 = sbr.rel (0) target = $region105
    $region104: #{lstm_forecast_forward.2} parent=1 // pred_region
      _
    $region105: #{lstm_forecast_forward.2} parent=1 // pred_fallthru
      _
    // Predicated region
    $region106: #{lstm_forecast_forward.2} parent=1 // pred_check
      _
    $region107: #{lstm_forecast_forward.2} parent=1 // pred_check_branch
      %2719 = sbr.rel (0) target = $region109
    $region108: #{lstm_forecast_forward.2} parent=1 // pred_region
      _
    $region109: #{lstm_forecast_forward.2} parent=1 // pred_fallthru
      _
    %2720 = vsyncpa [#allocation18], 1
    %2721 = vsyncpa [#allocation20], 1
    %2722 = vsyncpa [#allocation23], 1
    %2723 = vsyncpa [#allocation26], 1
    %2724 = vsyncpa [#allocation29], 1

</llo_original>
